<compile_context>
chip_gen: v7x
topology: tpu7x:2x2x1
jax: 0.10.0
libtpu: 0.0.40
codegen_flags: <defaults>
</compile_context>

<pallas_src>
import functools
import math

import jax
import jax.numpy as jnp
from jax.experimental import pallas as pl
from jax.experimental.pallas import tpu as pltpu


# ----------------------------- fused decoder-layer kernel -----------------------------

def _decoder_layer_kernel(
    x_ref, mem_ref, tgt_bias_ref, src_bias_ref,
    ln0_g_ref, ln0_b_ref, wqkv_ref, bqkv_ref, wo1_ref, bo1_ref,
    ln1_g_ref, ln1_b_ref, wq2_ref, bq2_ref, wkv2_ref, bkv2_ref, wo2_ref, bo2_ref,
    ln2_g_ref, ln2_b_ref, w1_ref, b1_ref, w2_ref, b2_ref,
    o_ref,
    *, B, S_tgt, S_src, h, d_k):
    d_model = h * d_k
    scale = 1.0 / math.sqrt(d_k)
    bf16 = jnp.bfloat16

    def layer_norm(v, g, b):                      # f32 elementwise path
        mean = jnp.mean(v, axis=-1, keepdims=True)
        var = jnp.mean(jnp.square(v - mean), axis=-1, keepdims=True)
        return (v - mean) * jax.lax.rsqrt(var + 1e-5) * g + b

    def mdot(a, w):                               # bf16 MXU operands, f32 accumulation
        return jnp.dot(a.astype(bf16), w, preferred_element_type=jnp.float32)

    def mha(q2d, k2d, v2d, bias3, wo, Sq, Sk):
        """Multi-head attention with per-head accumulated out-projection.

        q2d: (B*Sq, D) f32, k2d/v2d: (B*Sk, D) f32, bias3: (B, Sq, Sk) additive
        f32 bias, wo: (D, D) bf16.  Returns (B*Sq, D) f32 (out-proj bias added
        by caller)."""
        outs = []
        for b in range(B):                        # static unroll, no cross-batch attention
            qb = q2d[b * Sq:(b + 1) * Sq].astype(bf16)
            kb = k2d[b * Sk:(b + 1) * Sk].astype(bf16)
            vb = v2d[b * Sk:(b + 1) * Sk].astype(bf16)
            bias = bias3[b]                       # (Sq, Sk) f32, hoisted out of head loop
            acc = jnp.zeros((Sq, d_model), jnp.float32)
            for head in range(h):                 # static unroll over heads
                lo = head * d_k
                # q @ k^T via contracting-dim dot_general (no explicit transpose).
                s = jax.lax.dot_general(
                    qb[:, lo:lo + d_k], kb[:, lo:lo + d_k],
                    (((1,), (1,)), ((), ())),
                    preferred_element_type=jnp.float32) * scale + bias
                s = s - jnp.max(s, axis=-1, keepdims=True)
                p = jnp.exp(s)
                p = p / jnp.sum(p, axis=-1, keepdims=True)   # exact softmax normalization
                ctx = jnp.dot(p.astype(bf16), vb[:, lo:lo + d_k],
                              preferred_element_type=jnp.float32)
                # Accumulated out-projection (no lane-repacking concatenate).
                acc = acc + mdot(ctx, wo[lo:lo + d_k, :])
            outs.append(acc)
        return jnp.concatenate(outs, axis=0)      # sublane-aligned 8-row blocks

    x = x_ref[...].astype(jnp.float32)            # (B*S_tgt, D)
    mem = mem_ref[...]                            # (B*S_src, D) bf16

    # ---- sublayer 0: x + self_attn(LN(x)) with target mask (fused QKV) ----
    xn = layer_norm(x, ln0_g_ref[...], ln0_b_ref[...])
    qkv = mdot(xn, wqkv_ref[...]) + bqkv_ref[...]
    attn = mha(qkv[:, :d_model], qkv[:, d_model:2 * d_model], qkv[:, 2 * d_model:],
               tgt_bias_ref[...], wo1_ref[...], S_tgt, S_tgt)
    x = x + attn + bo1_ref[...]

    # ---- sublayer 1: x + src_attn(LN(x), memory, memory) with source mask ----
    xn = layer_norm(x, ln1_g_ref[...], ln1_b_ref[...])
    q = mdot(xn, wq2_ref[...]) + bq2_ref[...]
    kv = mdot(mem, wkv2_ref[...]) + bkv2_ref[...]
    attn = mha(q, kv[:, :d_model], kv[:, d_model:],
               src_bias_ref[...], wo2_ref[...], S_tgt, S_src)
    x = x + attn + bo2_ref[...]

    # ---- sublayer 2: x + FFN(LN(x)) ----
    xn = layer_norm(x, ln2_g_ref[...], ln2_b_ref[...])
    h1 = jnp.maximum(mdot(xn, w1_ref[...]) + b1_ref[...], 0.0)
    x = x + mdot(h1, w2_ref[...]) + b2_ref[...]

    o_ref[...] = x


def decoder_layer(x, memory, src_msk, tgt_msk, params, *, h):
    """Fused DecoderLayer forward. x: (B,S_tgt,D), memory: (B,S_src,D),
    src_msk: (B,S_tgt,S_src), tgt_msk: (B,S_tgt,S_tgt). Returns (B,S_tgt,D)."""
    B, S_tgt, d_model = x.shape
    S_src = memory.shape[1]
    d_k = d_model // h
    d_ff = params["w1"].shape[1]

    # Fold batch into the row dimension; bf16 MXU operands.
    x2 = x.reshape(B * S_tgt, d_model).astype(jnp.float32)
    mem2 = memory.reshape(B * S_src, d_model).astype(jnp.bfloat16)
    # Additive bias form of the masks: 0 where allowed, -1e9 where masked.
    tgt_bias = (tgt_msk.astype(jnp.float32) - 1.0) * 1e9
    src_bias = (src_msk.astype(jnp.float32) - 1.0) * 1e9

    def row(v):   # 1-D param -> (1, N) lane-major f32 row
        return v.reshape(1, -1).astype(jnp.float32)

    def wt(v):    # weight matrix -> bf16 MXU operand
        return v.astype(jnp.bfloat16)

    args = (
        x2, mem2, tgt_bias, src_bias,
        row(params["ln0_g"]), row(params["ln0_b"]),
        wt(params["wqkv"]), row(params["bqkv"]),
        wt(params["wo1"]), row(params["bo1"]),
        row(params["ln1_g"]), row(params["ln1_b"]),
        wt(params["wq2"]), row(params["bq2"]),
        wt(params["wkv2"]), row(params["bkv2"]),
        wt(params["wo2"]), row(params["bo2"]),
        row(params["ln2_g"]), row(params["ln2_b"]),
        wt(params["w1"]), row(params["b1"]),
        wt(params["w2"]), row(params["b2"]),
    )

    vmem_spec = pl.BlockSpec(memory_space=pltpu.MemorySpace.VMEM)
    kernel = functools.partial(_decoder_layer_kernel,
                               B=B, S_tgt=S_tgt, S_src=S_src, h=h, d_k=d_k)

    out = pl.pallas_call(
        kernel,
        out_shape=jax.ShapeDtypeStruct((B * S_tgt, d_model), jnp.float32),
        in_specs=[vmem_spec] * len(args),
        out_specs=vmem_spec,
        compiler_params=pltpu.CompilerParams(
            vmem_limit_bytes=32 * 1024 * 1024,
        ),
    )(*args)
    return out.reshape(B, S_tgt, d_model)


# ----------------------------- pure-JAX reference (for correctness check) -----------------------------

def decoder_layer_ref(x, memory, src_msk, tgt_msk, params, *, h):
    d_model = x.shape[-1]
    d_k = d_model // h

    def ln(v, g, b):
        mean = jnp.mean(v, -1, keepdims=True)
        var = jnp.mean(jnp.square(v - mean), -1, keepdims=True)
        return (v - mean) * jax.lax.rsqrt(var + 1e-5) * g + b

    def mha(q_in, k_in, v_in, wq, bq, wk, bk, wv, bv, wo, bo, mask):
        B, Sq, _ = q_in.shape
        Sk = k_in.shape[1]
        q = (q_in @ wq + bq).reshape(B, Sq, h, d_k).transpose(0, 2, 1, 3)
        k = (k_in @ wk + bk).reshape(B, Sk, h, d_k).transpose(0, 2, 1, 3)
        v = (v_in @ wv + bv).reshape(B, Sk, h, d_k).transpose(0, 2, 1, 3)
        s = jnp.einsum("bhqd,bhkd->bhqk", q, k) / math.sqrt(d_k)
        s = jnp.where(mask[:, None, :, :] == 0.0, -1e9, s)
        p = jax.nn.softmax(s, axis=-1)
        ctx = jnp.einsum("bhqk,bhkd->bhqd", p, v).transpose(0, 2, 1, 3)
        return ctx.reshape(B, Sq, d_model) @ wo + bo

    wq1, wk1, wv1 = jnp.split(params["wqkv"], 3, axis=1)
    bq1, bk1, bv1 = jnp.split(params["bqkv"], 3)
    wk2, wv2 = jnp.split(params["wkv2"], 2, axis=1)
    bk2, bv2 = jnp.split(params["bkv2"], 2)

    xn = ln(x, params["ln0_g"], params["ln0_b"])
    x = x + mha(xn, xn, xn, wq1, bq1, wk1, bk1, wv1, bv1,
                params["wo1"], params["bo1"], tgt_msk)
    xn = ln(x, params["ln1_g"], params["ln1_b"])
    x = x + mha(xn, memory, memory, params["wq2"], params["bq2"], wk2, bk2, wv2, bv2,
                params["wo2"], params["bo2"], src_msk)
    xn = ln(x, params["ln2_g"], params["ln2_b"])
    hdn = jnp.maximum(xn @ params["w1"] + params["b1"], 0.0)
    return x + hdn @ params["w2"] + params["b2"]


# ----------------------------- deterministic init -----------------------------

def xavier_uniform(key, fan_in, fan_out):
    bound = math.sqrt(6.0 / (fan_in + fan_out))
    return jax.random.uniform(key, (fan_in, fan_out), jnp.float32, -bound, bound)


def small_uniform(key, n, bound=0.05):
    return jax.random.uniform(key, (n,), jnp.float32, -bound, bound)


def init_params(key, d_model, d_ff):
    ks = jax.random.split(key, 20)
    ones = jnp.ones((d_model,), jnp.float32)
    zeros = jnp.zeros((d_model,), jnp.float32)
    wqkv = jnp.concatenate(
        [xavier_uniform(ks[i], d_model, d_model) for i in (0, 1, 2)], axis=1)
    wkv2 = jnp.concatenate(
        [xavier_uniform(ks[i], d_model, d_model) for i in (5, 6)], axis=1)
    return {
        "ln0_g": ones, "ln0_b": zeros,
        "wqkv": wqkv, "bqkv": small_uniform(ks[10], 3 * d_model),
        "wo1": xavier_uniform(ks[3], d_model, d_model), "bo1": small_uniform(ks[11], d_model),
        "ln1_g": ones, "ln1_b": zeros,
        "wq2": xavier_uniform(ks[4], d_model, d_model), "bq2": small_uniform(ks[12], d_model),
        "wkv2": wkv2, "bkv2": small_uniform(ks[13], 2 * d_model),
        "wo2": xavier_uniform(ks[7], d_model, d_model), "bo2": small_uniform(ks[14], d_model),
        "ln2_g": ones, "ln2_b": zeros,
        "w1": xavier_uniform(ks[8], d_model, d_ff), "b1": small_uniform(ks[15], d_ff),
        "w2": xavier_uniform(ks[9], d_ff, d_model), "b2": small_uniform(ks[16], d_model),
    }


# ----------------------------- main -----------------------------

if __name__ == "__main__":
    B, S_tgt, S_src = 2, 8, 16
    d_model, d_ff, h = 128, 256, 4

    key = jax.random.PRNGKey(0)
    kx, km, kp = jax.random.split(key, 3)
    x = jax.random.normal(kx, (B, S_tgt, d_model), jnp.float32)
    memory = jax.random.normal(km, (B, S_src, d_model), jnp.float32)

    # Target mask: causal; source mask: per-example key padding.
    tgt_msk = jnp.broadcast_to(
        jnp.tril(jnp.ones((S_tgt, S_tgt), jnp.float32))[None], (B, S_tgt, S_tgt))
    src_lens = jnp.array([S_src, S_src - 4], jnp.int32)
    src_msk = (jnp.arange(S_src)[None, None, :] < src_lens[:, None, None]).astype(jnp.float32)
    src_msk = jnp.broadcast_to(src_msk, (B, S_tgt, S_src))

    params = init_params(kp, d_model, d_ff)

    out = decoder_layer(x, memory, src_msk, tgt_msk, params, h=h)
    out = jax.block_until_ready(out)

    ref = decoder_layer_ref(x, memory, src_msk, tgt_msk, params, h=h)

    assert out.shape == (B, S_tgt, d_model), out.shape
    assert bool(jnp.all(jnp.isfinite(out)))
    # bf16 MXU operands (f32 accumulation) are the only deviation from the f32 ref.
    assert bool(jnp.allclose(out, ref, atol=5e-2, rtol=5e-2)), \
        float(jnp.max(jnp.abs(out - ref)))
    print("KERNEL_OK")
</pallas_src>

<mosaic_0001>
module attributes {stable_mosaic.version = 11 : i64} {
  func.func @_decoder_layer_kernel(%arg0: memref<16x128xf32, #tpu.memory_space<vmem>>, %arg1: memref<32x128xbf16, #tpu.memory_space<vmem>>, %arg2: memref<2x8x8xf32, #tpu.memory_space<vmem>>, %arg3: memref<2x8x16xf32, #tpu.memory_space<vmem>>, %arg4: memref<1x128xf32, #tpu.memory_space<vmem>>, %arg5: memref<1x128xf32, #tpu.memory_space<vmem>>, %arg6: memref<128x384xbf16, #tpu.memory_space<vmem>>, %arg7: memref<1x384xf32, #tpu.memory_space<vmem>>, %arg8: memref<128x128xbf16, #tpu.memory_space<vmem>>, %arg9: memref<1x128xf32, #tpu.memory_space<vmem>>, %arg10: memref<1x128xf32, #tpu.memory_space<vmem>>, %arg11: memref<1x128xf32, #tpu.memory_space<vmem>>, %arg12: memref<128x128xbf16, #tpu.memory_space<vmem>>, %arg13: memref<1x128xf32, #tpu.memory_space<vmem>>, %arg14: memref<128x256xbf16, #tpu.memory_space<vmem>>, %arg15: memref<1x256xf32, #tpu.memory_space<vmem>>, %arg16: memref<128x128xbf16, #tpu.memory_space<vmem>>, %arg17: memref<1x128xf32, #tpu.memory_space<vmem>>, %arg18: memref<1x128xf32, #tpu.memory_space<vmem>>, %arg19: memref<1x128xf32, #tpu.memory_space<vmem>>, %arg20: memref<128x256xbf16, #tpu.memory_space<vmem>>, %arg21: memref<1x256xf32, #tpu.memory_space<vmem>>, %arg22: memref<256x128xbf16, #tpu.memory_space<vmem>>, %arg23: memref<1x128xf32, #tpu.memory_space<vmem>>, %arg24: memref<16x128xf32, #tpu.memory_space<vmem>>) attributes {dimension_semantics = [], scalar_prefetch = 0 : i64, scratch_operands = 0 : i64, tpu.core_type = #tpu.core_type<tc>} {
    %c0 = arith.constant 0 : index
    %c0_0 = arith.constant 0 : index
    %0 = vector.load %arg0[%c0, %c0_0] : memref<16x128xf32, #tpu.memory_space<vmem>>, vector<16x128xf32>
    %c0_1 = arith.constant 0 : index
    %c0_2 = arith.constant 0 : index
    %1 = vector.load %arg1[%c0_1, %c0_2] : memref<32x128xbf16, #tpu.memory_space<vmem>>, vector<32x128xbf16>
    %c0_3 = arith.constant 0 : index
    %c0_4 = arith.constant 0 : index
    %2 = vector.load %arg4[%c0_3, %c0_4] : memref<1x128xf32, #tpu.memory_space<vmem>>, vector<1x128xf32>
    %c0_5 = arith.constant 0 : index
    %c0_6 = arith.constant 0 : index
    %3 = vector.load %arg5[%c0_5, %c0_6] : memref<1x128xf32, #tpu.memory_space<vmem>>, vector<1x128xf32>
    %cst = arith.constant dense<0.000000e+00> : vector<16xf32>
    %4 = vector.multi_reduction <add>, %0, %cst [1] : vector<16x128xf32> to vector<16xf32>
    %5 = vector.shape_cast %4 : vector<16xf32> to vector<16x1xf32>
    %cst_7 = arith.constant 1.280000e+02 : f32
    %6 = vector.broadcast %cst_7 : f32 to vector<16x1xf32>
    %7 = arith.divf %5, %6 : vector<16x1xf32>
    %8 = vector.broadcast %7 : vector<16x1xf32> to vector<16x128xf32>
    %9 = arith.subf %0, %8 : vector<16x128xf32>
    %10 = arith.mulf %9, %9 : vector<16x128xf32>
    %cst_8 = arith.constant dense<0.000000e+00> : vector<16xf32>
    %11 = vector.multi_reduction <add>, %10, %cst_8 [1] : vector<16x128xf32> to vector<16xf32>
    %12 = vector.shape_cast %11 : vector<16xf32> to vector<16x1xf32>
    %cst_9 = arith.constant 1.280000e+02 : f32
    %13 = vector.broadcast %cst_9 : f32 to vector<16x1xf32>
    %14 = arith.divf %12, %13 : vector<16x1xf32>
    %15 = vector.broadcast %7 : vector<16x1xf32> to vector<16x128xf32>
    %16 = arith.subf %0, %15 : vector<16x128xf32>
    %cst_10 = arith.constant 9.99999974E-6 : f32
    %17 = vector.broadcast %cst_10 : f32 to vector<16x1xf32>
    %18 = arith.addf %14, %17 : vector<16x1xf32>
    %19 = math.rsqrt %18 : vector<16x1xf32>
    %20 = vector.broadcast %19 : vector<16x1xf32> to vector<16x128xf32>
    %21 = arith.mulf %16, %20 : vector<16x128xf32>
    %22 = vector.broadcast %2 : vector<1x128xf32> to vector<16x128xf32>
    %23 = arith.mulf %21, %22 : vector<16x128xf32>
    %24 = vector.broadcast %3 : vector<1x128xf32> to vector<16x128xf32>
    %25 = arith.addf %23, %24 : vector<16x128xf32>
    %c0_11 = arith.constant 0 : index
    %c0_12 = arith.constant 0 : index
    %26 = vector.load %arg6[%c0_11, %c0_12] : memref<128x384xbf16, #tpu.memory_space<vmem>>, vector<128x384xbf16>
    %27 = arith.truncf %25 : vector<16x128xf32> to vector<16x128xbf16>
    %cst_13 = arith.constant dense<0.000000e+00> : vector<16x384xf32>
    %28 = tpu.matmul %27, %26, %cst_13 {dimension_numbers = #tpu.dot_dimension_numbers<[1], [0], [0], [1], [0, 0, 1, 1], [], []>} : vector<16x128xbf16>, vector<128x384xbf16>, vector<16x384xf32> -> vector<16x384xf32>
    %c0_14 = arith.constant 0 : index
    %c0_15 = arith.constant 0 : index
    %29 = vector.load %arg7[%c0_14, %c0_15] : memref<1x384xf32, #tpu.memory_space<vmem>>, vector<1x384xf32>
    %30 = vector.broadcast %29 : vector<1x384xf32> to vector<16x384xf32>
    %31 = arith.addf %28, %30 : vector<16x384xf32>
    %32 = vector.extract_strided_slice %31 {offsets = [0, 0], sizes = [16, 128], strides = [1, 1]} : vector<16x384xf32> to vector<16x128xf32>
    %33 = vector.extract_strided_slice %31 {offsets = [0, 128], sizes = [16, 128], strides = [1, 1]} : vector<16x384xf32> to vector<16x128xf32>
    %34 = vector.extract_strided_slice %31 {offsets = [0, 256], sizes = [16, 128], strides = [1, 1]} : vector<16x384xf32> to vector<16x128xf32>
    %c0_16 = arith.constant 0 : index
    %c0_17 = arith.constant 0 : index
    %c0_18 = arith.constant 0 : index
    %35 = vector.load %arg2[%c0_16, %c0_17, %c0_18] : memref<2x8x8xf32, #tpu.memory_space<vmem>>, vector<2x8x8xf32>
    %c0_19 = arith.constant 0 : index
    %c0_20 = arith.constant 0 : index
    %36 = vector.load %arg8[%c0_19, %c0_20] : memref<128x128xbf16, #tpu.memory_space<vmem>>, vector<128x128xbf16>
    %37 = vector.extract_strided_slice %32 {offsets = [0, 0], sizes = [8, 128], strides = [1, 1]} : vector<16x128xf32> to vector<8x128xf32>
    %38 = arith.truncf %37 : vector<8x128xf32> to vector<8x128xbf16>
    %39 = vector.extract_strided_slice %33 {offsets = [0, 0], sizes = [8, 128], strides = [1, 1]} : vector<16x128xf32> to vector<8x128xf32>
    %40 = arith.truncf %39 : vector<8x128xf32> to vector<8x128xbf16>
    %41 = vector.extract_strided_slice %34 {offsets = [0, 0], sizes = [8, 128], strides = [1, 1]} : vector<16x128xf32> to vector<8x128xf32>
    %42 = arith.truncf %41 : vector<8x128xf32> to vector<8x128xbf16>
    %43 = vector.extract_strided_slice %35 {offsets = [0, 0, 0], sizes = [1, 8, 8], strides = [1, 1, 1]} : vector<2x8x8xf32> to vector<1x8x8xf32>
    %44 = vector.shape_cast %43 : vector<1x8x8xf32> to vector<8x8xf32>
    %cst_21 = arith.constant 0.000000e+00 : f32
    %45 = vector.broadcast %cst_21 : f32 to vector<8x128xf32>
    %46 = vector.extract_strided_slice %38 {offsets = [0, 0], sizes = [8, 32], strides = [1, 1]} : vector<8x128xbf16> to vector<8x32xbf16>
    %47 = vector.extract_strided_slice %40 {offsets = [0, 0], sizes = [8, 32], strides = [1, 1]} : vector<8x128xbf16> to vector<8x32xbf16>
    %cst_22 = arith.constant dense<0.000000e+00> : vector<8x8xf32>
    %48 = tpu.matmul %46, %47, %cst_22 {dimension_numbers = #tpu.dot_dimension_numbers<[1], [1], [0], [0], [0, 0, 1, 0], [], []>} : vector<8x32xbf16>, vector<8x32xbf16>, vector<8x8xf32> -> vector<8x8xf32>
    %cst_23 = arith.constant 0.176776692 : f32
    %49 = vector.broadcast %cst_23 : f32 to vector<8x8xf32>
    %50 = arith.mulf %48, %49 : vector<8x8xf32>
    %51 = arith.addf %50, %44 : vector<8x8xf32>
    %cst_24 = arith.constant dense<0xFF800000> : vector<8xf32>
    %52 = vector.multi_reduction <maximumf>, %51, %cst_24 [1] : vector<8x8xf32> to vector<8xf32>
    %53 = vector.shape_cast %52 : vector<8xf32> to vector<8x1xf32>
    %54 = vector.broadcast %53 : vector<8x1xf32> to vector<8x8xf32>
    %55 = arith.subf %51, %54 : vector<8x8xf32>
    %56 = math.exp %55 : vector<8x8xf32>
    %cst_25 = arith.constant dense<0.000000e+00> : vector<8xf32>
    %57 = vector.multi_reduction <add>, %56, %cst_25 [1] : vector<8x8xf32> to vector<8xf32>
    %58 = vector.shape_cast %57 : vector<8xf32> to vector<8x1xf32>
    %59 = vector.broadcast %58 : vector<8x1xf32> to vector<8x8xf32>
    %60 = arith.divf %56, %59 : vector<8x8xf32>
    %61 = arith.truncf %60 : vector<8x8xf32> to vector<8x8xbf16>
    %62 = vector.extract_strided_slice %42 {offsets = [0, 0], sizes = [8, 32], strides = [1, 1]} : vector<8x128xbf16> to vector<8x32xbf16>
    %cst_26 = arith.constant dense<0.000000e+00> : vector<8x32xf32>
    %63 = tpu.matmul %61, %62, %cst_26 {dimension_numbers = #tpu.dot_dimension_numbers<[1], [0], [0], [1], [0, 0, 1, 1], [], []>} : vector<8x8xbf16>, vector<8x32xbf16>, vector<8x32xf32> -> vector<8x32xf32>
    %64 = vector.extract_strided_slice %36 {offsets = [0, 0], sizes = [32, 128], strides = [1, 1]} : vector<128x128xbf16> to vector<32x128xbf16>
    %65 = arith.truncf %63 : vector<8x32xf32> to vector<8x32xbf16>
    %cst_27 = arith.constant dense<0.000000e+00> : vector<8x128xf32>
    %66 = tpu.matmul %65, %64, %cst_27 {dimension_numbers = #tpu.dot_dimension_numbers<[1], [0], [0], [1], [0, 0, 1, 1], [], []>} : vector<8x32xbf16>, vector<32x128xbf16>, vector<8x128xf32> -> vector<8x128xf32>
    %67 = arith.addf %45, %66 : vector<8x128xf32>
    %68 = vector.extract_strided_slice %38 {offsets = [0, 32], sizes = [8, 32], strides = [1, 1]} : vector<8x128xbf16> to vector<8x32xbf16>
    %69 = vector.extract_strided_slice %40 {offsets = [0, 32], sizes = [8, 32], strides = [1, 1]} : vector<8x128xbf16> to vector<8x32xbf16>
    %cst_28 = arith.constant dense<0.000000e+00> : vector<8x8xf32>
    %70 = tpu.matmul %68, %69, %cst_28 {dimension_numbers = #tpu.dot_dimension_numbers<[1], [1], [0], [0], [0, 0, 1, 0], [], []>} : vector<8x32xbf16>, vector<8x32xbf16>, vector<8x8xf32> -> vector<8x8xf32>
    %cst_29 = arith.constant 0.176776692 : f32
    %71 = vector.broadcast %cst_29 : f32 to vector<8x8xf32>
    %72 = arith.mulf %70, %71 : vector<8x8xf32>
    %73 = arith.addf %72, %44 : vector<8x8xf32>
    %cst_30 = arith.constant dense<0xFF800000> : vector<8xf32>
    %74 = vector.multi_reduction <maximumf>, %73, %cst_30 [1] : vector<8x8xf32> to vector<8xf32>
    %75 = vector.shape_cast %74 : vector<8xf32> to vector<8x1xf32>
    %76 = vector.broadcast %75 : vector<8x1xf32> to vector<8x8xf32>
    %77 = arith.subf %73, %76 : vector<8x8xf32>
    %78 = math.exp %77 : vector<8x8xf32>
    %cst_31 = arith.constant dense<0.000000e+00> : vector<8xf32>
    %79 = vector.multi_reduction <add>, %78, %cst_31 [1] : vector<8x8xf32> to vector<8xf32>
    %80 = vector.shape_cast %79 : vector<8xf32> to vector<8x1xf32>
    %81 = vector.broadcast %80 : vector<8x1xf32> to vector<8x8xf32>
    %82 = arith.divf %78, %81 : vector<8x8xf32>
    %83 = arith.truncf %82 : vector<8x8xf32> to vector<8x8xbf16>
    %84 = vector.extract_strided_slice %42 {offsets = [0, 32], sizes = [8, 32], strides = [1, 1]} : vector<8x128xbf16> to vector<8x32xbf16>
    %cst_32 = arith.constant dense<0.000000e+00> : vector<8x32xf32>
    %85 = tpu.matmul %83, %84, %cst_32 {dimension_numbers = #tpu.dot_dimension_numbers<[1], [0], [0], [1], [0, 0, 1, 1], [], []>} : vector<8x8xbf16>, vector<8x32xbf16>, vector<8x32xf32> -> vector<8x32xf32>
    %86 = vector.extract_strided_slice %36 {offsets = [32, 0], sizes = [32, 128], strides = [1, 1]} : vector<128x128xbf16> to vector<32x128xbf16>
    %87 = arith.truncf %85 : vector<8x32xf32> to vector<8x32xbf16>
    %cst_33 = arith.constant dense<0.000000e+00> : vector<8x128xf32>
    %88 = tpu.matmul %87, %86, %cst_33 {dimension_numbers = #tpu.dot_dimension_numbers<[1], [0], [0], [1], [0, 0, 1, 1], [], []>} : vector<8x32xbf16>, vector<32x128xbf16>, vector<8x128xf32> -> vector<8x128xf32>
    %89 = arith.addf %67, %88 : vector<8x128xf32>
    %90 = vector.extract_strided_slice %38 {offsets = [0, 64], sizes = [8, 32], strides = [1, 1]} : vector<8x128xbf16> to vector<8x32xbf16>
    %91 = vector.extract_strided_slice %40 {offsets = [0, 64], sizes = [8, 32], strides = [1, 1]} : vector<8x128xbf16> to vector<8x32xbf16>
    %cst_34 = arith.constant dense<0.000000e+00> : vector<8x8xf32>
    %92 = tpu.matmul %90, %91, %cst_34 {dimension_numbers = #tpu.dot_dimension_numbers<[1], [1], [0], [0], [0, 0, 1, 0], [], []>} : vector<8x32xbf16>, vector<8x32xbf16>, vector<8x8xf32> -> vector<8x8xf32>
    %cst_35 = arith.constant 0.176776692 : f32
    %93 = vector.broadcast %cst_35 : f32 to vector<8x8xf32>
    %94 = arith.mulf %92, %93 : vector<8x8xf32>
    %95 = arith.addf %94, %44 : vector<8x8xf32>
    %cst_36 = arith.constant dense<0xFF800000> : vector<8xf32>
    %96 = vector.multi_reduction <maximumf>, %95, %cst_36 [1] : vector<8x8xf32> to vector<8xf32>
    %97 = vector.shape_cast %96 : vector<8xf32> to vector<8x1xf32>
    %98 = vector.broadcast %97 : vector<8x1xf32> to vector<8x8xf32>
    %99 = arith.subf %95, %98 : vector<8x8xf32>
    %100 = math.exp %99 : vector<8x8xf32>
    %cst_37 = arith.constant dense<0.000000e+00> : vector<8xf32>
    %101 = vector.multi_reduction <add>, %100, %cst_37 [1] : vector<8x8xf32> to vector<8xf32>
    %102 = vector.shape_cast %101 : vector<8xf32> to vector<8x1xf32>
    %103 = vector.broadcast %102 : vector<8x1xf32> to vector<8x8xf32>
    %104 = arith.divf %100, %103 : vector<8x8xf32>
    %105 = arith.truncf %104 : vector<8x8xf32> to vector<8x8xbf16>
    %106 = vector.extract_strided_slice %42 {offsets = [0, 64], sizes = [8, 32], strides = [1, 1]} : vector<8x128xbf16> to vector<8x32xbf16>
    %cst_38 = arith.constant dense<0.000000e+00> : vector<8x32xf32>
    %107 = tpu.matmul %105, %106, %cst_38 {dimension_numbers = #tpu.dot_dimension_numbers<[1], [0], [0], [1], [0, 0, 1, 1], [], []>} : vector<8x8xbf16>, vector<8x32xbf16>, vector<8x32xf32> -> vector<8x32xf32>
    %108 = vector.extract_strided_slice %36 {offsets = [64, 0], sizes = [32, 128], strides = [1, 1]} : vector<128x128xbf16> to vector<32x128xbf16>
    %109 = arith.truncf %107 : vector<8x32xf32> to vector<8x32xbf16>
    %cst_39 = arith.constant dense<0.000000e+00> : vector<8x128xf32>
    %110 = tpu.matmul %109, %108, %cst_39 {dimension_numbers = #tpu.dot_dimension_numbers<[1], [0], [0], [1], [0, 0, 1, 1], [], []>} : vector<8x32xbf16>, vector<32x128xbf16>, vector<8x128xf32> -> vector<8x128xf32>
    %111 = arith.addf %89, %110 : vector<8x128xf32>
    %112 = vector.extract_strided_slice %38 {offsets = [0, 96], sizes = [8, 32], strides = [1, 1]} : vector<8x128xbf16> to vector<8x32xbf16>
    %113 = vector.extract_strided_slice %40 {offsets = [0, 96], sizes = [8, 32], strides = [1, 1]} : vector<8x128xbf16> to vector<8x32xbf16>
    %cst_40 = arith.constant dense<0.000000e+00> : vector<8x8xf32>
    %114 = tpu.matmul %112, %113, %cst_40 {dimension_numbers = #tpu.dot_dimension_numbers<[1], [1], [0], [0], [0, 0, 1, 0], [], []>} : vector<8x32xbf16>, vector<8x32xbf16>, vector<8x8xf32> -> vector<8x8xf32>
    %cst_41 = arith.constant 0.176776692 : f32
    %115 = vector.broadcast %cst_41 : f32 to vector<8x8xf32>
    %116 = arith.mulf %114, %115 : vector<8x8xf32>
    %117 = arith.addf %116, %44 : vector<8x8xf32>
    %cst_42 = arith.constant dense<0xFF800000> : vector<8xf32>
    %118 = vector.multi_reduction <maximumf>, %117, %cst_42 [1] : vector<8x8xf32> to vector<8xf32>
    %119 = vector.shape_cast %118 : vector<8xf32> to vector<8x1xf32>
    %120 = vector.broadcast %119 : vector<8x1xf32> to vector<8x8xf32>
    %121 = arith.subf %117, %120 : vector<8x8xf32>
    %122 = math.exp %121 : vector<8x8xf32>
    %cst_43 = arith.constant dense<0.000000e+00> : vector<8xf32>
    %123 = vector.multi_reduction <add>, %122, %cst_43 [1] : vector<8x8xf32> to vector<8xf32>
    %124 = vector.shape_cast %123 : vector<8xf32> to vector<8x1xf32>
    %125 = vector.broadcast %124 : vector<8x1xf32> to vector<8x8xf32>
    %126 = arith.divf %122, %125 : vector<8x8xf32>
    %127 = arith.truncf %126 : vector<8x8xf32> to vector<8x8xbf16>
    %128 = vector.extract_strided_slice %42 {offsets = [0, 96], sizes = [8, 32], strides = [1, 1]} : vector<8x128xbf16> to vector<8x32xbf16>
    %cst_44 = arith.constant dense<0.000000e+00> : vector<8x32xf32>
    %129 = tpu.matmul %127, %128, %cst_44 {dimension_numbers = #tpu.dot_dimension_numbers<[1], [0], [0], [1], [0, 0, 1, 1], [], []>} : vector<8x8xbf16>, vector<8x32xbf16>, vector<8x32xf32> -> vector<8x32xf32>
    %130 = vector.extract_strided_slice %36 {offsets = [96, 0], sizes = [32, 128], strides = [1, 1]} : vector<128x128xbf16> to vector<32x128xbf16>
    %131 = arith.truncf %129 : vector<8x32xf32> to vector<8x32xbf16>
    %cst_45 = arith.constant dense<0.000000e+00> : vector<8x128xf32>
    %132 = tpu.matmul %131, %130, %cst_45 {dimension_numbers = #tpu.dot_dimension_numbers<[1], [0], [0], [1], [0, 0, 1, 1], [], []>} : vector<8x32xbf16>, vector<32x128xbf16>, vector<8x128xf32> -> vector<8x128xf32>
    %133 = arith.addf %111, %132 : vector<8x128xf32>
    %134 = vector.extract_strided_slice %32 {offsets = [8, 0], sizes = [8, 128], strides = [1, 1]} : vector<16x128xf32> to vector<8x128xf32>
    %135 = arith.truncf %134 : vector<8x128xf32> to vector<8x128xbf16>
    %136 = vector.extract_strided_slice %33 {offsets = [8, 0], sizes = [8, 128], strides = [1, 1]} : vector<16x128xf32> to vector<8x128xf32>
    %137 = arith.truncf %136 : vector<8x128xf32> to vector<8x128xbf16>
    %138 = vector.extract_strided_slice %34 {offsets = [8, 0], sizes = [8, 128], strides = [1, 1]} : vector<16x128xf32> to vector<8x128xf32>
    %139 = arith.truncf %138 : vector<8x128xf32> to vector<8x128xbf16>
    %140 = vector.extract_strided_slice %35 {offsets = [1, 0, 0], sizes = [1, 8, 8], strides = [1, 1, 1]} : vector<2x8x8xf32> to vector<1x8x8xf32>
    %141 = vector.shape_cast %140 : vector<1x8x8xf32> to vector<8x8xf32>
    %cst_46 = arith.constant 0.000000e+00 : f32
    %142 = vector.broadcast %cst_46 : f32 to vector<8x128xf32>
    %143 = vector.extract_strided_slice %135 {offsets = [0, 0], sizes = [8, 32], strides = [1, 1]} : vector<8x128xbf16> to vector<8x32xbf16>
    %144 = vector.extract_strided_slice %137 {offsets = [0, 0], sizes = [8, 32], strides = [1, 1]} : vector<8x128xbf16> to vector<8x32xbf16>
    %cst_47 = arith.constant dense<0.000000e+00> : vector<8x8xf32>
    %145 = tpu.matmul %143, %144, %cst_47 {dimension_numbers = #tpu.dot_dimension_numbers<[1], [1], [0], [0], [0, 0, 1, 0], [], []>} : vector<8x32xbf16>, vector<8x32xbf16>, vector<8x8xf32> -> vector<8x8xf32>
    %cst_48 = arith.constant 0.176776692 : f32
    %146 = vector.broadcast %cst_48 : f32 to vector<8x8xf32>
    %147 = arith.mulf %145, %146 : vector<8x8xf32>
    %148 = arith.addf %147, %141 : vector<8x8xf32>
    %cst_49 = arith.constant dense<0xFF800000> : vector<8xf32>
    %149 = vector.multi_reduction <maximumf>, %148, %cst_49 [1] : vector<8x8xf32> to vector<8xf32>
    %150 = vector.shape_cast %149 : vector<8xf32> to vector<8x1xf32>
    %151 = vector.broadcast %150 : vector<8x1xf32> to vector<8x8xf32>
    %152 = arith.subf %148, %151 : vector<8x8xf32>
    %153 = math.exp %152 : vector<8x8xf32>
    %cst_50 = arith.constant dense<0.000000e+00> : vector<8xf32>
    %154 = vector.multi_reduction <add>, %153, %cst_50 [1] : vector<8x8xf32> to vector<8xf32>
    %155 = vector.shape_cast %154 : vector<8xf32> to vector<8x1xf32>
    %156 = vector.broadcast %155 : vector<8x1xf32> to vector<8x8xf32>
    %157 = arith.divf %153, %156 : vector<8x8xf32>
    %158 = arith.truncf %157 : vector<8x8xf32> to vector<8x8xbf16>
    %159 = vector.extract_strided_slice %139 {offsets = [0, 0], sizes = [8, 32], strides = [1, 1]} : vector<8x128xbf16> to vector<8x32xbf16>
    %cst_51 = arith.constant dense<0.000000e+00> : vector<8x32xf32>
    %160 = tpu.matmul %158, %159, %cst_51 {dimension_numbers = #tpu.dot_dimension_numbers<[1], [0], [0], [1], [0, 0, 1, 1], [], []>} : vector<8x8xbf16>, vector<8x32xbf16>, vector<8x32xf32> -> vector<8x32xf32>
    %161 = vector.extract_strided_slice %36 {offsets = [0, 0], sizes = [32, 128], strides = [1, 1]} : vector<128x128xbf16> to vector<32x128xbf16>
    %162 = arith.truncf %160 : vector<8x32xf32> to vector<8x32xbf16>
    %cst_52 = arith.constant dense<0.000000e+00> : vector<8x128xf32>
    %163 = tpu.matmul %162, %161, %cst_52 {dimension_numbers = #tpu.dot_dimension_numbers<[1], [0], [0], [1], [0, 0, 1, 1], [], []>} : vector<8x32xbf16>, vector<32x128xbf16>, vector<8x128xf32> -> vector<8x128xf32>
    %164 = arith.addf %142, %163 : vector<8x128xf32>
    %165 = vector.extract_strided_slice %135 {offsets = [0, 32], sizes = [8, 32], strides = [1, 1]} : vector<8x128xbf16> to vector<8x32xbf16>
    %166 = vector.extract_strided_slice %137 {offsets = [0, 32], sizes = [8, 32], strides = [1, 1]} : vector<8x128xbf16> to vector<8x32xbf16>
    %cst_53 = arith.constant dense<0.000000e+00> : vector<8x8xf32>
    %167 = tpu.matmul %165, %166, %cst_53 {dimension_numbers = #tpu.dot_dimension_numbers<[1], [1], [0], [0], [0, 0, 1, 0], [], []>} : vector<8x32xbf16>, vector<8x32xbf16>, vector<8x8xf32> -> vector<8x8xf32>
    %cst_54 = arith.constant 0.176776692 : f32
    %168 = vector.broadcast %cst_54 : f32 to vector<8x8xf32>
    %169 = arith.mulf %167, %168 : vector<8x8xf32>
    %170 = arith.addf %169, %141 : vector<8x8xf32>
    %cst_55 = arith.constant dense<0xFF800000> : vector<8xf32>
    %171 = vector.multi_reduction <maximumf>, %170, %cst_55 [1] : vector<8x8xf32> to vector<8xf32>
    %172 = vector.shape_cast %171 : vector<8xf32> to vector<8x1xf32>
    %173 = vector.broadcast %172 : vector<8x1xf32> to vector<8x8xf32>
    %174 = arith.subf %170, %173 : vector<8x8xf32>
    %175 = math.exp %174 : vector<8x8xf32>
    %cst_56 = arith.constant dense<0.000000e+00> : vector<8xf32>
    %176 = vector.multi_reduction <add>, %175, %cst_56 [1] : vector<8x8xf32> to vector<8xf32>
    %177 = vector.shape_cast %176 : vector<8xf32> to vector<8x1xf32>
    %178 = vector.broadcast %177 : vector<8x1xf32> to vector<8x8xf32>
    %179 = arith.divf %175, %178 : vector<8x8xf32>
    %180 = arith.truncf %179 : vector<8x8xf32> to vector<8x8xbf16>
    %181 = vector.extract_strided_slice %139 {offsets = [0, 32], sizes = [8, 32], strides = [1, 1]} : vector<8x128xbf16> to vector<8x32xbf16>
    %cst_57 = arith.constant dense<0.000000e+00> : vector<8x32xf32>
    %182 = tpu.matmul %180, %181, %cst_57 {dimension_numbers = #tpu.dot_dimension_numbers<[1], [0], [0], [1], [0, 0, 1, 1], [], []>} : vector<8x8xbf16>, vector<8x32xbf16>, vector<8x32xf32> -> vector<8x32xf32>
    %183 = vector.extract_strided_slice %36 {offsets = [32, 0], sizes = [32, 128], strides = [1, 1]} : vector<128x128xbf16> to vector<32x128xbf16>
    %184 = arith.truncf %182 : vector<8x32xf32> to vector<8x32xbf16>
    %cst_58 = arith.constant dense<0.000000e+00> : vector<8x128xf32>
    %185 = tpu.matmul %184, %183, %cst_58 {dimension_numbers = #tpu.dot_dimension_numbers<[1], [0], [0], [1], [0, 0, 1, 1], [], []>} : vector<8x32xbf16>, vector<32x128xbf16>, vector<8x128xf32> -> vector<8x128xf32>
    %186 = arith.addf %164, %185 : vector<8x128xf32>
    %187 = vector.extract_strided_slice %135 {offsets = [0, 64], sizes = [8, 32], strides = [1, 1]} : vector<8x128xbf16> to vector<8x32xbf16>
    %188 = vector.extract_strided_slice %137 {offsets = [0, 64], sizes = [8, 32], strides = [1, 1]} : vector<8x128xbf16> to vector<8x32xbf16>
    %cst_59 = arith.constant dense<0.000000e+00> : vector<8x8xf32>
    %189 = tpu.matmul %187, %188, %cst_59 {dimension_numbers = #tpu.dot_dimension_numbers<[1], [1], [0], [0], [0, 0, 1, 0], [], []>} : vector<8x32xbf16>, vector<8x32xbf16>, vector<8x8xf32> -> vector<8x8xf32>
    %cst_60 = arith.constant 0.176776692 : f32
    %190 = vector.broadcast %cst_60 : f32 to vector<8x8xf32>
    %191 = arith.mulf %189, %190 : vector<8x8xf32>
    %192 = arith.addf %191, %141 : vector<8x8xf32>
    %cst_61 = arith.constant dense<0xFF800000> : vector<8xf32>
    %193 = vector.multi_reduction <maximumf>, %192, %cst_61 [1] : vector<8x8xf32> to vector<8xf32>
    %194 = vector.shape_cast %193 : vector<8xf32> to vector<8x1xf32>
    %195 = vector.broadcast %194 : vector<8x1xf32> to vector<8x8xf32>
    %196 = arith.subf %192, %195 : vector<8x8xf32>
    %197 = math.exp %196 : vector<8x8xf32>
    %cst_62 = arith.constant dense<0.000000e+00> : vector<8xf32>
    %198 = vector.multi_reduction <add>, %197, %cst_62 [1] : vector<8x8xf32> to vector<8xf32>
    %199 = vector.shape_cast %198 : vector<8xf32> to vector<8x1xf32>
    %200 = vector.broadcast %199 : vector<8x1xf32> to vector<8x8xf32>
    %201 = arith.divf %197, %200 : vector<8x8xf32>
    %202 = arith.truncf %201 : vector<8x8xf32> to vector<8x8xbf16>
    %203 = vector.extract_strided_slice %139 {offsets = [0, 64], sizes = [8, 32], strides = [1, 1]} : vector<8x128xbf16> to vector<8x32xbf16>
    %cst_63 = arith.constant dense<0.000000e+00> : vector<8x32xf32>
    %204 = tpu.matmul %202, %203, %cst_63 {dimension_numbers = #tpu.dot_dimension_numbers<[1], [0], [0], [1], [0, 0, 1, 1], [], []>} : vector<8x8xbf16>, vector<8x32xbf16>, vector<8x32xf32> -> vector<8x32xf32>
    %205 = vector.extract_strided_slice %36 {offsets = [64, 0], sizes = [32, 128], strides = [1, 1]} : vector<128x128xbf16> to vector<32x128xbf16>
    %206 = arith.truncf %204 : vector<8x32xf32> to vector<8x32xbf16>
    %cst_64 = arith.constant dense<0.000000e+00> : vector<8x128xf32>
    %207 = tpu.matmul %206, %205, %cst_64 {dimension_numbers = #tpu.dot_dimension_numbers<[1], [0], [0], [1], [0, 0, 1, 1], [], []>} : vector<8x32xbf16>, vector<32x128xbf16>, vector<8x128xf32> -> vector<8x128xf32>
    %208 = arith.addf %186, %207 : vector<8x128xf32>
    %209 = vector.extract_strided_slice %135 {offsets = [0, 96], sizes = [8, 32], strides = [1, 1]} : vector<8x128xbf16> to vector<8x32xbf16>
    %210 = vector.extract_strided_slice %137 {offsets = [0, 96], sizes = [8, 32], strides = [1, 1]} : vector<8x128xbf16> to vector<8x32xbf16>
    %cst_65 = arith.constant dense<0.000000e+00> : vector<8x8xf32>
    %211 = tpu.matmul %209, %210, %cst_65 {dimension_numbers = #tpu.dot_dimension_numbers<[1], [1], [0], [0], [0, 0, 1, 0], [], []>} : vector<8x32xbf16>, vector<8x32xbf16>, vector<8x8xf32> -> vector<8x8xf32>
    %cst_66 = arith.constant 0.176776692 : f32
    %212 = vector.broadcast %cst_66 : f32 to vector<8x8xf32>
    %213 = arith.mulf %211, %212 : vector<8x8xf32>
    %214 = arith.addf %213, %141 : vector<8x8xf32>
    %cst_67 = arith.constant dense<0xFF800000> : vector<8xf32>
    %215 = vector.multi_reduction <maximumf>, %214, %cst_67 [1] : vector<8x8xf32> to vector<8xf32>
    %216 = vector.shape_cast %215 : vector<8xf32> to vector<8x1xf32>
    %217 = vector.broadcast %216 : vector<8x1xf32> to vector<8x8xf32>
    %218 = arith.subf %214, %217 : vector<8x8xf32>
    %219 = math.exp %218 : vector<8x8xf32>
    %cst_68 = arith.constant dense<0.000000e+00> : vector<8xf32>
    %220 = vector.multi_reduction <add>, %219, %cst_68 [1] : vector<8x8xf32> to vector<8xf32>
    %221 = vector.shape_cast %220 : vector<8xf32> to vector<8x1xf32>
    %222 = vector.broadcast %221 : vector<8x1xf32> to vector<8x8xf32>
    %223 = arith.divf %219, %222 : vector<8x8xf32>
    %224 = arith.truncf %223 : vector<8x8xf32> to vector<8x8xbf16>
    %225 = vector.extract_strided_slice %139 {offsets = [0, 96], sizes = [8, 32], strides = [1, 1]} : vector<8x128xbf16> to vector<8x32xbf16>
    %cst_69 = arith.constant dense<0.000000e+00> : vector<8x32xf32>
    %226 = tpu.matmul %224, %225, %cst_69 {dimension_numbers = #tpu.dot_dimension_numbers<[1], [0], [0], [1], [0, 0, 1, 1], [], []>} : vector<8x8xbf16>, vector<8x32xbf16>, vector<8x32xf32> -> vector<8x32xf32>
    %227 = vector.extract_strided_slice %36 {offsets = [96, 0], sizes = [32, 128], strides = [1, 1]} : vector<128x128xbf16> to vector<32x128xbf16>
    %228 = arith.truncf %226 : vector<8x32xf32> to vector<8x32xbf16>
    %cst_70 = arith.constant dense<0.000000e+00> : vector<8x128xf32>
    %229 = tpu.matmul %228, %227, %cst_70 {dimension_numbers = #tpu.dot_dimension_numbers<[1], [0], [0], [1], [0, 0, 1, 1], [], []>} : vector<8x32xbf16>, vector<32x128xbf16>, vector<8x128xf32> -> vector<8x128xf32>
    %230 = arith.addf %208, %229 : vector<8x128xf32>
    %231 = tpu.concatenate %133, %230 in 0 : vector<8x128xf32>, vector<8x128xf32> -> vector<16x128xf32>
    %232 = arith.addf %0, %231 : vector<16x128xf32>
    %c0_71 = arith.constant 0 : index
    %c0_72 = arith.constant 0 : index
    %233 = vector.load %arg9[%c0_71, %c0_72] : memref<1x128xf32, #tpu.memory_space<vmem>>, vector<1x128xf32>
    %234 = vector.broadcast %233 : vector<1x128xf32> to vector<16x128xf32>
    %235 = arith.addf %232, %234 : vector<16x128xf32>
    %c0_73 = arith.constant 0 : index
    %c0_74 = arith.constant 0 : index
    %236 = vector.load %arg10[%c0_73, %c0_74] : memref<1x128xf32, #tpu.memory_space<vmem>>, vector<1x128xf32>
    %c0_75 = arith.constant 0 : index
    %c0_76 = arith.constant 0 : index
    %237 = vector.load %arg11[%c0_75, %c0_76] : memref<1x128xf32, #tpu.memory_space<vmem>>, vector<1x128xf32>
    %cst_77 = arith.constant dense<0.000000e+00> : vector<16xf32>
    %238 = vector.multi_reduction <add>, %235, %cst_77 [1] : vector<16x128xf32> to vector<16xf32>
    %239 = vector.shape_cast %238 : vector<16xf32> to vector<16x1xf32>
    %cst_78 = arith.constant 1.280000e+02 : f32
    %240 = vector.broadcast %cst_78 : f32 to vector<16x1xf32>
    %241 = arith.divf %239, %240 : vector<16x1xf32>
    %242 = vector.broadcast %241 : vector<16x1xf32> to vector<16x128xf32>
    %243 = arith.subf %235, %242 : vector<16x128xf32>
    %244 = arith.mulf %243, %243 : vector<16x128xf32>
    %cst_79 = arith.constant dense<0.000000e+00> : vector<16xf32>
    %245 = vector.multi_reduction <add>, %244, %cst_79 [1] : vector<16x128xf32> to vector<16xf32>
    %246 = vector.shape_cast %245 : vector<16xf32> to vector<16x1xf32>
    %cst_80 = arith.constant 1.280000e+02 : f32
    %247 = vector.broadcast %cst_80 : f32 to vector<16x1xf32>
    %248 = arith.divf %246, %247 : vector<16x1xf32>
    %249 = vector.broadcast %241 : vector<16x1xf32> to vector<16x128xf32>
    %250 = arith.subf %235, %249 : vector<16x128xf32>
    %cst_81 = arith.constant 9.99999974E-6 : f32
    %251 = vector.broadcast %cst_81 : f32 to vector<16x1xf32>
    %252 = arith.addf %248, %251 : vector<16x1xf32>
    %253 = math.rsqrt %252 : vector<16x1xf32>
    %254 = vector.broadcast %253 : vector<16x1xf32> to vector<16x128xf32>
    %255 = arith.mulf %250, %254 : vector<16x128xf32>
    %256 = vector.broadcast %236 : vector<1x128xf32> to vector<16x128xf32>
    %257 = arith.mulf %255, %256 : vector<16x128xf32>
    %258 = vector.broadcast %237 : vector<1x128xf32> to vector<16x128xf32>
    %259 = arith.addf %257, %258 : vector<16x128xf32>
    %c0_82 = arith.constant 0 : index
    %c0_83 = arith.constant 0 : index
    %260 = vector.load %arg12[%c0_82, %c0_83] : memref<128x128xbf16, #tpu.memory_space<vmem>>, vector<128x128xbf16>
    %261 = arith.truncf %259 : vector<16x128xf32> to vector<16x128xbf16>
    %cst_84 = arith.constant dense<0.000000e+00> : vector<16x128xf32>
    %262 = tpu.matmul %261, %260, %cst_84 {dimension_numbers = #tpu.dot_dimension_numbers<[1], [0], [0], [1], [0, 0, 1, 1], [], []>} : vector<16x128xbf16>, vector<128x128xbf16>, vector<16x128xf32> -> vector<16x128xf32>
    %c0_85 = arith.constant 0 : index
    %c0_86 = arith.constant 0 : index
    %263 = vector.load %arg13[%c0_85, %c0_86] : memref<1x128xf32, #tpu.memory_space<vmem>>, vector<1x128xf32>
    %264 = vector.broadcast %263 : vector<1x128xf32> to vector<16x128xf32>
    %265 = arith.addf %262, %264 : vector<16x128xf32>
    %c0_87 = arith.constant 0 : index
    %c0_88 = arith.constant 0 : index
    %266 = vector.load %arg14[%c0_87, %c0_88] : memref<128x256xbf16, #tpu.memory_space<vmem>>, vector<128x256xbf16>
    %cst_89 = arith.constant dense<0.000000e+00> : vector<32x256xf32>
    %267 = tpu.matmul %1, %266, %cst_89 {dimension_numbers = #tpu.dot_dimension_numbers<[1], [0], [0], [1], [0, 0, 1, 1], [], []>} : vector<32x128xbf16>, vector<128x256xbf16>, vector<32x256xf32> -> vector<32x256xf32>
    %c0_90 = arith.constant 0 : index
    %c0_91 = arith.constant 0 : index
    %268 = vector.load %arg15[%c0_90, %c0_91] : memref<1x256xf32, #tpu.memory_space<vmem>>, vector<1x256xf32>
    %269 = vector.broadcast %268 : vector<1x256xf32> to vector<32x256xf32>
    %270 = arith.addf %267, %269 : vector<32x256xf32>
    %271 = vector.extract_strided_slice %270 {offsets = [0, 0], sizes = [32, 128], strides = [1, 1]} : vector<32x256xf32> to vector<32x128xf32>
    %272 = vector.extract_strided_slice %270 {offsets = [0, 128], sizes = [32, 128], strides = [1, 1]} : vector<32x256xf32> to vector<32x128xf32>
    %c0_92 = arith.constant 0 : index
    %c0_93 = arith.constant 0 : index
    %c0_94 = arith.constant 0 : index
    %273 = vector.load %arg3[%c0_92, %c0_93, %c0_94] : memref<2x8x16xf32, #tpu.memory_space<vmem>>, vector<2x8x16xf32>
    %c0_95 = arith.constant 0 : index
    %c0_96 = arith.constant 0 : index
    %274 = vector.load %arg16[%c0_95, %c0_96] : memref<128x128xbf16, #tpu.memory_space<vmem>>, vector<128x128xbf16>
    %275 = vector.extract_strided_slice %265 {offsets = [0, 0], sizes = [8, 128], strides = [1, 1]} : vector<16x128xf32> to vector<8x128xf32>
    %276 = arith.truncf %275 : vector<8x128xf32> to vector<8x128xbf16>
    %277 = vector.extract_strided_slice %271 {offsets = [0, 0], sizes = [16, 128], strides = [1, 1]} : vector<32x128xf32> to vector<16x128xf32>
    %278 = arith.truncf %277 : vector<16x128xf32> to vector<16x128xbf16>
    %279 = vector.extract_strided_slice %272 {offsets = [0, 0], sizes = [16, 128], strides = [1, 1]} : vector<32x128xf32> to vector<16x128xf32>
    %280 = arith.truncf %279 : vector<16x128xf32> to vector<16x128xbf16>
    %281 = vector.extract_strided_slice %273 {offsets = [0, 0, 0], sizes = [1, 8, 16], strides = [1, 1, 1]} : vector<2x8x16xf32> to vector<1x8x16xf32>
    %282 = vector.shape_cast %281 : vector<1x8x16xf32> to vector<8x16xf32>
    %cst_97 = arith.constant 0.000000e+00 : f32
    %283 = vector.broadcast %cst_97 : f32 to vector<8x128xf32>
    %284 = vector.extract_strided_slice %276 {offsets = [0, 0], sizes = [8, 32], strides = [1, 1]} : vector<8x128xbf16> to vector<8x32xbf16>
    %285 = vector.extract_strided_slice %278 {offsets = [0, 0], sizes = [16, 32], strides = [1, 1]} : vector<16x128xbf16> to vector<16x32xbf16>
    %cst_98 = arith.constant dense<0.000000e+00> : vector<8x16xf32>
    %286 = tpu.matmul %284, %285, %cst_98 {dimension_numbers = #tpu.dot_dimension_numbers<[1], [1], [0], [0], [0, 0, 1, 0], [], []>} : vector<8x32xbf16>, vector<16x32xbf16>, vector<8x16xf32> -> vector<8x16xf32>
    %cst_99 = arith.constant 0.176776692 : f32
    %287 = vector.broadcast %cst_99 : f32 to vector<8x16xf32>
    %288 = arith.mulf %286, %287 : vector<8x16xf32>
    %289 = arith.addf %288, %282 : vector<8x16xf32>
    %cst_100 = arith.constant dense<0xFF800000> : vector<8xf32>
    %290 = vector.multi_reduction <maximumf>, %289, %cst_100 [1] : vector<8x16xf32> to vector<8xf32>
    %291 = vector.shape_cast %290 : vector<8xf32> to vector<8x1xf32>
    %292 = vector.broadcast %291 : vector<8x1xf32> to vector<8x16xf32>
    %293 = arith.subf %289, %292 : vector<8x16xf32>
    %294 = math.exp %293 : vector<8x16xf32>
    %cst_101 = arith.constant dense<0.000000e+00> : vector<8xf32>
    %295 = vector.multi_reduction <add>, %294, %cst_101 [1] : vector<8x16xf32> to vector<8xf32>
    %296 = vector.shape_cast %295 : vector<8xf32> to vector<8x1xf32>
    %297 = vector.broadcast %296 : vector<8x1xf32> to vector<8x16xf32>
    %298 = arith.divf %294, %297 : vector<8x16xf32>
    %299 = arith.truncf %298 : vector<8x16xf32> to vector<8x16xbf16>
    %300 = vector.extract_strided_slice %280 {offsets = [0, 0], sizes = [16, 32], strides = [1, 1]} : vector<16x128xbf16> to vector<16x32xbf16>
    %cst_102 = arith.constant dense<0.000000e+00> : vector<8x32xf32>
    %301 = tpu.matmul %299, %300, %cst_102 {dimension_numbers = #tpu.dot_dimension_numbers<[1], [0], [0], [1], [0, 0, 1, 1], [], []>} : vector<8x16xbf16>, vector<16x32xbf16>, vector<8x32xf32> -> vector<8x32xf32>
    %302 = vector.extract_strided_slice %274 {offsets = [0, 0], sizes = [32, 128], strides = [1, 1]} : vector<128x128xbf16> to vector<32x128xbf16>
    %303 = arith.truncf %301 : vector<8x32xf32> to vector<8x32xbf16>
    %cst_103 = arith.constant dense<0.000000e+00> : vector<8x128xf32>
    %304 = tpu.matmul %303, %302, %cst_103 {dimension_numbers = #tpu.dot_dimension_numbers<[1], [0], [0], [1], [0, 0, 1, 1], [], []>} : vector<8x32xbf16>, vector<32x128xbf16>, vector<8x128xf32> -> vector<8x128xf32>
    %305 = arith.addf %283, %304 : vector<8x128xf32>
    %306 = vector.extract_strided_slice %276 {offsets = [0, 32], sizes = [8, 32], strides = [1, 1]} : vector<8x128xbf16> to vector<8x32xbf16>
    %307 = vector.extract_strided_slice %278 {offsets = [0, 32], sizes = [16, 32], strides = [1, 1]} : vector<16x128xbf16> to vector<16x32xbf16>
    %cst_104 = arith.constant dense<0.000000e+00> : vector<8x16xf32>
    %308 = tpu.matmul %306, %307, %cst_104 {dimension_numbers = #tpu.dot_dimension_numbers<[1], [1], [0], [0], [0, 0, 1, 0], [], []>} : vector<8x32xbf16>, vector<16x32xbf16>, vector<8x16xf32> -> vector<8x16xf32>
    %cst_105 = arith.constant 0.176776692 : f32
    %309 = vector.broadcast %cst_105 : f32 to vector<8x16xf32>
    %310 = arith.mulf %308, %309 : vector<8x16xf32>
    %311 = arith.addf %310, %282 : vector<8x16xf32>
    %cst_106 = arith.constant dense<0xFF800000> : vector<8xf32>
    %312 = vector.multi_reduction <maximumf>, %311, %cst_106 [1] : vector<8x16xf32> to vector<8xf32>
    %313 = vector.shape_cast %312 : vector<8xf32> to vector<8x1xf32>
    %314 = vector.broadcast %313 : vector<8x1xf32> to vector<8x16xf32>
    %315 = arith.subf %311, %314 : vector<8x16xf32>
    %316 = math.exp %315 : vector<8x16xf32>
    %cst_107 = arith.constant dense<0.000000e+00> : vector<8xf32>
    %317 = vector.multi_reduction <add>, %316, %cst_107 [1] : vector<8x16xf32> to vector<8xf32>
    %318 = vector.shape_cast %317 : vector<8xf32> to vector<8x1xf32>
    %319 = vector.broadcast %318 : vector<8x1xf32> to vector<8x16xf32>
    %320 = arith.divf %316, %319 : vector<8x16xf32>
    %321 = arith.truncf %320 : vector<8x16xf32> to vector<8x16xbf16>
    %322 = vector.extract_strided_slice %280 {offsets = [0, 32], sizes = [16, 32], strides = [1, 1]} : vector<16x128xbf16> to vector<16x32xbf16>
    %cst_108 = arith.constant dense<0.000000e+00> : vector<8x32xf32>
    %323 = tpu.matmul %321, %322, %cst_108 {dimension_numbers = #tpu.dot_dimension_numbers<[1], [0], [0], [1], [0, 0, 1, 1], [], []>} : vector<8x16xbf16>, vector<16x32xbf16>, vector<8x32xf32> -> vector<8x32xf32>
    %324 = vector.extract_strided_slice %274 {offsets = [32, 0], sizes = [32, 128], strides = [1, 1]} : vector<128x128xbf16> to vector<32x128xbf16>
    %325 = arith.truncf %323 : vector<8x32xf32> to vector<8x32xbf16>
    %cst_109 = arith.constant dense<0.000000e+00> : vector<8x128xf32>
    %326 = tpu.matmul %325, %324, %cst_109 {dimension_numbers = #tpu.dot_dimension_numbers<[1], [0], [0], [1], [0, 0, 1, 1], [], []>} : vector<8x32xbf16>, vector<32x128xbf16>, vector<8x128xf32> -> vector<8x128xf32>
    %327 = arith.addf %305, %326 : vector<8x128xf32>
    %328 = vector.extract_strided_slice %276 {offsets = [0, 64], sizes = [8, 32], strides = [1, 1]} : vector<8x128xbf16> to vector<8x32xbf16>
    %329 = vector.extract_strided_slice %278 {offsets = [0, 64], sizes = [16, 32], strides = [1, 1]} : vector<16x128xbf16> to vector<16x32xbf16>
    %cst_110 = arith.constant dense<0.000000e+00> : vector<8x16xf32>
    %330 = tpu.matmul %328, %329, %cst_110 {dimension_numbers = #tpu.dot_dimension_numbers<[1], [1], [0], [0], [0, 0, 1, 0], [], []>} : vector<8x32xbf16>, vector<16x32xbf16>, vector<8x16xf32> -> vector<8x16xf32>
    %cst_111 = arith.constant 0.176776692 : f32
    %331 = vector.broadcast %cst_111 : f32 to vector<8x16xf32>
    %332 = arith.mulf %330, %331 : vector<8x16xf32>
    %333 = arith.addf %332, %282 : vector<8x16xf32>
    %cst_112 = arith.constant dense<0xFF800000> : vector<8xf32>
    %334 = vector.multi_reduction <maximumf>, %333, %cst_112 [1] : vector<8x16xf32> to vector<8xf32>
    %335 = vector.shape_cast %334 : vector<8xf32> to vector<8x1xf32>
    %336 = vector.broadcast %335 : vector<8x1xf32> to vector<8x16xf32>
    %337 = arith.subf %333, %336 : vector<8x16xf32>
    %338 = math.exp %337 : vector<8x16xf32>
    %cst_113 = arith.constant dense<0.000000e+00> : vector<8xf32>
    %339 = vector.multi_reduction <add>, %338, %cst_113 [1] : vector<8x16xf32> to vector<8xf32>
    %340 = vector.shape_cast %339 : vector<8xf32> to vector<8x1xf32>
    %341 = vector.broadcast %340 : vector<8x1xf32> to vector<8x16xf32>
    %342 = arith.divf %338, %341 : vector<8x16xf32>
    %343 = arith.truncf %342 : vector<8x16xf32> to vector<8x16xbf16>
    %344 = vector.extract_strided_slice %280 {offsets = [0, 64], sizes = [16, 32], strides = [1, 1]} : vector<16x128xbf16> to vector<16x32xbf16>
    %cst_114 = arith.constant dense<0.000000e+00> : vector<8x32xf32>
    %345 = tpu.matmul %343, %344, %cst_114 {dimension_numbers = #tpu.dot_dimension_numbers<[1], [0], [0], [1], [0, 0, 1, 1], [], []>} : vector<8x16xbf16>, vector<16x32xbf16>, vector<8x32xf32> -> vector<8x32xf32>
    %346 = vector.extract_strided_slice %274 {offsets = [64, 0], sizes = [32, 128], strides = [1, 1]} : vector<128x128xbf16> to vector<32x128xbf16>
    %347 = arith.truncf %345 : vector<8x32xf32> to vector<8x32xbf16>
    %cst_115 = arith.constant dense<0.000000e+00> : vector<8x128xf32>
    %348 = tpu.matmul %347, %346, %cst_115 {dimension_numbers = #tpu.dot_dimension_numbers<[1], [0], [0], [1], [0, 0, 1, 1], [], []>} : vector<8x32xbf16>, vector<32x128xbf16>, vector<8x128xf32> -> vector<8x128xf32>
    %349 = arith.addf %327, %348 : vector<8x128xf32>
    %350 = vector.extract_strided_slice %276 {offsets = [0, 96], sizes = [8, 32], strides = [1, 1]} : vector<8x128xbf16> to vector<8x32xbf16>
    %351 = vector.extract_strided_slice %278 {offsets = [0, 96], sizes = [16, 32], strides = [1, 1]} : vector<16x128xbf16> to vector<16x32xbf16>
    %cst_116 = arith.constant dense<0.000000e+00> : vector<8x16xf32>
    %352 = tpu.matmul %350, %351, %cst_116 {dimension_numbers = #tpu.dot_dimension_numbers<[1], [1], [0], [0], [0, 0, 1, 0], [], []>} : vector<8x32xbf16>, vector<16x32xbf16>, vector<8x16xf32> -> vector<8x16xf32>
    %cst_117 = arith.constant 0.176776692 : f32
    %353 = vector.broadcast %cst_117 : f32 to vector<8x16xf32>
    %354 = arith.mulf %352, %353 : vector<8x16xf32>
    %355 = arith.addf %354, %282 : vector<8x16xf32>
    %cst_118 = arith.constant dense<0xFF800000> : vector<8xf32>
    %356 = vector.multi_reduction <maximumf>, %355, %cst_118 [1] : vector<8x16xf32> to vector<8xf32>
    %357 = vector.shape_cast %356 : vector<8xf32> to vector<8x1xf32>
    %358 = vector.broadcast %357 : vector<8x1xf32> to vector<8x16xf32>
    %359 = arith.subf %355, %358 : vector<8x16xf32>
    %360 = math.exp %359 : vector<8x16xf32>
    %cst_119 = arith.constant dense<0.000000e+00> : vector<8xf32>
    %361 = vector.multi_reduction <add>, %360, %cst_119 [1] : vector<8x16xf32> to vector<8xf32>
    %362 = vector.shape_cast %361 : vector<8xf32> to vector<8x1xf32>
    %363 = vector.broadcast %362 : vector<8x1xf32> to vector<8x16xf32>
    %364 = arith.divf %360, %363 : vector<8x16xf32>
    %365 = arith.truncf %364 : vector<8x16xf32> to vector<8x16xbf16>
    %366 = vector.extract_strided_slice %280 {offsets = [0, 96], sizes = [16, 32], strides = [1, 1]} : vector<16x128xbf16> to vector<16x32xbf16>
    %cst_120 = arith.constant dense<0.000000e+00> : vector<8x32xf32>
    %367 = tpu.matmul %365, %366, %cst_120 {dimension_numbers = #tpu.dot_dimension_numbers<[1], [0], [0], [1], [0, 0, 1, 1], [], []>} : vector<8x16xbf16>, vector<16x32xbf16>, vector<8x32xf32> -> vector<8x32xf32>
    %368 = vector.extract_strided_slice %274 {offsets = [96, 0], sizes = [32, 128], strides = [1, 1]} : vector<128x128xbf16> to vector<32x128xbf16>
    %369 = arith.truncf %367 : vector<8x32xf32> to vector<8x32xbf16>
    %cst_121 = arith.constant dense<0.000000e+00> : vector<8x128xf32>
    %370 = tpu.matmul %369, %368, %cst_121 {dimension_numbers = #tpu.dot_dimension_numbers<[1], [0], [0], [1], [0, 0, 1, 1], [], []>} : vector<8x32xbf16>, vector<32x128xbf16>, vector<8x128xf32> -> vector<8x128xf32>
    %371 = arith.addf %349, %370 : vector<8x128xf32>
    %372 = vector.extract_strided_slice %265 {offsets = [8, 0], sizes = [8, 128], strides = [1, 1]} : vector<16x128xf32> to vector<8x128xf32>
    %373 = arith.truncf %372 : vector<8x128xf32> to vector<8x128xbf16>
    %374 = vector.extract_strided_slice %271 {offsets = [16, 0], sizes = [16, 128], strides = [1, 1]} : vector<32x128xf32> to vector<16x128xf32>
    %375 = arith.truncf %374 : vector<16x128xf32> to vector<16x128xbf16>
    %376 = vector.extract_strided_slice %272 {offsets = [16, 0], sizes = [16, 128], strides = [1, 1]} : vector<32x128xf32> to vector<16x128xf32>
    %377 = arith.truncf %376 : vector<16x128xf32> to vector<16x128xbf16>
    %378 = vector.extract_strided_slice %273 {offsets = [1, 0, 0], sizes = [1, 8, 16], strides = [1, 1, 1]} : vector<2x8x16xf32> to vector<1x8x16xf32>
    %379 = vector.shape_cast %378 : vector<1x8x16xf32> to vector<8x16xf32>
    %cst_122 = arith.constant 0.000000e+00 : f32
    %380 = vector.broadcast %cst_122 : f32 to vector<8x128xf32>
    %381 = vector.extract_strided_slice %373 {offsets = [0, 0], sizes = [8, 32], strides = [1, 1]} : vector<8x128xbf16> to vector<8x32xbf16>
    %382 = vector.extract_strided_slice %375 {offsets = [0, 0], sizes = [16, 32], strides = [1, 1]} : vector<16x128xbf16> to vector<16x32xbf16>
    %cst_123 = arith.constant dense<0.000000e+00> : vector<8x16xf32>
    %383 = tpu.matmul %381, %382, %cst_123 {dimension_numbers = #tpu.dot_dimension_numbers<[1], [1], [0], [0], [0, 0, 1, 0], [], []>} : vector<8x32xbf16>, vector<16x32xbf16>, vector<8x16xf32> -> vector<8x16xf32>
    %cst_124 = arith.constant 0.176776692 : f32
    %384 = vector.broadcast %cst_124 : f32 to vector<8x16xf32>
    %385 = arith.mulf %383, %384 : vector<8x16xf32>
    %386 = arith.addf %385, %379 : vector<8x16xf32>
    %cst_125 = arith.constant dense<0xFF800000> : vector<8xf32>
    %387 = vector.multi_reduction <maximumf>, %386, %cst_125 [1] : vector<8x16xf32> to vector<8xf32>
    %388 = vector.shape_cast %387 : vector<8xf32> to vector<8x1xf32>
    %389 = vector.broadcast %388 : vector<8x1xf32> to vector<8x16xf32>
    %390 = arith.subf %386, %389 : vector<8x16xf32>
    %391 = math.exp %390 : vector<8x16xf32>
    %cst_126 = arith.constant dense<0.000000e+00> : vector<8xf32>
    %392 = vector.multi_reduction <add>, %391, %cst_126 [1] : vector<8x16xf32> to vector<8xf32>
    %393 = vector.shape_cast %392 : vector<8xf32> to vector<8x1xf32>
    %394 = vector.broadcast %393 : vector<8x1xf32> to vector<8x16xf32>
    %395 = arith.divf %391, %394 : vector<8x16xf32>
    %396 = arith.truncf %395 : vector<8x16xf32> to vector<8x16xbf16>
    %397 = vector.extract_strided_slice %377 {offsets = [0, 0], sizes = [16, 32], strides = [1, 1]} : vector<16x128xbf16> to vector<16x32xbf16>
    %cst_127 = arith.constant dense<0.000000e+00> : vector<8x32xf32>
    %398 = tpu.matmul %396, %397, %cst_127 {dimension_numbers = #tpu.dot_dimension_numbers<[1], [0], [0], [1], [0, 0, 1, 1], [], []>} : vector<8x16xbf16>, vector<16x32xbf16>, vector<8x32xf32> -> vector<8x32xf32>
    %399 = vector.extract_strided_slice %274 {offsets = [0, 0], sizes = [32, 128], strides = [1, 1]} : vector<128x128xbf16> to vector<32x128xbf16>
    %400 = arith.truncf %398 : vector<8x32xf32> to vector<8x32xbf16>
    %cst_128 = arith.constant dense<0.000000e+00> : vector<8x128xf32>
    %401 = tpu.matmul %400, %399, %cst_128 {dimension_numbers = #tpu.dot_dimension_numbers<[1], [0], [0], [1], [0, 0, 1, 1], [], []>} : vector<8x32xbf16>, vector<32x128xbf16>, vector<8x128xf32> -> vector<8x128xf32>
    %402 = arith.addf %380, %401 : vector<8x128xf32>
    %403 = vector.extract_strided_slice %373 {offsets = [0, 32], sizes = [8, 32], strides = [1, 1]} : vector<8x128xbf16> to vector<8x32xbf16>
    %404 = vector.extract_strided_slice %375 {offsets = [0, 32], sizes = [16, 32], strides = [1, 1]} : vector<16x128xbf16> to vector<16x32xbf16>
    %cst_129 = arith.constant dense<0.000000e+00> : vector<8x16xf32>
    %405 = tpu.matmul %403, %404, %cst_129 {dimension_numbers = #tpu.dot_dimension_numbers<[1], [1], [0], [0], [0, 0, 1, 0], [], []>} : vector<8x32xbf16>, vector<16x32xbf16>, vector<8x16xf32> -> vector<8x16xf32>
    %cst_130 = arith.constant 0.176776692 : f32
    %406 = vector.broadcast %cst_130 : f32 to vector<8x16xf32>
    %407 = arith.mulf %405, %406 : vector<8x16xf32>
    %408 = arith.addf %407, %379 : vector<8x16xf32>
    %cst_131 = arith.constant dense<0xFF800000> : vector<8xf32>
    %409 = vector.multi_reduction <maximumf>, %408, %cst_131 [1] : vector<8x16xf32> to vector<8xf32>
    %410 = vector.shape_cast %409 : vector<8xf32> to vector<8x1xf32>
    %411 = vector.broadcast %410 : vector<8x1xf32> to vector<8x16xf32>
    %412 = arith.subf %408, %411 : vector<8x16xf32>
    %413 = math.exp %412 : vector<8x16xf32>
    %cst_132 = arith.constant dense<0.000000e+00> : vector<8xf32>
    %414 = vector.multi_reduction <add>, %413, %cst_132 [1] : vector<8x16xf32> to vector<8xf32>
    %415 = vector.shape_cast %414 : vector<8xf32> to vector<8x1xf32>
    %416 = vector.broadcast %415 : vector<8x1xf32> to vector<8x16xf32>
    %417 = arith.divf %413, %416 : vector<8x16xf32>
    %418 = arith.truncf %417 : vector<8x16xf32> to vector<8x16xbf16>
    %419 = vector.extract_strided_slice %377 {offsets = [0, 32], sizes = [16, 32], strides = [1, 1]} : vector<16x128xbf16> to vector<16x32xbf16>
    %cst_133 = arith.constant dense<0.000000e+00> : vector<8x32xf32>
    %420 = tpu.matmul %418, %419, %cst_133 {dimension_numbers = #tpu.dot_dimension_numbers<[1], [0], [0], [1], [0, 0, 1, 1], [], []>} : vector<8x16xbf16>, vector<16x32xbf16>, vector<8x32xf32> -> vector<8x32xf32>
    %421 = vector.extract_strided_slice %274 {offsets = [32, 0], sizes = [32, 128], strides = [1, 1]} : vector<128x128xbf16> to vector<32x128xbf16>
    %422 = arith.truncf %420 : vector<8x32xf32> to vector<8x32xbf16>
    %cst_134 = arith.constant dense<0.000000e+00> : vector<8x128xf32>
    %423 = tpu.matmul %422, %421, %cst_134 {dimension_numbers = #tpu.dot_dimension_numbers<[1], [0], [0], [1], [0, 0, 1, 1], [], []>} : vector<8x32xbf16>, vector<32x128xbf16>, vector<8x128xf32> -> vector<8x128xf32>
    %424 = arith.addf %402, %423 : vector<8x128xf32>
    %425 = vector.extract_strided_slice %373 {offsets = [0, 64], sizes = [8, 32], strides = [1, 1]} : vector<8x128xbf16> to vector<8x32xbf16>
    %426 = vector.extract_strided_slice %375 {offsets = [0, 64], sizes = [16, 32], strides = [1, 1]} : vector<16x128xbf16> to vector<16x32xbf16>
    %cst_135 = arith.constant dense<0.000000e+00> : vector<8x16xf32>
    %427 = tpu.matmul %425, %426, %cst_135 {dimension_numbers = #tpu.dot_dimension_numbers<[1], [1], [0], [0], [0, 0, 1, 0], [], []>} : vector<8x32xbf16>, vector<16x32xbf16>, vector<8x16xf32> -> vector<8x16xf32>
    %cst_136 = arith.constant 0.176776692 : f32
    %428 = vector.broadcast %cst_136 : f32 to vector<8x16xf32>
    %429 = arith.mulf %427, %428 : vector<8x16xf32>
    %430 = arith.addf %429, %379 : vector<8x16xf32>
    %cst_137 = arith.constant dense<0xFF800000> : vector<8xf32>
    %431 = vector.multi_reduction <maximumf>, %430, %cst_137 [1] : vector<8x16xf32> to vector<8xf32>
    %432 = vector.shape_cast %431 : vector<8xf32> to vector<8x1xf32>
    %433 = vector.broadcast %432 : vector<8x1xf32> to vector<8x16xf32>
    %434 = arith.subf %430, %433 : vector<8x16xf32>
    %435 = math.exp %434 : vector<8x16xf32>
    %cst_138 = arith.constant dense<0.000000e+00> : vector<8xf32>
    %436 = vector.multi_reduction <add>, %435, %cst_138 [1] : vector<8x16xf32> to vector<8xf32>
    %437 = vector.shape_cast %436 : vector<8xf32> to vector<8x1xf32>
    %438 = vector.broadcast %437 : vector<8x1xf32> to vector<8x16xf32>
    %439 = arith.divf %435, %438 : vector<8x16xf32>
    %440 = arith.truncf %439 : vector<8x16xf32> to vector<8x16xbf16>
    %441 = vector.extract_strided_slice %377 {offsets = [0, 64], sizes = [16, 32], strides = [1, 1]} : vector<16x128xbf16> to vector<16x32xbf16>
    %cst_139 = arith.constant dense<0.000000e+00> : vector<8x32xf32>
    %442 = tpu.matmul %440, %441, %cst_139 {dimension_numbers = #tpu.dot_dimension_numbers<[1], [0], [0], [1], [0, 0, 1, 1], [], []>} : vector<8x16xbf16>, vector<16x32xbf16>, vector<8x32xf32> -> vector<8x32xf32>
    %443 = vector.extract_strided_slice %274 {offsets = [64, 0], sizes = [32, 128], strides = [1, 1]} : vector<128x128xbf16> to vector<32x128xbf16>
    %444 = arith.truncf %442 : vector<8x32xf32> to vector<8x32xbf16>
    %cst_140 = arith.constant dense<0.000000e+00> : vector<8x128xf32>
    %445 = tpu.matmul %444, %443, %cst_140 {dimension_numbers = #tpu.dot_dimension_numbers<[1], [0], [0], [1], [0, 0, 1, 1], [], []>} : vector<8x32xbf16>, vector<32x128xbf16>, vector<8x128xf32> -> vector<8x128xf32>
    %446 = arith.addf %424, %445 : vector<8x128xf32>
    %447 = vector.extract_strided_slice %373 {offsets = [0, 96], sizes = [8, 32], strides = [1, 1]} : vector<8x128xbf16> to vector<8x32xbf16>
    %448 = vector.extract_strided_slice %375 {offsets = [0, 96], sizes = [16, 32], strides = [1, 1]} : vector<16x128xbf16> to vector<16x32xbf16>
    %cst_141 = arith.constant dense<0.000000e+00> : vector<8x16xf32>
    %449 = tpu.matmul %447, %448, %cst_141 {dimension_numbers = #tpu.dot_dimension_numbers<[1], [1], [0], [0], [0, 0, 1, 0], [], []>} : vector<8x32xbf16>, vector<16x32xbf16>, vector<8x16xf32> -> vector<8x16xf32>
    %cst_142 = arith.constant 0.176776692 : f32
    %450 = vector.broadcast %cst_142 : f32 to vector<8x16xf32>
    %451 = arith.mulf %449, %450 : vector<8x16xf32>
    %452 = arith.addf %451, %379 : vector<8x16xf32>
    %cst_143 = arith.constant dense<0xFF800000> : vector<8xf32>
    %453 = vector.multi_reduction <maximumf>, %452, %cst_143 [1] : vector<8x16xf32> to vector<8xf32>
    %454 = vector.shape_cast %453 : vector<8xf32> to vector<8x1xf32>
    %455 = vector.broadcast %454 : vector<8x1xf32> to vector<8x16xf32>
    %456 = arith.subf %452, %455 : vector<8x16xf32>
    %457 = math.exp %456 : vector<8x16xf32>
    %cst_144 = arith.constant dense<0.000000e+00> : vector<8xf32>
    %458 = vector.multi_reduction <add>, %457, %cst_144 [1] : vector<8x16xf32> to vector<8xf32>
    %459 = vector.shape_cast %458 : vector<8xf32> to vector<8x1xf32>
    %460 = vector.broadcast %459 : vector<8x1xf32> to vector<8x16xf32>
    %461 = arith.divf %457, %460 : vector<8x16xf32>
    %462 = arith.truncf %461 : vector<8x16xf32> to vector<8x16xbf16>
    %463 = vector.extract_strided_slice %377 {offsets = [0, 96], sizes = [16, 32], strides = [1, 1]} : vector<16x128xbf16> to vector<16x32xbf16>
    %cst_145 = arith.constant dense<0.000000e+00> : vector<8x32xf32>
    %464 = tpu.matmul %462, %463, %cst_145 {dimension_numbers = #tpu.dot_dimension_numbers<[1], [0], [0], [1], [0, 0, 1, 1], [], []>} : vector<8x16xbf16>, vector<16x32xbf16>, vector<8x32xf32> -> vector<8x32xf32>
    %465 = vector.extract_strided_slice %274 {offsets = [96, 0], sizes = [32, 128], strides = [1, 1]} : vector<128x128xbf16> to vector<32x128xbf16>
    %466 = arith.truncf %464 : vector<8x32xf32> to vector<8x32xbf16>
    %cst_146 = arith.constant dense<0.000000e+00> : vector<8x128xf32>
    %467 = tpu.matmul %466, %465, %cst_146 {dimension_numbers = #tpu.dot_dimension_numbers<[1], [0], [0], [1], [0, 0, 1, 1], [], []>} : vector<8x32xbf16>, vector<32x128xbf16>, vector<8x128xf32> -> vector<8x128xf32>
    %468 = arith.addf %446, %467 : vector<8x128xf32>
    %469 = tpu.concatenate %371, %468 in 0 : vector<8x128xf32>, vector<8x128xf32> -> vector<16x128xf32>
    %470 = arith.addf %235, %469 : vector<16x128xf32>
    %c0_147 = arith.constant 0 : index
    %c0_148 = arith.constant 0 : index
    %471 = vector.load %arg17[%c0_147, %c0_148] : memref<1x128xf32, #tpu.memory_space<vmem>>, vector<1x128xf32>
    %472 = vector.broadcast %471 : vector<1x128xf32> to vector<16x128xf32>
    %473 = arith.addf %470, %472 : vector<16x128xf32>
    %c0_149 = arith.constant 0 : index
    %c0_150 = arith.constant 0 : index
    %474 = vector.load %arg18[%c0_149, %c0_150] : memref<1x128xf32, #tpu.memory_space<vmem>>, vector<1x128xf32>
    %c0_151 = arith.constant 0 : index
    %c0_152 = arith.constant 0 : index
    %475 = vector.load %arg19[%c0_151, %c0_152] : memref<1x128xf32, #tpu.memory_space<vmem>>, vector<1x128xf32>
    %cst_153 = arith.constant dense<0.000000e+00> : vector<16xf32>
    %476 = vector.multi_reduction <add>, %473, %cst_153 [1] : vector<16x128xf32> to vector<16xf32>
    %477 = vector.shape_cast %476 : vector<16xf32> to vector<16x1xf32>
    %cst_154 = arith.constant 1.280000e+02 : f32
    %478 = vector.broadcast %cst_154 : f32 to vector<16x1xf32>
    %479 = arith.divf %477, %478 : vector<16x1xf32>
    %480 = vector.broadcast %479 : vector<16x1xf32> to vector<16x128xf32>
    %481 = arith.subf %473, %480 : vector<16x128xf32>
    %482 = arith.mulf %481, %481 : vector<16x128xf32>
    %cst_155 = arith.constant dense<0.000000e+00> : vector<16xf32>
    %483 = vector.multi_reduction <add>, %482, %cst_155 [1] : vector<16x128xf32> to vector<16xf32>
    %484 = vector.shape_cast %483 : vector<16xf32> to vector<16x1xf32>
    %cst_156 = arith.constant 1.280000e+02 : f32
    %485 = vector.broadcast %cst_156 : f32 to vector<16x1xf32>
    %486 = arith.divf %484, %485 : vector<16x1xf32>
    %487 = vector.broadcast %479 : vector<16x1xf32> to vector<16x128xf32>
    %488 = arith.subf %473, %487 : vector<16x128xf32>
    %cst_157 = arith.constant 9.99999974E-6 : f32
    %489 = vector.broadcast %cst_157 : f32 to vector<16x1xf32>
    %490 = arith.addf %486, %489 : vector<16x1xf32>
    %491 = math.rsqrt %490 : vector<16x1xf32>
    %492 = vector.broadcast %491 : vector<16x1xf32> to vector<16x128xf32>
    %493 = arith.mulf %488, %492 : vector<16x128xf32>
    %494 = vector.broadcast %474 : vector<1x128xf32> to vector<16x128xf32>
    %495 = arith.mulf %493, %494 : vector<16x128xf32>
    %496 = vector.broadcast %475 : vector<1x128xf32> to vector<16x128xf32>
    %497 = arith.addf %495, %496 : vector<16x128xf32>
    %c0_158 = arith.constant 0 : index
    %c0_159 = arith.constant 0 : index
    %498 = vector.load %arg20[%c0_158, %c0_159] : memref<128x256xbf16, #tpu.memory_space<vmem>>, vector<128x256xbf16>
    %499 = arith.truncf %497 : vector<16x128xf32> to vector<16x128xbf16>
    %cst_160 = arith.constant dense<0.000000e+00> : vector<16x256xf32>
    %500 = tpu.matmul %499, %498, %cst_160 {dimension_numbers = #tpu.dot_dimension_numbers<[1], [0], [0], [1], [0, 0, 1, 1], [], []>} : vector<16x128xbf16>, vector<128x256xbf16>, vector<16x256xf32> -> vector<16x256xf32>
    %c0_161 = arith.constant 0 : index
    %c0_162 = arith.constant 0 : index
    %501 = vector.load %arg21[%c0_161, %c0_162] : memref<1x256xf32, #tpu.memory_space<vmem>>, vector<1x256xf32>
    %502 = vector.broadcast %501 : vector<1x256xf32> to vector<16x256xf32>
    %503 = arith.addf %500, %502 : vector<16x256xf32>
    %cst_163 = arith.constant 0.000000e+00 : f32
    %504 = vector.broadcast %cst_163 : f32 to vector<16x256xf32>
    %505 = arith.maximumf %503, %504 : vector<16x256xf32>
    %c0_164 = arith.constant 0 : index
    %c0_165 = arith.constant 0 : index
    %506 = vector.load %arg22[%c0_164, %c0_165] : memref<256x128xbf16, #tpu.memory_space<vmem>>, vector<256x128xbf16>
    %507 = arith.truncf %505 : vector<16x256xf32> to vector<16x256xbf16>
    %cst_166 = arith.constant dense<0.000000e+00> : vector<16x128xf32>
    %508 = tpu.matmul %507, %506, %cst_166 {dimension_numbers = #tpu.dot_dimension_numbers<[1], [0], [0], [1], [0, 0, 1, 1], [], []>} : vector<16x256xbf16>, vector<256x128xbf16>, vector<16x128xf32> -> vector<16x128xf32>
    %509 = arith.addf %473, %508 : vector<16x128xf32>
    %c0_167 = arith.constant 0 : index
    %c0_168 = arith.constant 0 : index
    %510 = vector.load %arg23[%c0_167, %c0_168] : memref<1x128xf32, #tpu.memory_space<vmem>>, vector<1x128xf32>
    %511 = vector.broadcast %510 : vector<1x128xf32> to vector<16x128xf32>
    %512 = arith.addf %509, %511 : vector<16x128xf32>
    %c0_169 = arith.constant 0 : index
    %c0_170 = arith.constant 0 : index
    %513 = vector.load %arg24[%c0_169, %c0_170] : memref<16x128xf32, #tpu.memory_space<vmem>>, vector<16x128xf32>
    tpu.vector_store %arg24[%c0_169, %c0_170], %512 {strides = array<i32>} : memref<16x128xf32, #tpu.memory_space<vmem>>, vector<16x128xf32>,
    return
  }
}

</mosaic_0001>

<llo_original>
// kernel: tpu_custom_call.1
$region0: #{tpu_custom_call.1}
  #allocation0 [shape = 'u32[]', space=smem, size = 0x4, offset = 0x4, fixed_abs, tag = 'smem constant byte address 0x4 - core index']
  #allocation1 [shape = 'u32[144,128]{1,0:T(1,128)}', space=vmem, size = 0x12000, scoped, tag = 'internal scratch']
  %s0 = inlined_call_operand.hbm [shape: f32[16,128], index: 0, kind: input, shape index: {}]
  %s1 = inlined_call_operand.hbm [shape: bf16[32,128], index: 1, kind: input, shape index: {}]
  %s2 = inlined_call_operand.hbm [shape: f32[2,8,8], index: 2, kind: input, shape index: {}]
  %s3 = inlined_call_operand.hbm [shape: f32[2,8,16], index: 3, kind: input, shape index: {}]
  %s4 = inlined_call_operand.vmem [shape: f32[1,128], index: 4, kind: input, shape index: {}]
  %s5 = inlined_call_operand.vmem [shape: f32[1,128], index: 5, kind: input, shape index: {}]
  %s6 = inlined_call_operand.hbm [shape: bf16[128,384], index: 6, kind: input, shape index: {}]
  %s7 = inlined_call_operand.vmem [shape: f32[1,384], index: 7, kind: input, shape index: {}]
  %s8 = inlined_call_operand.hbm [shape: bf16[128,128], index: 8, kind: input, shape index: {}]
  %s9 = inlined_call_operand.vmem [shape: f32[1,128], index: 9, kind: input, shape index: {}]
  %s10 = inlined_call_operand.vmem [shape: f32[1,128], index: 10, kind: input, shape index: {}]
  %s11 = inlined_call_operand.vmem [shape: f32[1,128], index: 11, kind: input, shape index: {}]
  %s12 = inlined_call_operand.hbm [shape: bf16[128,128], index: 12, kind: input, shape index: {}]
  %s13 = inlined_call_operand.vmem [shape: f32[1,128], index: 13, kind: input, shape index: {}]
  %s14 = inlined_call_operand.hbm [shape: bf16[128,256], index: 14, kind: input, shape index: {}]
  %s15 = inlined_call_operand.vmem [shape: f32[1,256], index: 15, kind: input, shape index: {}]
  %s16 = inlined_call_operand.hbm [shape: bf16[128,128], index: 16, kind: input, shape index: {}]
  %s17 = inlined_call_operand.vmem [shape: f32[1,128], index: 17, kind: input, shape index: {}]
  %s18 = inlined_call_operand.vmem [shape: f32[1,128], index: 18, kind: input, shape index: {}]
  %s19 = inlined_call_operand.vmem [shape: f32[1,128], index: 19, kind: input, shape index: {}]
  %s20 = inlined_call_operand.hbm [shape: bf16[128,256], index: 20, kind: input, shape index: {}]
  %s21 = inlined_call_operand.vmem [shape: f32[1,256], index: 21, kind: input, shape index: {}]
  %s22 = inlined_call_operand.hbm [shape: bf16[256,128], index: 22, kind: input, shape index: {}]
  %s23 = inlined_call_operand.vmem [shape: f32[1,128], index: 23, kind: input, shape index: {}]
  %s24 = inlined_call_operand.hbm [shape: f32[16,128], index: 24, kind: output, shape index: {}]
  %s25 = sld [smem:[#allocation0]]
  $region150: #{tpu_custom_call.1} parent=0
    _
  %s27 = ssub.s32 1, %s25
  %s28 = scalar_select 0, %s27, %s25
  $region1: #{tpu_custom_call.1} parent=0
    #allocation2 [shape = 'u8[8192]{0}', space=vmem, size = 0x2000, scoped, tag = 'input window, operand 0, single buffered']
    #allocation3 [shape = 's32[1]{0}', space=sflag, size = 0x4, scoped, tag = 'scoped memory for tpu_custom_call.1']
    #allocation4 [shape = 's32[1]{0}', space=sflag, size = 0x4, scoped, tag = 'scoped memory for tpu_custom_call.1']
    #allocation5 [shape = 'u8[8192]{0}', space=vmem, size = 0x2000, scoped, tag = 'input window, operand 1, single buffered']
    #allocation6 [shape = 's32[1]{0}', space=sflag, size = 0x4, scoped, tag = 'scoped memory for tpu_custom_call.1']
    #allocation7 [shape = 'u8[8192]{0}', space=vmem, size = 0x2000, scoped, tag = 'input window, operand 2, single buffered']
    #allocation8 [shape = 'u8[8192]{0}', space=vmem, size = 0x2000, scoped, tag = 'input window, operand 3, single buffered']
    #allocation9 [shape = 's32[1]{0}', space=sflag, size = 0x4, scoped, tag = 'scoped memory for tpu_custom_call.1']
    #allocation10 [shape = 'u8[98304]{0}', space=vmem, size = 0x18000, scoped, tag = 'input window, operand 6, single buffered']
    #allocation11 [shape = 'u8[32768]{0}', space=vmem, size = 0x8000, scoped, tag = 'input window, operand 8, single buffered']
    #allocation12 [shape = 's32[1]{0}', space=sflag, size = 0x4, scoped, tag = 'scoped memory for tpu_custom_call.1']
    #allocation13 [shape = 'u8[32768]{0}', space=vmem, size = 0x8000, scoped, tag = 'input window, operand 12, single buffered']
    #allocation14 [shape = 'u8[65536]{0}', space=vmem, size = 0x10000, scoped, tag = 'input window, operand 14, single buffered']
    #allocation15 [shape = 's32[1]{0}', space=sflag, size = 0x4, scoped, tag = 'scoped memory for tpu_custom_call.1']
    #allocation16 [shape = 'u8[32768]{0}', space=vmem, size = 0x8000, scoped, tag = 'input window, operand 16, single buffered']
    #allocation17 [shape = 'u8[65536]{0}', space=vmem, size = 0x10000, scoped, tag = 'input window, operand 20, single buffered']
    #allocation18 [shape = 's32[1]{0}', space=sflag, size = 0x4, scoped, tag = 'scoped memory for tpu_custom_call.1']
    #allocation19 [shape = 'u8[65536]{0}', space=vmem, size = 0x10000, scoped, tag = 'input window, operand 22, single buffered']
    #allocation20 [shape = 'u8[8192]{0}', space=vmem, size = 0x2000, scoped, tag = 'output window, operand 0, single buffered']
    %29 = vsyncpa [#allocation3], 0
    %30 = vsyncpa [#allocation6], 0
    %31 = vsyncpa [#allocation9], 0
    %32 = vsyncpa [#allocation12], 0
    %33 = vsyncpa [#allocation15], 0
    %34 = vsyncpa [#allocation18], 0
    %35 = vsyncpa [#allocation4], 0
    // Predicated region
    $region2: #{tpu_custom_call.1} parent=1 // pred_check
      _
    $region3: #{tpu_custom_call.1} parent=1 // pred_check_branch
      %37 = sbr.rel (0) target = $region5
    $region4: #{tpu_custom_call.1} parent=1 // pred_region
      %s39 = ssub.s32 256, 256
      %40 = vsyncadd [#allocation3], %s39
      %s41 = sshll.u32 [#allocation2], 4
      %s42 = int_to_ptr.vmem [resolvable:$true] %s41
      %47 = dma.hbm_to_vmem [thread:$0]  %s0, 256, %s42, [#allocation3], 128, 128, 8
    $region5: #{tpu_custom_call.1} parent=1 // pred_fallthru
      _
    // Predicated region
    $region6: #{tpu_custom_call.1} parent=1 // pred_check
      _
    $region7: #{tpu_custom_call.1} parent=1 // pred_check_branch
      %49 = sbr.rel (0) target = $region9
    $region8: #{tpu_custom_call.1} parent=1 // pred_region
      %s51 = ssub.s32 256, 256
      %52 = vsyncadd [#allocation6], %s51
      %s53 = sshll.u32 [#allocation5], 4
      %s54 = int_to_ptr.vmem [resolvable:$true] %s53
      %59 = dma.hbm_to_vmem [thread:$0]  %s1, 256, %s54, [#allocation6], 64, 64, 4
    $region9: #{tpu_custom_call.1} parent=1 // pred_fallthru
      _
    // Predicated region
    $region10: #{tpu_custom_call.1} parent=1 // pred_check
      _
    $region11: #{tpu_custom_call.1} parent=1 // pred_check_branch
      %61 = sbr.rel (0) target = $region13
    $region12: #{tpu_custom_call.1} parent=1 // pred_region
      %s63 = ssub.s32 256, 256
      %64 = vsyncadd [#allocation6], %s63
      %s65 = sshll.u32 [#allocation7], 4
      %s66 = int_to_ptr.vmem [resolvable:$true] %s65
      %71 = dma.hbm_to_vmem [thread:$0]  %s2, 256, %s66, [#allocation6], 128, 128, 8
    $region13: #{tpu_custom_call.1} parent=1 // pred_fallthru
      _
    // Predicated region
    $region14: #{tpu_custom_call.1} parent=1 // pred_check
      _
    $region15: #{tpu_custom_call.1} parent=1 // pred_check_branch
      %73 = sbr.rel (0) target = $region17
    $region16: #{tpu_custom_call.1} parent=1 // pred_region
      %s75 = ssub.s32 256, 256
      %76 = vsyncadd [#allocation9], %s75
      %s77 = sshll.u32 [#allocation8], 4
      %s78 = int_to_ptr.vmem [resolvable:$true] %s77
      %83 = dma.hbm_to_vmem [thread:$0]  %s3, 256, %s78, [#allocation9], 128, 128, 8
    $region17: #{tpu_custom_call.1} parent=1 // pred_fallthru
      _
    // Predicated region
    $region18: #{tpu_custom_call.1} parent=1 // pred_check
      _
    $region19: #{tpu_custom_call.1} parent=1 // pred_check_branch
      %85 = sbr.rel (0) target = $region21
    $region20: #{tpu_custom_call.1} parent=1 // pred_region
      _
    $region21: #{tpu_custom_call.1} parent=1 // pred_fallthru
      _
    // Predicated region
    $region22: #{tpu_custom_call.1} parent=1 // pred_check
      _
    $region23: #{tpu_custom_call.1} parent=1 // pred_check_branch
      %87 = sbr.rel (0) target = $region25
    $region24: #{tpu_custom_call.1} parent=1 // pred_region
      _
    $region25: #{tpu_custom_call.1} parent=1 // pred_fallthru
      _
    // Predicated region
    $region26: #{tpu_custom_call.1} parent=1 // pred_check
      _
    $region27: #{tpu_custom_call.1} parent=1 // pred_check_branch
      %89 = sbr.rel (0) target = $region29
    $region28: #{tpu_custom_call.1} parent=1 // pred_region
      %s91 = ssub.s32 3072, 3072
      %92 = vsyncadd [#allocation9], %s91
      %s93 = sshll.u32 [#allocation10], 4
      %s94 = int_to_ptr.vmem [resolvable:$true] %s93
      %99 = dma.hbm_to_vmem [thread:$0]  %s6, 3072, %s94, [#allocation9], 192, 192, 12
    $region29: #{tpu_custom_call.1} parent=1 // pred_fallthru
      _
    // Predicated region
    $region30: #{tpu_custom_call.1} parent=1 // pred_check
      _
    $region31: #{tpu_custom_call.1} parent=1 // pred_check_branch
      %101 = sbr.rel (0) target = $region33
    $region32: #{tpu_custom_call.1} parent=1 // pred_region
      _
    $region33: #{tpu_custom_call.1} parent=1 // pred_fallthru
      _
    // Predicated region
    $region34: #{tpu_custom_call.1} parent=1 // pred_check
      _
    $region35: #{tpu_custom_call.1} parent=1 // pred_check_branch
      %103 = sbr.rel (0) target = $region37
    $region36: #{tpu_custom_call.1} parent=1 // pred_region
      %s105 = ssub.s32 1024, 1024
      %106 = vsyncadd [#allocation12], %s105
      %s107 = sshll.u32 [#allocation11], 4
      %s108 = int_to_ptr.vmem [resolvable:$true] %s107
      %113 = dma.hbm_to_vmem [thread:$0]  %s8, 1024, %s108, [#allocation12], 64, 64, 4
    $region37: #{tpu_custom_call.1} parent=1 // pred_fallthru
      _
    // Predicated region
    $region38: #{tpu_custom_call.1} parent=1 // pred_check
      _
    $region39: #{tpu_custom_call.1} parent=1 // pred_check_branch
      %115 = sbr.rel (0) target = $region41
    $region40: #{tpu_custom_call.1} parent=1 // pred_region
      _
    $region41: #{tpu_custom_call.1} parent=1 // pred_fallthru
      _
    // Predicated region
    $region42: #{tpu_custom_call.1} parent=1 // pred_check
      _
    $region43: #{tpu_custom_call.1} parent=1 // pred_check_branch
      %117 = sbr.rel (0) target = $region45
    $region44: #{tpu_custom_call.1} parent=1 // pred_region
      _
    $region45: #{tpu_custom_call.1} parent=1 // pred_fallthru
      _
    // Predicated region
    $region46: #{tpu_custom_call.1} parent=1 // pred_check
      _
    $region47: #{tpu_custom_call.1} parent=1 // pred_check_branch
      %119 = sbr.rel (0) target = $region49
    $region48: #{tpu_custom_call.1} parent=1 // pred_region
      _
    $region49: #{tpu_custom_call.1} parent=1 // pred_fallthru
      _
    // Predicated region
    $region50: #{tpu_custom_call.1} parent=1 // pred_check
      _
    $region51: #{tpu_custom_call.1} parent=1 // pred_check_branch
      %121 = sbr.rel (0) target = $region53
    $region52: #{tpu_custom_call.1} parent=1 // pred_region
      %s123 = ssub.s32 1024, 1024
      %124 = vsyncadd [#allocation12], %s123
      %s125 = sshll.u32 [#allocation13], 4
      %s126 = int_to_ptr.vmem [resolvable:$true] %s125
      %131 = dma.hbm_to_vmem [thread:$0]  %s12, 1024, %s126, [#allocation12], 64, 64, 4
    $region53: #{tpu_custom_call.1} parent=1 // pred_fallthru
      _
    // Predicated region
    $region54: #{tpu_custom_call.1} parent=1 // pred_check
      _
    $region55: #{tpu_custom_call.1} parent=1 // pred_check_branch
      %133 = sbr.rel (0) target = $region57
    $region56: #{tpu_custom_call.1} parent=1 // pred_region
      _
    $region57: #{tpu_custom_call.1} parent=1 // pred_fallthru
      _
    // Predicated region
    $region58: #{tpu_custom_call.1} parent=1 // pred_check
      _
    $region59: #{tpu_custom_call.1} parent=1 // pred_check_branch
      %135 = sbr.rel (0) target = $region61
    $region60: #{tpu_custom_call.1} parent=1 // pred_region
      %s137 = ssub.s32 2048, 2048
      %138 = vsyncadd [#allocation15], %s137
      %s139 = sshll.u32 [#allocation14], 4
      %s140 = int_to_ptr.vmem [resolvable:$true] %s139
      %145 = dma.hbm_to_vmem [thread:$0]  %s14, 2048, %s140, [#allocation15], 128, 128, 8
    $region61: #{tpu_custom_call.1} parent=1 // pred_fallthru
      _
    // Predicated region
    $region62: #{tpu_custom_call.1} parent=1 // pred_check
      _
    $region63: #{tpu_custom_call.1} parent=1 // pred_check_branch
      %147 = sbr.rel (0) target = $region65
    $region64: #{tpu_custom_call.1} parent=1 // pred_region
      _
    $region65: #{tpu_custom_call.1} parent=1 // pred_fallthru
      _
    // Predicated region
    $region66: #{tpu_custom_call.1} parent=1 // pred_check
      _
    $region67: #{tpu_custom_call.1} parent=1 // pred_check_branch
      %149 = sbr.rel (0) target = $region69
    $region68: #{tpu_custom_call.1} parent=1 // pred_region
      %s151 = ssub.s32 1024, 1024
      %152 = vsyncadd [#allocation15], %s151
      %s153 = sshll.u32 [#allocation16], 4
      %s154 = int_to_ptr.vmem [resolvable:$true] %s153
      %159 = dma.hbm_to_vmem [thread:$0]  %s16, 1024, %s154, [#allocation15], 64, 64, 4
    $region69: #{tpu_custom_call.1} parent=1 // pred_fallthru
      _
    // Predicated region
    $region70: #{tpu_custom_call.1} parent=1 // pred_check
      _
    $region71: #{tpu_custom_call.1} parent=1 // pred_check_branch
      %161 = sbr.rel (0) target = $region73
    $region72: #{tpu_custom_call.1} parent=1 // pred_region
      _
    $region73: #{tpu_custom_call.1} parent=1 // pred_fallthru
      _
    // Predicated region
    $region74: #{tpu_custom_call.1} parent=1 // pred_check
      _
    $region75: #{tpu_custom_call.1} parent=1 // pred_check_branch
      %163 = sbr.rel (0) target = $region77
    $region76: #{tpu_custom_call.1} parent=1 // pred_region
      _
    $region77: #{tpu_custom_call.1} parent=1 // pred_fallthru
      _
    // Predicated region
    $region78: #{tpu_custom_call.1} parent=1 // pred_check
      _
    $region79: #{tpu_custom_call.1} parent=1 // pred_check_branch
      %165 = sbr.rel (0) target = $region81
    $region80: #{tpu_custom_call.1} parent=1 // pred_region
      _
    $region81: #{tpu_custom_call.1} parent=1 // pred_fallthru
      _
    // Predicated region
    $region82: #{tpu_custom_call.1} parent=1 // pred_check
      _
    $region83: #{tpu_custom_call.1} parent=1 // pred_check_branch
      %167 = sbr.rel (0) target = $region85
    $region84: #{tpu_custom_call.1} parent=1 // pred_region
      %s169 = ssub.s32 2048, 2048
      %170 = vsyncadd [#allocation18], %s169
      %s171 = sshll.u32 [#allocation17], 4
      %s172 = int_to_ptr.vmem [resolvable:$true] %s171
      %177 = dma.hbm_to_vmem [thread:$0]  %s20, 2048, %s172, [#allocation18], 128, 128, 8
    $region85: #{tpu_custom_call.1} parent=1 // pred_fallthru
      _
    // Predicated region
    $region86: #{tpu_custom_call.1} parent=1 // pred_check
      _
    $region87: #{tpu_custom_call.1} parent=1 // pred_check_branch
      %179 = sbr.rel (0) target = $region89
    $region88: #{tpu_custom_call.1} parent=1 // pred_region
      _
    $region89: #{tpu_custom_call.1} parent=1 // pred_fallthru
      _
    // Predicated region
    $region90: #{tpu_custom_call.1} parent=1 // pred_check
      _
    $region91: #{tpu_custom_call.1} parent=1 // pred_check_branch
      %181 = sbr.rel (0) target = $region93
    $region92: #{tpu_custom_call.1} parent=1 // pred_region
      %s183 = ssub.s32 2048, 2048
      %184 = vsyncadd [#allocation18], %s183
      %s185 = sshll.u32 [#allocation19], 4
      %s186 = int_to_ptr.vmem [resolvable:$true] %s185
      %191 = dma.hbm_to_vmem [thread:$0]  %s22, 2048, %s186, [#allocation18], 64, 64, 4
    $region93: #{tpu_custom_call.1} parent=1 // pred_fallthru
      _
    // Predicated region
    $region94: #{tpu_custom_call.1} parent=1 // pred_check
      _
    $region95: #{tpu_custom_call.1} parent=1 // pred_check_branch
      %193 = sbr.rel (0) target = $region97
    $region96: #{tpu_custom_call.1} parent=1 // pred_region
      _
    $region97: #{tpu_custom_call.1} parent=1 // pred_fallthru
      _
    // Predicated region
    $region98: #{tpu_custom_call.1} parent=1 // pred_check
      _
    $region99: #{tpu_custom_call.1} parent=1 // pred_check_branch
      %195 = sbr.rel (0) target = $region101
    $region100: #{tpu_custom_call.1} parent=1 // pred_region
      %196 = dma.done [#allocation3], 256
    $region101: #{tpu_custom_call.1} parent=1 // pred_fallthru
      _
    // Predicated region
    $region102: #{tpu_custom_call.1} parent=1 // pred_check
      _
    $region103: #{tpu_custom_call.1} parent=1 // pred_check_branch
      %198 = sbr.rel (0) target = $region105
    $region104: #{tpu_custom_call.1} parent=1 // pred_region
      %199 = dma.done [#allocation6], 256
    $region105: #{tpu_custom_call.1} parent=1 // pred_fallthru
      _
    // Predicated region
    $region106: #{tpu_custom_call.1} parent=1 // pred_check
      _
    $region107: #{tpu_custom_call.1} parent=1 // pred_check_branch
      %201 = sbr.rel (0) target = $region109
    $region108: #{tpu_custom_call.1} parent=1 // pred_region
      %202 = dma.done [#allocation6], 256
    $region109: #{tpu_custom_call.1} parent=1 // pred_fallthru
      _
    // Predicated region
    $region110: #{tpu_custom_call.1} parent=1 // pred_check
      _
    $region111: #{tpu_custom_call.1} parent=1 // pred_check_branch
      %204 = sbr.rel (0) target = $region113
    $region112: #{tpu_custom_call.1} parent=1 // pred_region
      %205 = dma.done [#allocation9], 256
    $region113: #{tpu_custom_call.1} parent=1 // pred_fallthru
      _
    // Predicated region
    $region114: #{tpu_custom_call.1} parent=1 // pred_check
      _
    $region115: #{tpu_custom_call.1} parent=1 // pred_check_branch
      %207 = sbr.rel (0) target = $region117
    $region116: #{tpu_custom_call.1} parent=1 // pred_region
      %208 = dma.done [#allocation9], 3072
    $region117: #{tpu_custom_call.1} parent=1 // pred_fallthru
      _
    // Predicated region
    $region118: #{tpu_custom_call.1} parent=1 // pred_check
      _
    $region119: #{tpu_custom_call.1} parent=1 // pred_check_branch
      %210 = sbr.rel (0) target = $region121
    $region120: #{tpu_custom_call.1} parent=1 // pred_region
      %211 = dma.done [#allocation12], 1024
    $region121: #{tpu_custom_call.1} parent=1 // pred_fallthru
      _
    // Predicated region
    $region122: #{tpu_custom_call.1} parent=1 // pred_check
      _
    $region123: #{tpu_custom_call.1} parent=1 // pred_check_branch
      %213 = sbr.rel (0) target = $region125
    $region124: #{tpu_custom_call.1} parent=1 // pred_region
      %214 = dma.done [#allocation12], 1024
    $region125: #{tpu_custom_call.1} parent=1 // pred_fallthru
      _
    // Predicated region
    $region126: #{tpu_custom_call.1} parent=1 // pred_check
      _
    $region127: #{tpu_custom_call.1} parent=1 // pred_check_branch
      %216 = sbr.rel (0) target = $region129
    $region128: #{tpu_custom_call.1} parent=1 // pred_region
      %217 = dma.done [#allocation15], 2048
    $region129: #{tpu_custom_call.1} parent=1 // pred_fallthru
      _
    // Predicated region
    $region130: #{tpu_custom_call.1} parent=1 // pred_check
      _
    $region131: #{tpu_custom_call.1} parent=1 // pred_check_branch
      %219 = sbr.rel (0) target = $region133
    $region132: #{tpu_custom_call.1} parent=1 // pred_region
      %220 = dma.done [#allocation15], 1024
    $region133: #{tpu_custom_call.1} parent=1 // pred_fallthru
      _
    // Predicated region
    $region134: #{tpu_custom_call.1} parent=1 // pred_check
      _
    $region135: #{tpu_custom_call.1} parent=1 // pred_check_branch
      %222 = sbr.rel (0) target = $region137
    $region136: #{tpu_custom_call.1} parent=1 // pred_region
      %223 = dma.done [#allocation18], 2048
    $region137: #{tpu_custom_call.1} parent=1 // pred_fallthru
      _
    // Predicated region
    $region138: #{tpu_custom_call.1} parent=1 // pred_check
      _
    $region139: #{tpu_custom_call.1} parent=1 // pred_check_branch
      %225 = sbr.rel (0) target = $region141
    $region140: #{tpu_custom_call.1} parent=1 // pred_region
      %226 = dma.done [#allocation18], 2048
    $region141: #{tpu_custom_call.1} parent=1 // pred_fallthru
      _
    %v228 = vld [vmem:[#allocation2] sm:$0xff]
    %v229 = vld [vmem:[#allocation2 + $0x8] sm:$0xff]
    %v230 = vld [vmem:[#allocation5] sm:$0xf]
    %v231 = vld [vmem:[#allocation5 + $0x4] sm:$0xf]
    %v232 = vld [vmem:[#allocation5 + $0x8] sm:$0xf]
    %v233 = vld [vmem:[#allocation5 + $0xc] sm:$0xf]
    %v234 = vld [vmem:[%s4] sm:$0x1]
    %v235 = vld [vmem:[%s5] sm:$0x1]
    %236 = vadd.xlane.f32.xlu0 %v228
    %v237 = vpop.xlane.xlu0 %236
    %238 = vadd.xlane.f32.xlu0 %v229
    %v239 = vpop.xlane.xlu0 %238
    %v240 = vrcp.pop 128.0
    %v241 = vmul.f32 %v237, %v240
    %v242 = vmul.f32 %v239, %v240
    %v243 = vsub.f32 %v228, %v241
    %v244 = vsub.f32 %v229, %v242
    %v245 = vmul.f32 %v243, %v243
    %v246 = vmul.f32 %v244, %v244
    %247 = vadd.xlane.f32.xlu0 %v245
    %v248 = vpop.xlane.xlu0 %247
    %249 = vadd.xlane.f32.xlu0 %v246
    %v250 = vpop.xlane.xlu0 %249
    %v251 = vmul.f32 %v248, %v240
    %v252 = vmul.f32 %v250, %v240
    %v253 = vadd.f32 %v251, 1e-05
    %v254 = vadd.f32 %v252, 1e-05
    %v255 = vrsqrt.pop %v253
    %v256 = vrsqrt.pop %v254
    %v257 = vmul.f32 %v243, %v255
    %v258 = vmul.f32 %v244, %v256
    %v260 = vlaneseq
    %v261 = vshrl.u32 %v260, 7
    %v262 = vsub.s32 0, %v261
    %v263 = vrot.slane %v234, %v262
    %v265 = vmul.f32 %v257, %v263
    %v266 = vmul.f32 %v258, %v263
    %v268 = vlaneseq
    %v269 = vshrl.u32 %v268, 7
    %v270 = vsub.s32 0, %v269
    %v271 = vrot.slane %v235, %v270
    %v273 = vadd.f32 %v265, %v271
    %v274 = vadd.f32 %v266, %v271
    %v275 = vld [vmem:[#allocation10] sm:$0xff]
    %v276 = vld [vmem:[#allocation10 + $0x8] sm:$0xf]
    %v277 = vld [vmem:[#allocation10 + $0xc] sm:$0xff]
    %v278 = vld [vmem:[#allocation10 + $0x14] sm:$0xf]
    %v279 = vld [vmem:[#allocation10 + $0x18] sm:$0xff]
    %v280 = vld [vmem:[#allocation10 + $0x20] sm:$0xf]
    %v281 = vld [vmem:[#allocation10 + $0x24] sm:$0xff]
    %v282 = vld [vmem:[#allocation10 + $0x2c] sm:$0xf]
    %v283 = vld [vmem:[#allocation10 + $0x30] sm:$0xff]
    %v284 = vld [vmem:[#allocation10 + $0x38] sm:$0xf]
    %v285 = vld [vmem:[#allocation10 + $0x3c] sm:$0xff]
    %v286 = vld [vmem:[#allocation10 + $0x44] sm:$0xf]
    %v287 = vld [vmem:[#allocation10 + $0x48] sm:$0xff]
    %v288 = vld [vmem:[#allocation10 + $0x50] sm:$0xf]
    %v289 = vld [vmem:[#allocation10 + $0x54] sm:$0xff]
    %v290 = vld [vmem:[#allocation10 + $0x5c] sm:$0xf]
    %v291 = vld [vmem:[#allocation10 + $0x60] sm:$0xff]
    %v292 = vld [vmem:[#allocation10 + $0x68] sm:$0xf]
    %v293 = vld [vmem:[#allocation10 + $0x6c] sm:$0xff]
    %v294 = vld [vmem:[#allocation10 + $0x74] sm:$0xf]
    %v295 = vld [vmem:[#allocation10 + $0x78] sm:$0xff]
    %v296 = vld [vmem:[#allocation10 + $0x80] sm:$0xf]
    %v297 = vld [vmem:[#allocation10 + $0x84] sm:$0xff]
    %v298 = vld [vmem:[#allocation10 + $0x8c] sm:$0xf]
    %v299 = vld [vmem:[#allocation10 + $0x90] sm:$0xff]
    %v300 = vld [vmem:[#allocation10 + $0x98] sm:$0xf]
    %v301 = vld [vmem:[#allocation10 + $0x9c] sm:$0xff]
    %v302 = vld [vmem:[#allocation10 + $0xa4] sm:$0xf]
    %v303 = vld [vmem:[#allocation10 + $0xa8] sm:$0xff]
    %v304 = vld [vmem:[#allocation10 + $0xb0] sm:$0xf]
    %v305 = vld [vmem:[#allocation10 + $0xb4] sm:$0xff]
    %v306 = vld [vmem:[#allocation10 + $0xbc] sm:$0xf]
    %v307 = vpack.c.bf16 %v274, %v273
    %v308 = vld [vmem:[%s7] sm:$0x7]
    %v310 = vlaneseq
    %v311 = vshrl.u32 %v310, 7
    %v312 = vsub.s32 0, %v311
    %v313 = vrot.slane %v308, %v312
    %v314 = vlaneseq
    %v315 = vshrl.u32 %v314, 7
    %v316 = vsub.s32 1, %v315
    %v317 = vrot.slane %v308, %v316
    %v318 = vlaneseq
    %v319 = vshrl.u32 %v318, 7
    %v320 = vsub.s32 2, %v319
    %v321 = vrot.slane %v308, %v320
    %v357 = vunpack.c.l.b16 %v275
    %v358 = vunpack.c.h.b16 %v275
    %v359 = vunpack.c.l.b16 %v276
    %v360 = vunpack.c.l.b16 %v277
    %v361 = vunpack.c.h.b16 %v277
    %v362 = vunpack.c.l.b16 %v278
    %v363 = vunpack.c.l.b16 %v279
    %v364 = vunpack.c.h.b16 %v279
    %v365 = vunpack.c.l.b16 %v280
    %v366 = vunpack.c.l.b16 %v281
    %v367 = vunpack.c.h.b16 %v281
    %v368 = vunpack.c.l.b16 %v282
    %v369 = vunpack.c.l.b16 %v283
    %v370 = vunpack.c.h.b16 %v283
    %v371 = vunpack.c.l.b16 %v284
    %v372 = vunpack.c.l.b16 %v285
    %v373 = vunpack.c.h.b16 %v285
    %v374 = vunpack.c.l.b16 %v286
    %v375 = vunpack.c.l.b16 %v287
    %v376 = vunpack.c.h.b16 %v287
    %v377 = vunpack.c.l.b16 %v288
    %v378 = vunpack.c.l.b16 %v289
    %v379 = vunpack.c.h.b16 %v289
    %v380 = vunpack.c.l.b16 %v290
    %v381 = vunpack.c.l.b16 %v291
    %v382 = vunpack.c.h.b16 %v291
    %v383 = vunpack.c.l.b16 %v292
    %v384 = vunpack.c.l.b16 %v293
    %v385 = vunpack.c.h.b16 %v293
    %v386 = vunpack.c.l.b16 %v294
    %v387 = vunpack.c.l.b16 %v295
    %v388 = vunpack.c.h.b16 %v295
    %v389 = vunpack.c.l.b16 %v296
    %v390 = vunpack.c.l.b16 %v297
    %v391 = vunpack.c.h.b16 %v297
    %v392 = vunpack.c.l.b16 %v298
    %v393 = vunpack.c.l.b16 %v299
    %v394 = vunpack.c.h.b16 %v299
    %v395 = vunpack.c.l.b16 %v300
    %v396 = vunpack.c.l.b16 %v301
    %v397 = vunpack.c.h.b16 %v301
    %v398 = vunpack.c.l.b16 %v302
    %v399 = vunpack.c.l.b16 %v303
    %v400 = vunpack.c.h.b16 %v303
    %v401 = vunpack.c.l.b16 %v304
    %v402 = vunpack.c.l.b16 %v305
    %v403 = vunpack.c.h.b16 %v305
    %v404 = vunpack.c.l.b16 %v306
    %v405 = vpack.c.b16 %v360, %v357
    %v406 = vpack.c.b16 %v361, %v358
    %v407 = vpack.c.b16 %v362, %v359
    %v408 = vpack.c.b16 %v366, %v363
    %v409 = vpack.c.b16 %v367, %v364
    %v410 = vpack.c.b16 %v368, %v365
    %v411 = vpack.c.b16 %v372, %v369
    %v412 = vpack.c.b16 %v373, %v370
    %v413 = vpack.c.b16 %v374, %v371
    %v414 = vpack.c.b16 %v378, %v375
    %v415 = vpack.c.b16 %v379, %v376
    %v416 = vpack.c.b16 %v380, %v377
    %v417 = vpack.c.b16 %v384, %v381
    %v418 = vpack.c.b16 %v385, %v382
    %v419 = vpack.c.b16 %v386, %v383
    %v420 = vpack.c.b16 %v390, %v387
    %v421 = vpack.c.b16 %v391, %v388
    %v422 = vpack.c.b16 %v392, %v389
    %v423 = vpack.c.b16 %v396, %v393
    %v424 = vpack.c.b16 %v397, %v394
    %v425 = vpack.c.b16 %v398, %v395
    %v426 = vpack.c.b16 %v402, %v399
    %v427 = vpack.c.b16 %v403, %v400
    %v428 = vpack.c.b16 %v404, %v401
    %453 = vmatprep.subr.bf16.mxu0 %v406
    %454 = vmatpush1.bf16.msra.mxu0 %v405
    %455 = vmatprep.subr.bf16.mxu0 %v409
    %456 = vmatpush1.bf16.msra.mxu0 %v408
    %457 = vmatprep.subr.bf16.mxu0 %v412
    %458 = vmatpush1.bf16.msra.mxu0 %v411
    %459 = vmatprep.subr.bf16.mxu0 %v415
    %460 = vmatpush1.bf16.msra.mxu0 %v414
    %461 = vmatprep.subr.bf16.mxu0 %v418
    %462 = vmatpush1.bf16.msra.mxu0 %v417
    %463 = vmatprep.subr.bf16.mxu0 %v421
    %464 = vmatpush1.bf16.msra.mxu0 %v420
    %465 = vmatprep.subr.bf16.mxu0 %v424
    %466 = vmatpush1.bf16.msra.mxu0 %v423
    %467 = vmatprep.subr.bf16.mxu0 %v427
    %468 = vmatpush1.bf16.msra.mxu0 %v426
    %469 = vmatprep.subr.bf16.mxu0 0
    %470 = vmatpush1.bf16.msra.mxu0 0
    %471 = vmatprep.subr.bf16.mxu0 0
    %472 = vmatpush1.bf16.msra.mxu0 0
    %473 = vmatprep.subr.bf16.mxu0 0
    %474 = vmatpush1.bf16.msra.mxu0 0
    %475 = vmatprep.subr.bf16.mxu0 0
    %476 = vmatpush1.bf16.msra.mxu0 0
    %477 = vmatprep.subr.bf16.mxu0 0
    %478 = vmatpush1.bf16.msra.mxu0 0
    %479 = vmatprep.subr.bf16.mxu0 0
    %480 = vmatpush1.bf16.msra.mxu0 0
    %481 = vmatprep.subr.bf16.mxu0 0
    %482 = vmatpush1.bf16.msra.mxu0 0
    %483 = vmatprep.subr.bf16.mxu0 0
    %484 = vmatpush1.bf16.msra.mxu0 0
    %485 = vmatprep.mubr.bf16.mxu0 0
    %486 = vmatmul.mubr.bf16.gmra.mrb[0].mxu0 %v307
    %v487 = vpop.f32.mrb[0].mxu0
    %v488 = vadd.f32 %v313, %v487
    %v489 = vpop.f32.mrb[0].mxu0
    %v490 = vadd.f32 %v317, %v489
    %v491 = vpop.f32.mrb[0].mxu0
    %v492 = vadd.f32 %v313, %v491
    %v493 = vpop.f32.mrb[0].mxu0
    %v494 = vadd.f32 %v317, %v493
    %495 = vdwg.mxu0
    %496 = vmatprep.subr.bf16.mxu0 0
    %497 = vmatpush1.bf16.msra.mxu0 %v407
    %498 = vmatprep.subr.bf16.mxu0 0
    %499 = vmatpush1.bf16.msra.mxu0 %v410
    %500 = vmatprep.subr.bf16.mxu0 0
    %501 = vmatpush1.bf16.msra.mxu0 %v413
    %502 = vmatprep.subr.bf16.mxu0 0
    %503 = vmatpush1.bf16.msra.mxu0 %v416
    %504 = vmatprep.subr.bf16.mxu0 0
    %505 = vmatpush1.bf16.msra.mxu0 %v419
    %506 = vmatprep.subr.bf16.mxu0 0
    %507 = vmatpush1.bf16.msra.mxu0 %v422
    %508 = vmatprep.subr.bf16.mxu0 0
    %509 = vmatpush1.bf16.msra.mxu0 %v425
    %510 = vmatprep.subr.bf16.mxu0 0
    %511 = vmatpush1.bf16.msra.mxu0 %v428
    %512 = vmatprep.subr.bf16.mxu0 0
    %513 = vmatpush1.bf16.msra.mxu0 0
    %514 = vmatprep.subr.bf16.mxu0 0
    %515 = vmatpush1.bf16.msra.mxu0 0
    %516 = vmatprep.subr.bf16.mxu0 0
    %517 = vmatpush1.bf16.msra.mxu0 0
    %518 = vmatprep.subr.bf16.mxu0 0
    %519 = vmatpush1.bf16.msra.mxu0 0
    %520 = vmatprep.subr.bf16.mxu0 0
    %521 = vmatpush1.bf16.msra.mxu0 0
    %522 = vmatprep.subr.bf16.mxu0 0
    %523 = vmatpush1.bf16.msra.mxu0 0
    %524 = vmatprep.subr.bf16.mxu0 0
    %525 = vmatpush1.bf16.msra.mxu0 0
    %526 = vmatprep.subr.bf16.mxu0 0
    %527 = vmatpush1.bf16.msra.mxu0 0
    %528 = vmatprep.mubr.bf16.mxu0 0
    %529 = vmatmul.mubr.bf16.gmra.mrb[0].mxu0 %v307
    %v530 = vpop.f32.mrb[0].mxu0
    %v531 = vadd.f32 %v321, %v530
    %v532 = vpop.f32.mrb[0].mxu0
    %v533 = vpop.f32.mrb[0].mxu0
    %v534 = vadd.f32 %v321, %v533
    %v535 = vpop.f32.mrb[0].mxu0
    %536 = vdwg.mxu0
    %v537 = vld [vmem:[#allocation7] sm:$0xff]
    %v538 = vld [vmem:[#allocation7 + $0x8] sm:$0xff]
    %v539 = vld [vmem:[#allocation11] sm:$0xf]
    %v540 = vld [vmem:[#allocation11 + $0x4] sm:$0xf]
    %v541 = vld [vmem:[#allocation11 + $0x8] sm:$0xf]
    %v542 = vld [vmem:[#allocation11 + $0xc] sm:$0xf]
    %v543 = vld [vmem:[#allocation11 + $0x10] sm:$0xf]
    %v544 = vld [vmem:[#allocation11 + $0x14] sm:$0xf]
    %v545 = vld [vmem:[#allocation11 + $0x18] sm:$0xf]
    %v546 = vld [vmem:[#allocation11 + $0x1c] sm:$0xf]
    %v547 = vld [vmem:[#allocation11 + $0x20] sm:$0xf]
    %v548 = vld [vmem:[#allocation11 + $0x24] sm:$0xf]
    %v549 = vld [vmem:[#allocation11 + $0x28] sm:$0xf]
    %v550 = vld [vmem:[#allocation11 + $0x2c] sm:$0xf]
    %v551 = vld [vmem:[#allocation11 + $0x30] sm:$0xf]
    %v552 = vld [vmem:[#allocation11 + $0x34] sm:$0xf]
    %v553 = vld [vmem:[#allocation11 + $0x38] sm:$0xf]
    %v554 = vld [vmem:[#allocation11 + $0x3c] sm:$0xf]
    %v555 = vpack.c.bf16 %v488, %v488
    %v556 = vpack.c.bf16 %v490, %v490
    %v557 = vpack.c.bf16 %v531, %v531
    %vm558 = vcmask 261120
    %v560 = vsel %vm558, %v555, 0
    %v563 = vsel %vm558, %v556, 0
    %565 = vmatprep.subr.bf16.mxu0 0
    %566 = vmatpush1.bf16.xpose.msra.mxu0 %v563
    %567 = vmatprep.subr.bf16.mxu0 0
    %568 = vmatpush1.bf16.xpose.msra.mxu0 0
    %569 = vmatprep.subr.bf16.mxu0 0
    %570 = vmatpush1.bf16.xpose.msra.mxu0 0
    %571 = vmatprep.subr.bf16.mxu0 0
    %572 = vmatpush1.bf16.xpose.msra.mxu0 0
    %573 = vmatprep.subr.bf16.mxu0 0
    %574 = vmatpush1.bf16.xpose.msra.mxu0 0
    %575 = vmatprep.subr.bf16.mxu0 0
    %576 = vmatpush1.bf16.xpose.msra.mxu0 0
    %577 = vmatprep.subr.bf16.mxu0 0
    %578 = vmatpush1.bf16.xpose.msra.mxu0 0
    %579 = vmatprep.subr.bf16.mxu0 0
    %580 = vmatpush1.bf16.xpose.msra.mxu0 0
    %581 = vmatprep.subr.bf16.mxu0 0
    %582 = vmatpush1.bf16.xpose.msra.mxu0 0
    %583 = vmatprep.subr.bf16.mxu0 0
    %584 = vmatpush1.bf16.xpose.msra.mxu0 0
    %585 = vmatprep.subr.bf16.mxu0 0
    %586 = vmatpush1.bf16.xpose.msra.mxu0 0
    %587 = vmatprep.subr.bf16.mxu0 0
    %588 = vmatpush1.bf16.xpose.msra.mxu0 0
    %589 = vmatprep.subr.bf16.mxu0 0
    %590 = vmatpush1.bf16.xpose.msra.mxu0 0
    %591 = vmatprep.subr.bf16.mxu0 0
    %592 = vmatpush1.bf16.xpose.msra.mxu0 0
    %593 = vmatprep.subr.bf16.mxu0 0
    %594 = vmatpush1.bf16.xpose.msra.mxu0 0
    %595 = vmatprep.subr.bf16.mxu0 0
    %596 = vmatpush1.bf16.xpose.msra.mxu0 0
    %597 = vmatprep.mubr.bf16.mxu0 0
    %598 = vmatmul.mubr.bf16.gmra.mrb[0].mxu0 %v560
    %v599 = vpop.f32.mrb[0].mxu0
    %v600 = vadd.f32 0.0, %v599
    %v601 = vpop.f32.mrb[0].mxu0
    %v602 = vpop.f32.mrb[0].mxu0
    %v603 = vpop.f32.mrb[0].mxu0
    %604 = vdwg.mxu0
    %v605 = vmul.f32 %v600, 0.17677669
    %v606 = vadd.f32 %v605, %v537
    %vm607 = vcmask 64512
    %v608 = vsel %vm607, %v606, -inf
    %609 = vmax.xlane.f32.xlu0 %v608
    %v610 = vpop.xlane.xlu0 %609
    %v611 = vsub.f32 %v606, %v610
    %v612 = vmul.f32 %v611, 1.442695
    %v613 = vpow.pop %v612
    %v614 = vsel %vm607, %v613, 0.0
    %615 = vadd.xlane.f32.xlu0 %v614
    %v616 = vpop.xlane.xlu0 %615
    %v617 = vrcp.pop %v616
    %v618 = vmul.f32 %v613, %v617
    %v619 = vpack.c.bf16 %v618, %v618
    %v621 = vsel %vm607, %v619, 0
    %vm623 = vcmask 1043456
    %v625 = vsel %vm623, %v557, 0
    %627 = vmatprep.subr.bf16.mxu0 0
    %628 = vmatpush1.bf16.msra.mxu0 %v625
    %629 = vmatprep.subr.bf16.mxu0 0
    %630 = vmatpush1.bf16.msra.mxu0 0
    %631 = vmatprep.subr.bf16.mxu0 0
    %632 = vmatpush1.bf16.msra.mxu0 0
    %633 = vmatprep.subr.bf16.mxu0 0
    %634 = vmatpush1.bf16.msra.mxu0 0
    %635 = vmatprep.subr.bf16.mxu0 0
    %636 = vmatpush1.bf16.msra.mxu0 0
    %637 = vmatprep.subr.bf16.mxu0 0
    %638 = vmatpush1.bf16.msra.mxu0 0
    %639 = vmatprep.subr.bf16.mxu0 0
    %640 = vmatpush1.bf16.msra.mxu0 0
    %641 = vmatprep.subr.bf16.mxu0 0
    %642 = vmatpush1.bf16.msra.mxu0 0
    %643 = vmatprep.subr.bf16.mxu0 0
    %644 = vmatpush1.bf16.msra.mxu0 0
    %645 = vmatprep.subr.bf16.mxu0 0
    %646 = vmatpush1.bf16.msra.mxu0 0
    %647 = vmatprep.subr.bf16.mxu0 0
    %648 = vmatpush1.bf16.msra.mxu0 0
    %649 = vmatprep.subr.bf16.mxu0 0
    %650 = vmatpush1.bf16.msra.mxu0 0
    %651 = vmatprep.subr.bf16.mxu0 0
    %652 = vmatpush1.bf16.msra.mxu0 0
    %653 = vmatprep.subr.bf16.mxu0 0
    %654 = vmatpush1.bf16.msra.mxu0 0
    %655 = vmatprep.subr.bf16.mxu0 0
    %656 = vmatpush1.bf16.msra.mxu0 0
    %657 = vmatprep.subr.bf16.mxu0 0
    %658 = vmatpush1.bf16.msra.mxu0 0
    %659 = vmatprep.mubr.bf16.mxu0 0
    %660 = vmatmul.mubr.bf16.gmra.mrb[0].mxu0 %v621
    %v661 = vpop.f32.mrb[0].mxu0
    %v662 = vadd.f32 0.0, %v661
    %v663 = vpop.f32.mrb[0].mxu0
    %v664 = vpop.f32.mrb[0].mxu0
    %v665 = vpop.f32.mrb[0].mxu0
    %666 = vdwg.mxu0
    %v667 = vpack.c.bf16 %v662, %v662
    %669 = vrot.lane.b32.xlu0 %v555, 96
    %v670 = vpop.permute.xlu0 %669
    %672 = vrot.lane.b32.xlu0 %v556, 96
    %v673 = vpop.permute.xlu0 %672
    %v675 = vsel %vm558, %v670, 0
    %v678 = vsel %vm558, %v673, 0
    %680 = vmatprep.subr.bf16.mxu0 0
    %681 = vmatpush1.bf16.xpose.msra.mxu0 %v678
    %682 = vmatprep.subr.bf16.mxu0 0
    %683 = vmatpush1.bf16.xpose.msra.mxu0 0
    %684 = vmatprep.subr.bf16.mxu0 0
    %685 = vmatpush1.bf16.xpose.msra.mxu0 0
    %686 = vmatprep.subr.bf16.mxu0 0
    %687 = vmatpush1.bf16.xpose.msra.mxu0 0
    %688 = vmatprep.subr.bf16.mxu0 0
    %689 = vmatpush1.bf16.xpose.msra.mxu0 0
    %690 = vmatprep.subr.bf16.mxu0 0
    %691 = vmatpush1.bf16.xpose.msra.mxu0 0
    %692 = vmatprep.subr.bf16.mxu0 0
    %693 = vmatpush1.bf16.xpose.msra.mxu0 0
    %694 = vmatprep.subr.bf16.mxu0 0
    %695 = vmatpush1.bf16.xpose.msra.mxu0 0
    %696 = vmatprep.subr.bf16.mxu0 0
    %697 = vmatpush1.bf16.xpose.msra.mxu0 0
    %698 = vmatprep.subr.bf16.mxu0 0
    %699 = vmatpush1.bf16.xpose.msra.mxu0 0
    %700 = vmatprep.subr.bf16.mxu0 0
    %701 = vmatpush1.bf16.xpose.msra.mxu0 0
    %702 = vmatprep.subr.bf16.mxu0 0
    %703 = vmatpush1.bf16.xpose.msra.mxu0 0
    %704 = vmatprep.subr.bf16.mxu0 0
    %705 = vmatpush1.bf16.xpose.msra.mxu0 0
    %706 = vmatprep.subr.bf16.mxu0 0
    %707 = vmatpush1.bf16.xpose.msra.mxu0 0
    %708 = vmatprep.subr.bf16.mxu0 0
    %709 = vmatpush1.bf16.xpose.msra.mxu0 0
    %710 = vmatprep.subr.bf16.mxu0 0
    %711 = vmatpush1.bf16.xpose.msra.mxu0 0
    %712 = vmatprep.mubr.bf16.mxu0 0
    %713 = vmatmul.mubr.bf16.gmra.mrb[0].mxu0 %v675
    %v714 = vpop.f32.mrb[0].mxu0
    %v715 = vadd.f32 0.0, %v714
    %v716 = vpop.f32.mrb[0].mxu0
    %v717 = vpop.f32.mrb[0].mxu0
    %v718 = vpop.f32.mrb[0].mxu0
    %719 = vdwg.mxu0
    %v720 = vmul.f32 %v715, 0.17677669
    %v721 = vadd.f32 %v720, %v537
    %v722 = vsel %vm607, %v721, -inf
    %723 = vmax.xlane.f32.xlu0 %v722
    %v724 = vpop.xlane.xlu0 %723
    %v725 = vsub.f32 %v721, %v724
    %v726 = vmul.f32 %v725, 1.442695
    %v727 = vpow.pop %v726
    %v728 = vsel %vm607, %v727, 0.0
    %729 = vadd.xlane.f32.xlu0 %v728
    %v730 = vpop.xlane.xlu0 %729
    %v731 = vrcp.pop %v730
    %v732 = vmul.f32 %v727, %v731
    %v733 = vpack.c.bf16 %v732, %v732
    %735 = vrot.lane.b32.xlu0 %v557, 96
    %v736 = vpop.permute.xlu0 %735
    %v738 = vsel %vm607, %v733, 0
    %v741 = vsel %vm623, %v736, 0
    %743 = vmatprep.subr.bf16.mxu0 0
    %744 = vmatpush1.bf16.msra.mxu0 %v741
    %745 = vmatprep.subr.bf16.mxu0 0
    %746 = vmatpush1.bf16.msra.mxu0 0
    %747 = vmatprep.subr.bf16.mxu0 0
    %748 = vmatpush1.bf16.msra.mxu0 0
    %749 = vmatprep.subr.bf16.mxu0 0
    %750 = vmatpush1.bf16.msra.mxu0 0
    %751 = vmatprep.subr.bf16.mxu0 0
    %752 = vmatpush1.bf16.msra.mxu0 0
    %753 = vmatprep.subr.bf16.mxu0 0
    %754 = vmatpush1.bf16.msra.mxu0 0
    %755 = vmatprep.subr.bf16.mxu0 0
    %756 = vmatpush1.bf16.msra.mxu0 0
    %757 = vmatprep.subr.bf16.mxu0 0
    %758 = vmatpush1.bf16.msra.mxu0 0
    %759 = vmatprep.subr.bf16.mxu0 0
    %760 = vmatpush1.bf16.msra.mxu0 0
    %761 = vmatprep.subr.bf16.mxu0 0
    %762 = vmatpush1.bf16.msra.mxu0 0
    %763 = vmatprep.subr.bf16.mxu0 0
    %764 = vmatpush1.bf16.msra.mxu0 0
    %765 = vmatprep.subr.bf16.mxu0 0
    %766 = vmatpush1.bf16.msra.mxu0 0
    %767 = vmatprep.subr.bf16.mxu0 0
    %768 = vmatpush1.bf16.msra.mxu0 0
    %769 = vmatprep.subr.bf16.mxu0 0
    %770 = vmatpush1.bf16.msra.mxu0 0
    %771 = vmatprep.subr.bf16.mxu0 0
    %772 = vmatpush1.bf16.msra.mxu0 0
    %773 = vmatprep.subr.bf16.mxu0 0
    %774 = vmatpush1.bf16.msra.mxu0 0
    %775 = vmatprep.mubr.bf16.mxu0 0
    %776 = vmatmul.mubr.bf16.gmra.mrb[0].mxu0 %v738
    %v777 = vpop.f32.mrb[0].mxu0
    %v778 = vadd.f32 0.0, %v777
    %v779 = vpop.f32.mrb[0].mxu0
    %v780 = vpop.f32.mrb[0].mxu0
    %v781 = vpop.f32.mrb[0].mxu0
    %782 = vdwg.mxu0
    %v783 = vpack.c.bf16 %v778, %v778
    %v788 = vunpack.c.l.b16 %v543
    %v789 = vunpack.c.l.b16 %v544
    %v790 = vunpack.c.l.b16 %v545
    %v791 = vunpack.c.l.b16 %v546
    %v792 = vpack.c.b16 %v789, %v788
    %v793 = vpack.c.b16 %v791, %v790
    %v797 = vsel %vm558, %v783, 0
    %799 = vmatprep.subr.bf16.mxu0 0
    %800 = vmatpush1.bf16.msra.mxu0 %v792
    %801 = vmatprep.subr.bf16.mxu0 0
    %802 = vmatpush1.bf16.msra.mxu0 %v793
    %803 = vmatprep.subr.bf16.mxu0 0
    %804 = vmatpush1.bf16.msra.mxu0 0
    %805 = vmatprep.subr.bf16.mxu0 0
    %806 = vmatpush1.bf16.msra.mxu0 0
    %807 = vmatprep.subr.bf16.mxu0 0
    %808 = vmatpush1.bf16.msra.mxu0 0
    %809 = vmatprep.subr.bf16.mxu0 0
    %810 = vmatpush1.bf16.msra.mxu0 0
    %811 = vmatprep.subr.bf16.mxu0 0
    %812 = vmatpush1.bf16.msra.mxu0 0
    %813 = vmatprep.subr.bf16.mxu0 0
    %814 = vmatpush1.bf16.msra.mxu0 0
    %815 = vmatprep.subr.bf16.mxu0 0
    %816 = vmatpush1.bf16.msra.mxu0 0
    %817 = vmatprep.subr.bf16.mxu0 0
    %818 = vmatpush1.bf16.msra.mxu0 0
    %819 = vmatprep.subr.bf16.mxu0 0
    %820 = vmatpush1.bf16.msra.mxu0 0
    %821 = vmatprep.subr.bf16.mxu0 0
    %822 = vmatpush1.bf16.msra.mxu0 0
    %823 = vmatprep.subr.bf16.mxu0 0
    %824 = vmatpush1.bf16.msra.mxu0 0
    %825 = vmatprep.subr.bf16.mxu0 0
    %826 = vmatpush1.bf16.msra.mxu0 0
    %827 = vmatprep.subr.bf16.mxu0 0
    %828 = vmatpush1.bf16.msra.mxu0 0
    %829 = vmatprep.subr.bf16.mxu0 0
    %830 = vmatpush1.bf16.msra.mxu0 0
    %831 = vmatprep.mubr.bf16.mxu0 0
    %832 = vmatmul.mubr.bf16.gmra.mrb[0].mxu0 %v797
    %v833 = vpop.f32.mrb[0].mxu0
    %v834 = vadd.f32 0.0, %v833
    %v835 = vpop.f32.mrb[0].mxu0
    %v836 = vpop.f32.mrb[0].mxu0
    %v837 = vpop.f32.mrb[0].mxu0
    %838 = vdwg.mxu0
    %v843 = vunpack.c.l.b16 %v539
    %v844 = vunpack.c.l.b16 %v540
    %v845 = vunpack.c.l.b16 %v541
    %v846 = vunpack.c.l.b16 %v542
    %v847 = vpack.c.b16 %v844, %v843
    %v848 = vpack.c.b16 %v846, %v845
    %v852 = vsel %vm558, %v667, 0
    %854 = vmatprep.subr.bf16.mxu0 0
    %855 = vmatpush1.bf16.msra.mxu0 %v847
    %856 = vmatprep.subr.bf16.mxu0 0
    %857 = vmatpush1.bf16.msra.mxu0 %v848
    %858 = vmatprep.subr.bf16.mxu0 0
    %859 = vmatpush1.bf16.msra.mxu0 0
    %860 = vmatprep.subr.bf16.mxu0 0
    %861 = vmatpush1.bf16.msra.mxu0 0
    %862 = vmatprep.subr.bf16.mxu0 0
    %863 = vmatpush1.bf16.msra.mxu0 0
    %864 = vmatprep.subr.bf16.mxu0 0
    %865 = vmatpush1.bf16.msra.mxu0 0
    %866 = vmatprep.subr.bf16.mxu0 0
    %867 = vmatpush1.bf16.msra.mxu0 0
    %868 = vmatprep.subr.bf16.mxu0 0
    %869 = vmatpush1.bf16.msra.mxu0 0
    %870 = vmatprep.subr.bf16.mxu0 0
    %871 = vmatpush1.bf16.msra.mxu0 0
    %872 = vmatprep.subr.bf16.mxu0 0
    %873 = vmatpush1.bf16.msra.mxu0 0
    %874 = vmatprep.subr.bf16.mxu0 0
    %875 = vmatpush1.bf16.msra.mxu0 0
    %876 = vmatprep.subr.bf16.mxu0 0
    %877 = vmatpush1.bf16.msra.mxu0 0
    %878 = vmatprep.subr.bf16.mxu0 0
    %879 = vmatpush1.bf16.msra.mxu0 0
    %880 = vmatprep.subr.bf16.mxu0 0
    %881 = vmatpush1.bf16.msra.mxu0 0
    %882 = vmatprep.subr.bf16.mxu0 0
    %883 = vmatpush1.bf16.msra.mxu0 0
    %884 = vmatprep.subr.bf16.mxu0 0
    %885 = vmatpush1.bf16.msra.mxu0 0
    %886 = vmatprep.mubr.bf16.mxu0 0
    %887 = vmatmul.mubr.bf16.gmra.mrb[0].mxu0 %v852
    %v888 = vpop.f32.mrb[0].mxu0
    %v889 = vadd.f32 %v834, %v888
    %v890 = vpop.f32.mrb[0].mxu0
    %v891 = vpop.f32.mrb[0].mxu0
    %v892 = vpop.f32.mrb[0].mxu0
    %893 = vdwg.mxu0
    %894 = vrot.lane.b32.xlu0 %v555, 64
    %v895 = vpop.permute.xlu0 %894
    %896 = vrot.lane.b32.xlu0 %v556, 64
    %v897 = vpop.permute.xlu0 %896
    %v899 = vsel %vm558, %v895, 0
    %v902 = vsel %vm558, %v897, 0
    %904 = vmatprep.subr.bf16.mxu0 0
    %905 = vmatpush1.bf16.xpose.msra.mxu0 %v902
    %906 = vmatprep.subr.bf16.mxu0 0
    %907 = vmatpush1.bf16.xpose.msra.mxu0 0
    %908 = vmatprep.subr.bf16.mxu0 0
    %909 = vmatpush1.bf16.xpose.msra.mxu0 0
    %910 = vmatprep.subr.bf16.mxu0 0
    %911 = vmatpush1.bf16.xpose.msra.mxu0 0
    %912 = vmatprep.subr.bf16.mxu0 0
    %913 = vmatpush1.bf16.xpose.msra.mxu0 0
    %914 = vmatprep.subr.bf16.mxu0 0
    %915 = vmatpush1.bf16.xpose.msra.mxu0 0
    %916 = vmatprep.subr.bf16.mxu0 0
    %917 = vmatpush1.bf16.xpose.msra.mxu0 0
    %918 = vmatprep.subr.bf16.mxu0 0
    %919 = vmatpush1.bf16.xpose.msra.mxu0 0
    %920 = vmatprep.subr.bf16.mxu0 0
    %921 = vmatpush1.bf16.xpose.msra.mxu0 0
    %922 = vmatprep.subr.bf16.mxu0 0
    %923 = vmatpush1.bf16.xpose.msra.mxu0 0
    %924 = vmatprep.subr.bf16.mxu0 0
    %925 = vmatpush1.bf16.xpose.msra.mxu0 0
    %926 = vmatprep.subr.bf16.mxu0 0
    %927 = vmatpush1.bf16.xpose.msra.mxu0 0
    %928 = vmatprep.subr.bf16.mxu0 0
    %929 = vmatpush1.bf16.xpose.msra.mxu0 0
    %930 = vmatprep.subr.bf16.mxu0 0
    %931 = vmatpush1.bf16.xpose.msra.mxu0 0
    %932 = vmatprep.subr.bf16.mxu0 0
    %933 = vmatpush1.bf16.xpose.msra.mxu0 0
    %934 = vmatprep.subr.bf16.mxu0 0
    %935 = vmatpush1.bf16.xpose.msra.mxu0 0
    %936 = vmatprep.mubr.bf16.mxu0 0
    %937 = vmatmul.mubr.bf16.gmra.mrb[0].mxu0 %v899
    %v938 = vpop.f32.mrb[0].mxu0
    %v939 = vadd.f32 0.0, %v938
    %v940 = vpop.f32.mrb[0].mxu0
    %v941 = vpop.f32.mrb[0].mxu0
    %v942 = vpop.f32.mrb[0].mxu0
    %943 = vdwg.mxu0
    %v944 = vmul.f32 %v939, 0.17677669
    %v945 = vadd.f32 %v944, %v537
    %v946 = vsel %vm607, %v945, -inf
    %947 = vmax.xlane.f32.xlu0 %v946
    %v948 = vpop.xlane.xlu0 %947
    %v949 = vsub.f32 %v945, %v948
    %v950 = vmul.f32 %v949, 1.442695
    %v951 = vpow.pop %v950
    %v952 = vsel %vm607, %v951, 0.0
    %953 = vadd.xlane.f32.xlu0 %v952
    %v954 = vpop.xlane.xlu0 %953
    %v955 = vrcp.pop %v954
    %v956 = vmul.f32 %v951, %v955
    %v957 = vpack.c.bf16 %v956, %v956
    %958 = vrot.lane.b32.xlu0 %v557, 64
    %v959 = vpop.permute.xlu0 %958
    %v961 = vsel %vm607, %v957, 0
    %v964 = vsel %vm623, %v959, 0
    %966 = vmatprep.subr.bf16.mxu0 0
    %967 = vmatpush1.bf16.msra.mxu0 %v964
    %968 = vmatprep.subr.bf16.mxu0 0
    %969 = vmatpush1.bf16.msra.mxu0 0
    %970 = vmatprep.subr.bf16.mxu0 0
    %971 = vmatpush1.bf16.msra.mxu0 0
    %972 = vmatprep.subr.bf16.mxu0 0
    %973 = vmatpush1.bf16.msra.mxu0 0
    %974 = vmatprep.subr.bf16.mxu0 0
    %975 = vmatpush1.bf16.msra.mxu0 0
    %976 = vmatprep.subr.bf16.mxu0 0
    %977 = vmatpush1.bf16.msra.mxu0 0
    %978 = vmatprep.subr.bf16.mxu0 0
    %979 = vmatpush1.bf16.msra.mxu0 0
    %980 = vmatprep.subr.bf16.mxu0 0
    %981 = vmatpush1.bf16.msra.mxu0 0
    %982 = vmatprep.subr.bf16.mxu0 0
    %983 = vmatpush1.bf16.msra.mxu0 0
    %984 = vmatprep.subr.bf16.mxu0 0
    %985 = vmatpush1.bf16.msra.mxu0 0
    %986 = vmatprep.subr.bf16.mxu0 0
    %987 = vmatpush1.bf16.msra.mxu0 0
    %988 = vmatprep.subr.bf16.mxu0 0
    %989 = vmatpush1.bf16.msra.mxu0 0
    %990 = vmatprep.subr.bf16.mxu0 0
    %991 = vmatpush1.bf16.msra.mxu0 0
    %992 = vmatprep.subr.bf16.mxu0 0
    %993 = vmatpush1.bf16.msra.mxu0 0
    %994 = vmatprep.subr.bf16.mxu0 0
    %995 = vmatpush1.bf16.msra.mxu0 0
    %996 = vmatprep.subr.bf16.mxu0 0
    %997 = vmatpush1.bf16.msra.mxu0 0
    %998 = vmatprep.mubr.bf16.mxu0 0
    %999 = vmatmul.mubr.bf16.gmra.mrb[0].mxu0 %v961
    %v1000 = vpop.f32.mrb[0].mxu0
    %v1001 = vadd.f32 0.0, %v1000
    %v1002 = vpop.f32.mrb[0].mxu0
    %v1003 = vpop.f32.mrb[0].mxu0
    %v1004 = vpop.f32.mrb[0].mxu0
    %1005 = vdwg.mxu0
    %v1006 = vpack.c.bf16 %v1001, %v1001
    %v1011 = vunpack.c.l.b16 %v547
    %v1012 = vunpack.c.l.b16 %v548
    %v1013 = vunpack.c.l.b16 %v549
    %v1014 = vunpack.c.l.b16 %v550
    %v1015 = vpack.c.b16 %v1012, %v1011
    %v1016 = vpack.c.b16 %v1014, %v1013
    %v1020 = vsel %vm558, %v1006, 0
    %1022 = vmatprep.subr.bf16.mxu0 0
    %1023 = vmatpush1.bf16.msra.mxu0 %v1015
    %1024 = vmatprep.subr.bf16.mxu0 0
    %1025 = vmatpush1.bf16.msra.mxu0 %v1016
    %1026 = vmatprep.subr.bf16.mxu0 0
    %1027 = vmatpush1.bf16.msra.mxu0 0
    %1028 = vmatprep.subr.bf16.mxu0 0
    %1029 = vmatpush1.bf16.msra.mxu0 0
    %1030 = vmatprep.subr.bf16.mxu0 0
    %1031 = vmatpush1.bf16.msra.mxu0 0
    %1032 = vmatprep.subr.bf16.mxu0 0
    %1033 = vmatpush1.bf16.msra.mxu0 0
    %1034 = vmatprep.subr.bf16.mxu0 0
    %1035 = vmatpush1.bf16.msra.mxu0 0
    %1036 = vmatprep.subr.bf16.mxu0 0
    %1037 = vmatpush1.bf16.msra.mxu0 0
    %1038 = vmatprep.subr.bf16.mxu0 0
    %1039 = vmatpush1.bf16.msra.mxu0 0
    %1040 = vmatprep.subr.bf16.mxu0 0
    %1041 = vmatpush1.bf16.msra.mxu0 0
    %1042 = vmatprep.subr.bf16.mxu0 0
    %1043 = vmatpush1.bf16.msra.mxu0 0
    %1044 = vmatprep.subr.bf16.mxu0 0
    %1045 = vmatpush1.bf16.msra.mxu0 0
    %1046 = vmatprep.subr.bf16.mxu0 0
    %1047 = vmatpush1.bf16.msra.mxu0 0
    %1048 = vmatprep.subr.bf16.mxu0 0
    %1049 = vmatpush1.bf16.msra.mxu0 0
    %1050 = vmatprep.subr.bf16.mxu0 0
    %1051 = vmatpush1.bf16.msra.mxu0 0
    %1052 = vmatprep.subr.bf16.mxu0 0
    %1053 = vmatpush1.bf16.msra.mxu0 0
    %1054 = vmatprep.mubr.bf16.mxu0 0
    %1055 = vmatmul.mubr.bf16.gmra.mrb[0].mxu0 %v1020
    %v1056 = vpop.f32.mrb[0].mxu0
    %v1057 = vadd.f32 0.0, %v1056
    %v1058 = vpop.f32.mrb[0].mxu0
    %v1059 = vpop.f32.mrb[0].mxu0
    %v1060 = vpop.f32.mrb[0].mxu0
    %1061 = vdwg.mxu0
    %v1062 = vadd.f32 %v889, %v1057
    %1063 = vrot.lane.b32.xlu0 %v555, 32
    %v1064 = vpop.permute.xlu0 %1063
    %1065 = vrot.lane.b32.xlu0 %v556, 32
    %v1066 = vpop.permute.xlu0 %1065
    %v1068 = vsel %vm558, %v1064, 0
    %v1071 = vsel %vm558, %v1066, 0
    %1073 = vmatprep.subr.bf16.mxu0 0
    %1074 = vmatpush1.bf16.xpose.msra.mxu0 %v1071
    %1075 = vmatprep.subr.bf16.mxu0 0
    %1076 = vmatpush1.bf16.xpose.msra.mxu0 0
    %1077 = vmatprep.subr.bf16.mxu0 0
    %1078 = vmatpush1.bf16.xpose.msra.mxu0 0
    %1079 = vmatprep.subr.bf16.mxu0 0
    %1080 = vmatpush1.bf16.xpose.msra.mxu0 0
    %1081 = vmatprep.subr.bf16.mxu0 0
    %1082 = vmatpush1.bf16.xpose.msra.mxu0 0
    %1083 = vmatprep.subr.bf16.mxu0 0
    %1084 = vmatpush1.bf16.xpose.msra.mxu0 0
    %1085 = vmatprep.subr.bf16.mxu0 0
    %1086 = vmatpush1.bf16.xpose.msra.mxu0 0
    %1087 = vmatprep.subr.bf16.mxu0 0
    %1088 = vmatpush1.bf16.xpose.msra.mxu0 0
    %1089 = vmatprep.subr.bf16.mxu0 0
    %1090 = vmatpush1.bf16.xpose.msra.mxu0 0
    %1091 = vmatprep.subr.bf16.mxu0 0
    %1092 = vmatpush1.bf16.xpose.msra.mxu0 0
    %1093 = vmatprep.subr.bf16.mxu0 0
    %1094 = vmatpush1.bf16.xpose.msra.mxu0 0
    %1095 = vmatprep.subr.bf16.mxu0 0
    %1096 = vmatpush1.bf16.xpose.msra.mxu0 0
    %1097 = vmatprep.subr.bf16.mxu0 0
    %1098 = vmatpush1.bf16.xpose.msra.mxu0 0
    %1099 = vmatprep.subr.bf16.mxu0 0
    %1100 = vmatpush1.bf16.xpose.msra.mxu0 0
    %1101 = vmatprep.subr.bf16.mxu0 0
    %1102 = vmatpush1.bf16.xpose.msra.mxu0 0
    %1103 = vmatprep.subr.bf16.mxu0 0
    %1104 = vmatpush1.bf16.xpose.msra.mxu0 0
    %1105 = vmatprep.mubr.bf16.mxu0 0
    %1106 = vmatmul.mubr.bf16.gmra.mrb[0].mxu0 %v1068
    %v1107 = vpop.f32.mrb[0].mxu0
    %v1108 = vadd.f32 0.0, %v1107
    %v1109 = vpop.f32.mrb[0].mxu0
    %v1110 = vpop.f32.mrb[0].mxu0
    %v1111 = vpop.f32.mrb[0].mxu0
    %1112 = vdwg.mxu0
    %v1113 = vmul.f32 %v1108, 0.17677669
    %v1114 = vadd.f32 %v1113, %v537
    %v1115 = vsel %vm607, %v1114, -inf
    %1116 = vmax.xlane.f32.xlu0 %v1115
    %v1117 = vpop.xlane.xlu0 %1116
    %v1118 = vsub.f32 %v1114, %v1117
    %v1119 = vmul.f32 %v1118, 1.442695
    %v1120 = vpow.pop %v1119
    %v1121 = vsel %vm607, %v1120, 0.0
    %1122 = vadd.xlane.f32.xlu0 %v1121
    %v1123 = vpop.xlane.xlu0 %1122
    %v1124 = vrcp.pop %v1123
    %v1125 = vmul.f32 %v1120, %v1124
    %v1126 = vpack.c.bf16 %v1125, %v1125
    %1127 = vrot.lane.b32.xlu0 %v557, 32
    %v1128 = vpop.permute.xlu0 %1127
    %v1130 = vsel %vm607, %v1126, 0
    %v1133 = vsel %vm623, %v1128, 0
    %1135 = vmatprep.subr.bf16.mxu0 0
    %1136 = vmatpush1.bf16.msra.mxu0 %v1133
    %1137 = vmatprep.subr.bf16.mxu0 0
    %1138 = vmatpush1.bf16.msra.mxu0 0
    %1139 = vmatprep.subr.bf16.mxu0 0
    %1140 = vmatpush1.bf16.msra.mxu0 0
    %1141 = vmatprep.subr.bf16.mxu0 0
    %1142 = vmatpush1.bf16.msra.mxu0 0
    %1143 = vmatprep.subr.bf16.mxu0 0
    %1144 = vmatpush1.bf16.msra.mxu0 0
    %1145 = vmatprep.subr.bf16.mxu0 0
    %1146 = vmatpush1.bf16.msra.mxu0 0
    %1147 = vmatprep.subr.bf16.mxu0 0
    %1148 = vmatpush1.bf16.msra.mxu0 0
    %1149 = vmatprep.subr.bf16.mxu0 0
    %1150 = vmatpush1.bf16.msra.mxu0 0
    %1151 = vmatprep.subr.bf16.mxu0 0
    %1152 = vmatpush1.bf16.msra.mxu0 0
    %1153 = vmatprep.subr.bf16.mxu0 0
    %1154 = vmatpush1.bf16.msra.mxu0 0
    %1155 = vmatprep.subr.bf16.mxu0 0
    %1156 = vmatpush1.bf16.msra.mxu0 0
    %1157 = vmatprep.subr.bf16.mxu0 0
    %1158 = vmatpush1.bf16.msra.mxu0 0
    %1159 = vmatprep.subr.bf16.mxu0 0
    %1160 = vmatpush1.bf16.msra.mxu0 0
    %1161 = vmatprep.subr.bf16.mxu0 0
    %1162 = vmatpush1.bf16.msra.mxu0 0
    %1163 = vmatprep.subr.bf16.mxu0 0
    %1164 = vmatpush1.bf16.msra.mxu0 0
    %1165 = vmatprep.subr.bf16.mxu0 0
    %1166 = vmatpush1.bf16.msra.mxu0 0
    %1167 = vmatprep.mubr.bf16.mxu0 0
    %1168 = vmatmul.mubr.bf16.gmra.mrb[0].mxu0 %v1130
    %v1169 = vpop.f32.mrb[0].mxu0
    %v1170 = vadd.f32 0.0, %v1169
    %v1171 = vpop.f32.mrb[0].mxu0
    %v1172 = vpop.f32.mrb[0].mxu0
    %v1173 = vpop.f32.mrb[0].mxu0
    %1174 = vdwg.mxu0
    %v1175 = vpack.c.bf16 %v1170, %v1170
    %v1180 = vunpack.c.l.b16 %v551
    %v1181 = vunpack.c.l.b16 %v552
    %v1182 = vunpack.c.l.b16 %v553
    %v1183 = vunpack.c.l.b16 %v554
    %v1184 = vpack.c.b16 %v1181, %v1180
    %v1185 = vpack.c.b16 %v1183, %v1182
    %v1189 = vsel %vm558, %v1175, 0
    %1191 = vmatprep.subr.bf16.mxu0 0
    %1192 = vmatpush1.bf16.msra.mxu0 %v1184
    %1193 = vmatprep.subr.bf16.mxu0 0
    %1194 = vmatpush1.bf16.msra.mxu0 %v1185
    %1195 = vmatprep.subr.bf16.mxu0 0
    %1196 = vmatpush1.bf16.msra.mxu0 0
    %1197 = vmatprep.subr.bf16.mxu0 0
    %1198 = vmatpush1.bf16.msra.mxu0 0
    %1199 = vmatprep.subr.bf16.mxu0 0
    %1200 = vmatpush1.bf16.msra.mxu0 0
    %1201 = vmatprep.subr.bf16.mxu0 0
    %1202 = vmatpush1.bf16.msra.mxu0 0
    %1203 = vmatprep.subr.bf16.mxu0 0
    %1204 = vmatpush1.bf16.msra.mxu0 0
    %1205 = vmatprep.subr.bf16.mxu0 0
    %1206 = vmatpush1.bf16.msra.mxu0 0
    %1207 = vmatprep.subr.bf16.mxu0 0
    %1208 = vmatpush1.bf16.msra.mxu0 0
    %1209 = vmatprep.subr.bf16.mxu0 0
    %1210 = vmatpush1.bf16.msra.mxu0 0
    %1211 = vmatprep.subr.bf16.mxu0 0
    %1212 = vmatpush1.bf16.msra.mxu0 0
    %1213 = vmatprep.subr.bf16.mxu0 0
    %1214 = vmatpush1.bf16.msra.mxu0 0
    %1215 = vmatprep.subr.bf16.mxu0 0
    %1216 = vmatpush1.bf16.msra.mxu0 0
    %1217 = vmatprep.subr.bf16.mxu0 0
    %1218 = vmatpush1.bf16.msra.mxu0 0
    %1219 = vmatprep.subr.bf16.mxu0 0
    %1220 = vmatpush1.bf16.msra.mxu0 0
    %1221 = vmatprep.subr.bf16.mxu0 0
    %1222 = vmatpush1.bf16.msra.mxu0 0
    %1223 = vmatprep.mubr.bf16.mxu0 0
    %1224 = vmatmul.mubr.bf16.gmra.mrb[0].mxu0 %v1189
    %v1225 = vpop.f32.mrb[0].mxu0
    %v1226 = vadd.f32 0.0, %v1225
    %v1227 = vpop.f32.mrb[0].mxu0
    %v1228 = vpop.f32.mrb[0].mxu0
    %v1229 = vpop.f32.mrb[0].mxu0
    %1230 = vdwg.mxu0
    %v1231 = vadd.f32 %v1062, %v1226
    %v1232 = vpack.c.bf16 %v492, %v492
    %v1233 = vpack.c.bf16 %v494, %v494
    %v1234 = vpack.c.bf16 %v534, %v534
    %v1236 = vsel %vm558, %v1232, 0
    %v1239 = vsel %vm558, %v1233, 0
    %1241 = vmatprep.subr.bf16.mxu0 0
    %1242 = vmatpush1.bf16.xpose.msra.mxu0 %v1239
    %1243 = vmatprep.subr.bf16.mxu0 0
    %1244 = vmatpush1.bf16.xpose.msra.mxu0 0
    %1245 = vmatprep.subr.bf16.mxu0 0
    %1246 = vmatpush1.bf16.xpose.msra.mxu0 0
    %1247 = vmatprep.subr.bf16.mxu0 0
    %1248 = vmatpush1.bf16.xpose.msra.mxu0 0
    %1249 = vmatprep.subr.bf16.mxu0 0
    %1250 = vmatpush1.bf16.xpose.msra.mxu0 0
    %1251 = vmatprep.subr.bf16.mxu0 0
    %1252 = vmatpush1.bf16.xpose.msra.mxu0 0
    %1253 = vmatprep.subr.bf16.mxu0 0
    %1254 = vmatpush1.bf16.xpose.msra.mxu0 0
    %1255 = vmatprep.subr.bf16.mxu0 0
    %1256 = vmatpush1.bf16.xpose.msra.mxu0 0
    %1257 = vmatprep.subr.bf16.mxu0 0
    %1258 = vmatpush1.bf16.xpose.msra.mxu0 0
    %1259 = vmatprep.subr.bf16.mxu0 0
    %1260 = vmatpush1.bf16.xpose.msra.mxu0 0
    %1261 = vmatprep.subr.bf16.mxu0 0
    %1262 = vmatpush1.bf16.xpose.msra.mxu0 0
    %1263 = vmatprep.subr.bf16.mxu0 0
    %1264 = vmatpush1.bf16.xpose.msra.mxu0 0
    %1265 = vmatprep.subr.bf16.mxu0 0
    %1266 = vmatpush1.bf16.xpose.msra.mxu0 0
    %1267 = vmatprep.subr.bf16.mxu0 0
    %1268 = vmatpush1.bf16.xpose.msra.mxu0 0
    %1269 = vmatprep.subr.bf16.mxu0 0
    %1270 = vmatpush1.bf16.xpose.msra.mxu0 0
    %1271 = vmatprep.subr.bf16.mxu0 0
    %1272 = vmatpush1.bf16.xpose.msra.mxu0 0
    %1273 = vmatprep.mubr.bf16.mxu0 0
    %1274 = vmatmul.mubr.bf16.gmra.mrb[0].mxu0 %v1236
    %v1275 = vpop.f32.mrb[0].mxu0
    %v1276 = vadd.f32 0.0, %v1275
    %v1277 = vpop.f32.mrb[0].mxu0
    %v1278 = vpop.f32.mrb[0].mxu0
    %v1279 = vpop.f32.mrb[0].mxu0
    %1280 = vdwg.mxu0
    %v1281 = vmul.f32 %v1276, 0.17677669
    %v1282 = vadd.f32 %v1281, %v538
    %v1283 = vsel %vm607, %v1282, -inf
    %1284 = vmax.xlane.f32.xlu0 %v1283
    %v1285 = vpop.xlane.xlu0 %1284
    %v1286 = vsub.f32 %v1282, %v1285
    %v1287 = vmul.f32 %v1286, 1.442695
    %v1288 = vpow.pop %v1287
    %v1289 = vsel %vm607, %v1288, 0.0
    %1290 = vadd.xlane.f32.xlu0 %v1289
    %v1291 = vpop.xlane.xlu0 %1290
    %v1292 = vrcp.pop %v1291
    %v1293 = vmul.f32 %v1288, %v1292
    %v1294 = vpack.c.bf16 %v1293, %v1293
    %v1296 = vsel %vm607, %v1294, 0
    %v1299 = vsel %vm623, %v1234, 0
    %1301 = vmatprep.subr.bf16.mxu0 0
    %1302 = vmatpush1.bf16.msra.mxu0 %v1299
    %1303 = vmatprep.subr.bf16.mxu0 0
    %1304 = vmatpush1.bf16.msra.mxu0 0
    %1305 = vmatprep.subr.bf16.mxu0 0
    %1306 = vmatpush1.bf16.msra.mxu0 0
    %1307 = vmatprep.subr.bf16.mxu0 0
    %1308 = vmatpush1.bf16.msra.mxu0 0
    %1309 = vmatprep.subr.bf16.mxu0 0
    %1310 = vmatpush1.bf16.msra.mxu0 0
    %1311 = vmatprep.subr.bf16.mxu0 0
    %1312 = vmatpush1.bf16.msra.mxu0 0
    %1313 = vmatprep.subr.bf16.mxu0 0
    %1314 = vmatpush1.bf16.msra.mxu0 0
    %1315 = vmatprep.subr.bf16.mxu0 0
    %1316 = vmatpush1.bf16.msra.mxu0 0
    %1317 = vmatprep.subr.bf16.mxu0 0
    %1318 = vmatpush1.bf16.msra.mxu0 0
    %1319 = vmatprep.subr.bf16.mxu0 0
    %1320 = vmatpush1.bf16.msra.mxu0 0
    %1321 = vmatprep.subr.bf16.mxu0 0
    %1322 = vmatpush1.bf16.msra.mxu0 0
    %1323 = vmatprep.subr.bf16.mxu0 0
    %1324 = vmatpush1.bf16.msra.mxu0 0
    %1325 = vmatprep.subr.bf16.mxu0 0
    %1326 = vmatpush1.bf16.msra.mxu0 0
    %1327 = vmatprep.subr.bf16.mxu0 0
    %1328 = vmatpush1.bf16.msra.mxu0 0
    %1329 = vmatprep.subr.bf16.mxu0 0
    %1330 = vmatpush1.bf16.msra.mxu0 0
    %1331 = vmatprep.subr.bf16.mxu0 0
    %1332 = vmatpush1.bf16.msra.mxu0 0
    %1333 = vmatprep.mubr.bf16.mxu0 0
    %1334 = vmatmul.mubr.bf16.gmra.mrb[0].mxu0 %v1296
    %v1335 = vpop.f32.mrb[0].mxu0
    %v1336 = vadd.f32 0.0, %v1335
    %v1337 = vpop.f32.mrb[0].mxu0
    %v1338 = vpop.f32.mrb[0].mxu0
    %v1339 = vpop.f32.mrb[0].mxu0
    %1340 = vdwg.mxu0
    %v1341 = vpack.c.bf16 %v1336, %v1336
    %1343 = vrot.lane.b32.xlu0 %v1232, 96
    %v1344 = vpop.permute.xlu0 %1343
    %1346 = vrot.lane.b32.xlu0 %v1233, 96
    %v1347 = vpop.permute.xlu0 %1346
    %v1349 = vsel %vm558, %v1344, 0
    %v1352 = vsel %vm558, %v1347, 0
    %1354 = vmatprep.subr.bf16.mxu0 0
    %1355 = vmatpush1.bf16.xpose.msra.mxu0 %v1352
    %1356 = vmatprep.subr.bf16.mxu0 0
    %1357 = vmatpush1.bf16.xpose.msra.mxu0 0
    %1358 = vmatprep.subr.bf16.mxu0 0
    %1359 = vmatpush1.bf16.xpose.msra.mxu0 0
    %1360 = vmatprep.subr.bf16.mxu0 0
    %1361 = vmatpush1.bf16.xpose.msra.mxu0 0
    %1362 = vmatprep.subr.bf16.mxu0 0
    %1363 = vmatpush1.bf16.xpose.msra.mxu0 0
    %1364 = vmatprep.subr.bf16.mxu0 0
    %1365 = vmatpush1.bf16.xpose.msra.mxu0 0
    %1366 = vmatprep.subr.bf16.mxu0 0
    %1367 = vmatpush1.bf16.xpose.msra.mxu0 0
    %1368 = vmatprep.subr.bf16.mxu0 0
    %1369 = vmatpush1.bf16.xpose.msra.mxu0 0
    %1370 = vmatprep.subr.bf16.mxu0 0
    %1371 = vmatpush1.bf16.xpose.msra.mxu0 0
    %1372 = vmatprep.subr.bf16.mxu0 0
    %1373 = vmatpush1.bf16.xpose.msra.mxu0 0
    %1374 = vmatprep.subr.bf16.mxu0 0
    %1375 = vmatpush1.bf16.xpose.msra.mxu0 0
    %1376 = vmatprep.subr.bf16.mxu0 0
    %1377 = vmatpush1.bf16.xpose.msra.mxu0 0
    %1378 = vmatprep.subr.bf16.mxu0 0
    %1379 = vmatpush1.bf16.xpose.msra.mxu0 0
    %1380 = vmatprep.subr.bf16.mxu0 0
    %1381 = vmatpush1.bf16.xpose.msra.mxu0 0
    %1382 = vmatprep.subr.bf16.mxu0 0
    %1383 = vmatpush1.bf16.xpose.msra.mxu0 0
    %1384 = vmatprep.subr.bf16.mxu0 0
    %1385 = vmatpush1.bf16.xpose.msra.mxu0 0
    %1386 = vmatprep.mubr.bf16.mxu0 0
    %1387 = vmatmul.mubr.bf16.gmra.mrb[0].mxu0 %v1349
    %v1388 = vpop.f32.mrb[0].mxu0
    %v1389 = vadd.f32 0.0, %v1388
    %v1390 = vpop.f32.mrb[0].mxu0
    %v1391 = vpop.f32.mrb[0].mxu0
    %v1392 = vpop.f32.mrb[0].mxu0
    %1393 = vdwg.mxu0
    %v1394 = vmul.f32 %v1389, 0.17677669
    %v1395 = vadd.f32 %v1394, %v538
    %v1396 = vsel %vm607, %v1395, -inf
    %1397 = vmax.xlane.f32.xlu0 %v1396
    %v1398 = vpop.xlane.xlu0 %1397
    %v1399 = vsub.f32 %v1395, %v1398
    %v1400 = vmul.f32 %v1399, 1.442695
    %v1401 = vpow.pop %v1400
    %v1402 = vsel %vm607, %v1401, 0.0
    %1403 = vadd.xlane.f32.xlu0 %v1402
    %v1404 = vpop.xlane.xlu0 %1403
    %v1405 = vrcp.pop %v1404
    %v1406 = vmul.f32 %v1401, %v1405
    %v1407 = vpack.c.bf16 %v1406, %v1406
    %1409 = vrot.lane.b32.xlu0 %v1234, 96
    %v1410 = vpop.permute.xlu0 %1409
    %v1412 = vsel %vm607, %v1407, 0
    %v1415 = vsel %vm623, %v1410, 0
    %1417 = vmatprep.subr.bf16.mxu0 0
    %1418 = vmatpush1.bf16.msra.mxu0 %v1415
    %1419 = vmatprep.subr.bf16.mxu0 0
    %1420 = vmatpush1.bf16.msra.mxu0 0
    %1421 = vmatprep.subr.bf16.mxu0 0
    %1422 = vmatpush1.bf16.msra.mxu0 0
    %1423 = vmatprep.subr.bf16.mxu0 0
    %1424 = vmatpush1.bf16.msra.mxu0 0
    %1425 = vmatprep.subr.bf16.mxu0 0
    %1426 = vmatpush1.bf16.msra.mxu0 0
    %1427 = vmatprep.subr.bf16.mxu0 0
    %1428 = vmatpush1.bf16.msra.mxu0 0
    %1429 = vmatprep.subr.bf16.mxu0 0
    %1430 = vmatpush1.bf16.msra.mxu0 0
    %1431 = vmatprep.subr.bf16.mxu0 0
    %1432 = vmatpush1.bf16.msra.mxu0 0
    %1433 = vmatprep.subr.bf16.mxu0 0
    %1434 = vmatpush1.bf16.msra.mxu0 0
    %1435 = vmatprep.subr.bf16.mxu0 0
    %1436 = vmatpush1.bf16.msra.mxu0 0
    %1437 = vmatprep.subr.bf16.mxu0 0
    %1438 = vmatpush1.bf16.msra.mxu0 0
    %1439 = vmatprep.subr.bf16.mxu0 0
    %1440 = vmatpush1.bf16.msra.mxu0 0
    %1441 = vmatprep.subr.bf16.mxu0 0
    %1442 = vmatpush1.bf16.msra.mxu0 0
    %1443 = vmatprep.subr.bf16.mxu0 0
    %1444 = vmatpush1.bf16.msra.mxu0 0
    %1445 = vmatprep.subr.bf16.mxu0 0
    %1446 = vmatpush1.bf16.msra.mxu0 0
    %1447 = vmatprep.subr.bf16.mxu0 0
    %1448 = vmatpush1.bf16.msra.mxu0 0
    %1449 = vmatprep.mubr.bf16.mxu0 0
    %1450 = vmatmul.mubr.bf16.gmra.mrb[0].mxu0 %v1412
    %v1451 = vpop.f32.mrb[0].mxu0
    %v1452 = vadd.f32 0.0, %v1451
    %v1453 = vpop.f32.mrb[0].mxu0
    %v1454 = vpop.f32.mrb[0].mxu0
    %v1455 = vpop.f32.mrb[0].mxu0
    %1456 = vdwg.mxu0
    %v1457 = vpack.c.bf16 %v1452, %v1452
    %v1459 = vsel %vm558, %v1457, 0
    %1461 = vmatprep.subr.bf16.mxu0 0
    %1462 = vmatpush1.bf16.msra.mxu0 %v792
    %1463 = vmatprep.subr.bf16.mxu0 0
    %1464 = vmatpush1.bf16.msra.mxu0 %v793
    %1465 = vmatprep.subr.bf16.mxu0 0
    %1466 = vmatpush1.bf16.msra.mxu0 0
    %1467 = vmatprep.subr.bf16.mxu0 0
    %1468 = vmatpush1.bf16.msra.mxu0 0
    %1469 = vmatprep.subr.bf16.mxu0 0
    %1470 = vmatpush1.bf16.msra.mxu0 0
    %1471 = vmatprep.subr.bf16.mxu0 0
    %1472 = vmatpush1.bf16.msra.mxu0 0
    %1473 = vmatprep.subr.bf16.mxu0 0
    %1474 = vmatpush1.bf16.msra.mxu0 0
    %1475 = vmatprep.subr.bf16.mxu0 0
    %1476 = vmatpush1.bf16.msra.mxu0 0
    %1477 = vmatprep.subr.bf16.mxu0 0
    %1478 = vmatpush1.bf16.msra.mxu0 0
    %1479 = vmatprep.subr.bf16.mxu0 0
    %1480 = vmatpush1.bf16.msra.mxu0 0
    %1481 = vmatprep.subr.bf16.mxu0 0
    %1482 = vmatpush1.bf16.msra.mxu0 0
    %1483 = vmatprep.subr.bf16.mxu0 0
    %1484 = vmatpush1.bf16.msra.mxu0 0
    %1485 = vmatprep.subr.bf16.mxu0 0
    %1486 = vmatpush1.bf16.msra.mxu0 0
    %1487 = vmatprep.subr.bf16.mxu0 0
    %1488 = vmatpush1.bf16.msra.mxu0 0
    %1489 = vmatprep.subr.bf16.mxu0 0
    %1490 = vmatpush1.bf16.msra.mxu0 0
    %1491 = vmatprep.subr.bf16.mxu0 0
    %1492 = vmatpush1.bf16.msra.mxu0 0
    %1493 = vmatprep.mubr.bf16.mxu0 0
    %1494 = vmatmul.mubr.bf16.gmra.mrb[0].mxu0 %v1459
    %v1495 = vpop.f32.mrb[0].mxu0
    %v1496 = vadd.f32 0.0, %v1495
    %v1497 = vpop.f32.mrb[0].mxu0
    %v1498 = vpop.f32.mrb[0].mxu0
    %v1499 = vpop.f32.mrb[0].mxu0
    %1500 = vdwg.mxu0
    %v1502 = vsel %vm558, %v1341, 0
    %1504 = vmatprep.subr.bf16.mxu0 0
    %1505 = vmatpush1.bf16.msra.mxu0 %v847
    %1506 = vmatprep.subr.bf16.mxu0 0
    %1507 = vmatpush1.bf16.msra.mxu0 %v848
    %1508 = vmatprep.subr.bf16.mxu0 0
    %1509 = vmatpush1.bf16.msra.mxu0 0
    %1510 = vmatprep.subr.bf16.mxu0 0
    %1511 = vmatpush1.bf16.msra.mxu0 0
    %1512 = vmatprep.subr.bf16.mxu0 0
    %1513 = vmatpush1.bf16.msra.mxu0 0
    %1514 = vmatprep.subr.bf16.mxu0 0
    %1515 = vmatpush1.bf16.msra.mxu0 0
    %1516 = vmatprep.subr.bf16.mxu0 0
    %1517 = vmatpush1.bf16.msra.mxu0 0
    %1518 = vmatprep.subr.bf16.mxu0 0
    %1519 = vmatpush1.bf16.msra.mxu0 0
    %1520 = vmatprep.subr.bf16.mxu0 0
    %1521 = vmatpush1.bf16.msra.mxu0 0
    %1522 = vmatprep.subr.bf16.mxu0 0
    %1523 = vmatpush1.bf16.msra.mxu0 0
    %1524 = vmatprep.subr.bf16.mxu0 0
    %1525 = vmatpush1.bf16.msra.mxu0 0
    %1526 = vmatprep.subr.bf16.mxu0 0
    %1527 = vmatpush1.bf16.msra.mxu0 0
    %1528 = vmatprep.subr.bf16.mxu0 0
    %1529 = vmatpush1.bf16.msra.mxu0 0
    %1530 = vmatprep.subr.bf16.mxu0 0
    %1531 = vmatpush1.bf16.msra.mxu0 0
    %1532 = vmatprep.subr.bf16.mxu0 0
    %1533 = vmatpush1.bf16.msra.mxu0 0
    %1534 = vmatprep.subr.bf16.mxu0 0
    %1535 = vmatpush1.bf16.msra.mxu0 0
    %1536 = vmatprep.mubr.bf16.mxu0 0
    %1537 = vmatmul.mubr.bf16.gmra.mrb[0].mxu0 %v1502
    %v1538 = vpop.f32.mrb[0].mxu0
    %v1539 = vadd.f32 %v1496, %v1538
    %v1540 = vpop.f32.mrb[0].mxu0
    %v1541 = vpop.f32.mrb[0].mxu0
    %v1542 = vpop.f32.mrb[0].mxu0
    %1543 = vdwg.mxu0
    %1544 = vrot.lane.b32.xlu0 %v1232, 64
    %v1545 = vpop.permute.xlu0 %1544
    %1546 = vrot.lane.b32.xlu0 %v1233, 64
    %v1547 = vpop.permute.xlu0 %1546
    %v1549 = vsel %vm558, %v1545, 0
    %v1552 = vsel %vm558, %v1547, 0
    %1554 = vmatprep.subr.bf16.mxu0 0
    %1555 = vmatpush1.bf16.xpose.msra.mxu0 %v1552
    %1556 = vmatprep.subr.bf16.mxu0 0
    %1557 = vmatpush1.bf16.xpose.msra.mxu0 0
    %1558 = vmatprep.subr.bf16.mxu0 0
    %1559 = vmatpush1.bf16.xpose.msra.mxu0 0
    %1560 = vmatprep.subr.bf16.mxu0 0
    %1561 = vmatpush1.bf16.xpose.msra.mxu0 0
    %1562 = vmatprep.subr.bf16.mxu0 0
    %1563 = vmatpush1.bf16.xpose.msra.mxu0 0
    %1564 = vmatprep.subr.bf16.mxu0 0
    %1565 = vmatpush1.bf16.xpose.msra.mxu0 0
    %1566 = vmatprep.subr.bf16.mxu0 0
    %1567 = vmatpush1.bf16.xpose.msra.mxu0 0
    %1568 = vmatprep.subr.bf16.mxu0 0
    %1569 = vmatpush1.bf16.xpose.msra.mxu0 0
    %1570 = vmatprep.subr.bf16.mxu0 0
    %1571 = vmatpush1.bf16.xpose.msra.mxu0 0
    %1572 = vmatprep.subr.bf16.mxu0 0
    %1573 = vmatpush1.bf16.xpose.msra.mxu0 0
    %1574 = vmatprep.subr.bf16.mxu0 0
    %1575 = vmatpush1.bf16.xpose.msra.mxu0 0
    %1576 = vmatprep.subr.bf16.mxu0 0
    %1577 = vmatpush1.bf16.xpose.msra.mxu0 0
    %1578 = vmatprep.subr.bf16.mxu0 0
    %1579 = vmatpush1.bf16.xpose.msra.mxu0 0
    %1580 = vmatprep.subr.bf16.mxu0 0
    %1581 = vmatpush1.bf16.xpose.msra.mxu0 0
    %1582 = vmatprep.subr.bf16.mxu0 0
    %1583 = vmatpush1.bf16.xpose.msra.mxu0 0
    %1584 = vmatprep.subr.bf16.mxu0 0
    %1585 = vmatpush1.bf16.xpose.msra.mxu0 0
    %1586 = vmatprep.mubr.bf16.mxu0 0
    %1587 = vmatmul.mubr.bf16.gmra.mrb[0].mxu0 %v1549
    %v1588 = vpop.f32.mrb[0].mxu0
    %v1589 = vadd.f32 0.0, %v1588
    %v1590 = vpop.f32.mrb[0].mxu0
    %v1591 = vpop.f32.mrb[0].mxu0
    %v1592 = vpop.f32.mrb[0].mxu0
    %1593 = vdwg.mxu0
    %v1594 = vmul.f32 %v1589, 0.17677669
    %v1595 = vadd.f32 %v1594, %v538
    %v1596 = vsel %vm607, %v1595, -inf
    %1597 = vmax.xlane.f32.xlu0 %v1596
    %v1598 = vpop.xlane.xlu0 %1597
    %v1599 = vsub.f32 %v1595, %v1598
    %v1600 = vmul.f32 %v1599, 1.442695
    %v1601 = vpow.pop %v1600
    %v1602 = vsel %vm607, %v1601, 0.0
    %1603 = vadd.xlane.f32.xlu0 %v1602
    %v1604 = vpop.xlane.xlu0 %1603
    %v1605 = vrcp.pop %v1604
    %v1606 = vmul.f32 %v1601, %v1605
    %v1607 = vpack.c.bf16 %v1606, %v1606
    %1608 = vrot.lane.b32.xlu0 %v1234, 64
    %v1609 = vpop.permute.xlu0 %1608
    %v1611 = vsel %vm607, %v1607, 0
    %v1614 = vsel %vm623, %v1609, 0
    %1616 = vmatprep.subr.bf16.mxu0 0
    %1617 = vmatpush1.bf16.msra.mxu0 %v1614
    %1618 = vmatprep.subr.bf16.mxu0 0
    %1619 = vmatpush1.bf16.msra.mxu0 0
    %1620 = vmatprep.subr.bf16.mxu0 0
    %1621 = vmatpush1.bf16.msra.mxu0 0
    %1622 = vmatprep.subr.bf16.mxu0 0
    %1623 = vmatpush1.bf16.msra.mxu0 0
    %1624 = vmatprep.subr.bf16.mxu0 0
    %1625 = vmatpush1.bf16.msra.mxu0 0
    %1626 = vmatprep.subr.bf16.mxu0 0
    %1627 = vmatpush1.bf16.msra.mxu0 0
    %1628 = vmatprep.subr.bf16.mxu0 0
    %1629 = vmatpush1.bf16.msra.mxu0 0
    %1630 = vmatprep.subr.bf16.mxu0 0
    %1631 = vmatpush1.bf16.msra.mxu0 0
    %1632 = vmatprep.subr.bf16.mxu0 0
    %1633 = vmatpush1.bf16.msra.mxu0 0
    %1634 = vmatprep.subr.bf16.mxu0 0
    %1635 = vmatpush1.bf16.msra.mxu0 0
    %1636 = vmatprep.subr.bf16.mxu0 0
    %1637 = vmatpush1.bf16.msra.mxu0 0
    %1638 = vmatprep.subr.bf16.mxu0 0
    %1639 = vmatpush1.bf16.msra.mxu0 0
    %1640 = vmatprep.subr.bf16.mxu0 0
    %1641 = vmatpush1.bf16.msra.mxu0 0
    %1642 = vmatprep.subr.bf16.mxu0 0
    %1643 = vmatpush1.bf16.msra.mxu0 0
    %1644 = vmatprep.subr.bf16.mxu0 0
    %1645 = vmatpush1.bf16.msra.mxu0 0
    %1646 = vmatprep.subr.bf16.mxu0 0
    %1647 = vmatpush1.bf16.msra.mxu0 0
    %1648 = vmatprep.mubr.bf16.mxu0 0
    %1649 = vmatmul.mubr.bf16.gmra.mrb[0].mxu0 %v1611
    %v1650 = vpop.f32.mrb[0].mxu0
    %v1651 = vadd.f32 0.0, %v1650
    %v1652 = vpop.f32.mrb[0].mxu0
    %v1653 = vpop.f32.mrb[0].mxu0
    %v1654 = vpop.f32.mrb[0].mxu0
    %1655 = vdwg.mxu0
    %v1656 = vpack.c.bf16 %v1651, %v1651
    %v1658 = vsel %vm558, %v1656, 0
    %1660 = vmatprep.subr.bf16.mxu0 0
    %1661 = vmatpush1.bf16.msra.mxu0 %v1015
    %1662 = vmatprep.subr.bf16.mxu0 0
    %1663 = vmatpush1.bf16.msra.mxu0 %v1016
    %1664 = vmatprep.subr.bf16.mxu0 0
    %1665 = vmatpush1.bf16.msra.mxu0 0
    %1666 = vmatprep.subr.bf16.mxu0 0
    %1667 = vmatpush1.bf16.msra.mxu0 0
    %1668 = vmatprep.subr.bf16.mxu0 0
    %1669 = vmatpush1.bf16.msra.mxu0 0
    %1670 = vmatprep.subr.bf16.mxu0 0
    %1671 = vmatpush1.bf16.msra.mxu0 0
    %1672 = vmatprep.subr.bf16.mxu0 0
    %1673 = vmatpush1.bf16.msra.mxu0 0
    %1674 = vmatprep.subr.bf16.mxu0 0
    %1675 = vmatpush1.bf16.msra.mxu0 0
    %1676 = vmatprep.subr.bf16.mxu0 0
    %1677 = vmatpush1.bf16.msra.mxu0 0
    %1678 = vmatprep.subr.bf16.mxu0 0
    %1679 = vmatpush1.bf16.msra.mxu0 0
    %1680 = vmatprep.subr.bf16.mxu0 0
    %1681 = vmatpush1.bf16.msra.mxu0 0
    %1682 = vmatprep.subr.bf16.mxu0 0
    %1683 = vmatpush1.bf16.msra.mxu0 0
    %1684 = vmatprep.subr.bf16.mxu0 0
    %1685 = vmatpush1.bf16.msra.mxu0 0
    %1686 = vmatprep.subr.bf16.mxu0 0
    %1687 = vmatpush1.bf16.msra.mxu0 0
    %1688 = vmatprep.subr.bf16.mxu0 0
    %1689 = vmatpush1.bf16.msra.mxu0 0
    %1690 = vmatprep.subr.bf16.mxu0 0
    %1691 = vmatpush1.bf16.msra.mxu0 0
    %1692 = vmatprep.mubr.bf16.mxu0 0
    %1693 = vmatmul.mubr.bf16.gmra.mrb[0].mxu0 %v1658
    %v1694 = vpop.f32.mrb[0].mxu0
    %v1695 = vadd.f32 0.0, %v1694
    %v1696 = vpop.f32.mrb[0].mxu0
    %v1697 = vpop.f32.mrb[0].mxu0
    %v1698 = vpop.f32.mrb[0].mxu0
    %1699 = vdwg.mxu0
    %v1700 = vadd.f32 %v1539, %v1695
    %1701 = vrot.lane.b32.xlu0 %v1232, 32
    %v1702 = vpop.permute.xlu0 %1701
    %1703 = vrot.lane.b32.xlu0 %v1233, 32
    %v1704 = vpop.permute.xlu0 %1703
    %v1706 = vsel %vm558, %v1702, 0
    %v1709 = vsel %vm558, %v1704, 0
    %1711 = vmatprep.subr.bf16.mxu0 0
    %1712 = vmatpush1.bf16.xpose.msra.mxu0 %v1709
    %1713 = vmatprep.subr.bf16.mxu0 0
    %1714 = vmatpush1.bf16.xpose.msra.mxu0 0
    %1715 = vmatprep.subr.bf16.mxu0 0
    %1716 = vmatpush1.bf16.xpose.msra.mxu0 0
    %1717 = vmatprep.subr.bf16.mxu0 0
    %1718 = vmatpush1.bf16.xpose.msra.mxu0 0
    %1719 = vmatprep.subr.bf16.mxu0 0
    %1720 = vmatpush1.bf16.xpose.msra.mxu0 0
    %1721 = vmatprep.subr.bf16.mxu0 0
    %1722 = vmatpush1.bf16.xpose.msra.mxu0 0
    %1723 = vmatprep.subr.bf16.mxu0 0
    %1724 = vmatpush1.bf16.xpose.msra.mxu0 0
    %1725 = vmatprep.subr.bf16.mxu0 0
    %1726 = vmatpush1.bf16.xpose.msra.mxu0 0
    %1727 = vmatprep.subr.bf16.mxu0 0
    %1728 = vmatpush1.bf16.xpose.msra.mxu0 0
    %1729 = vmatprep.subr.bf16.mxu0 0
    %1730 = vmatpush1.bf16.xpose.msra.mxu0 0
    %1731 = vmatprep.subr.bf16.mxu0 0
    %1732 = vmatpush1.bf16.xpose.msra.mxu0 0
    %1733 = vmatprep.subr.bf16.mxu0 0
    %1734 = vmatpush1.bf16.xpose.msra.mxu0 0
    %1735 = vmatprep.subr.bf16.mxu0 0
    %1736 = vmatpush1.bf16.xpose.msra.mxu0 0
    %1737 = vmatprep.subr.bf16.mxu0 0
    %1738 = vmatpush1.bf16.xpose.msra.mxu0 0
    %1739 = vmatprep.subr.bf16.mxu0 0
    %1740 = vmatpush1.bf16.xpose.msra.mxu0 0
    %1741 = vmatprep.subr.bf16.mxu0 0
    %1742 = vmatpush1.bf16.xpose.msra.mxu0 0
    %1743 = vmatprep.mubr.bf16.mxu0 0
    %1744 = vmatmul.mubr.bf16.gmra.mrb[0].mxu0 %v1706
    %v1745 = vpop.f32.mrb[0].mxu0
    %v1746 = vadd.f32 0.0, %v1745
    %v1747 = vpop.f32.mrb[0].mxu0
    %v1748 = vpop.f32.mrb[0].mxu0
    %v1749 = vpop.f32.mrb[0].mxu0
    %1750 = vdwg.mxu0
    %v1751 = vmul.f32 %v1746, 0.17677669
    %v1752 = vadd.f32 %v1751, %v538
    %v1753 = vsel %vm607, %v1752, -inf
    %1754 = vmax.xlane.f32.xlu0 %v1753
    %v1755 = vpop.xlane.xlu0 %1754
    %v1756 = vsub.f32 %v1752, %v1755
    %v1757 = vmul.f32 %v1756, 1.442695
    %v1758 = vpow.pop %v1757
    %v1759 = vsel %vm607, %v1758, 0.0
    %1760 = vadd.xlane.f32.xlu0 %v1759
    %v1761 = vpop.xlane.xlu0 %1760
    %v1762 = vrcp.pop %v1761
    %v1763 = vmul.f32 %v1758, %v1762
    %v1764 = vpack.c.bf16 %v1763, %v1763
    %1765 = vrot.lane.b32.xlu0 %v1234, 32
    %v1766 = vpop.permute.xlu0 %1765
    %v1768 = vsel %vm607, %v1764, 0
    %v1771 = vsel %vm623, %v1766, 0
    %1773 = vmatprep.subr.bf16.mxu0 0
    %1774 = vmatpush1.bf16.msra.mxu0 %v1771
    %1775 = vmatprep.subr.bf16.mxu0 0
    %1776 = vmatpush1.bf16.msra.mxu0 0
    %1777 = vmatprep.subr.bf16.mxu0 0
    %1778 = vmatpush1.bf16.msra.mxu0 0
    %1779 = vmatprep.subr.bf16.mxu0 0
    %1780 = vmatpush1.bf16.msra.mxu0 0
    %1781 = vmatprep.subr.bf16.mxu0 0
    %1782 = vmatpush1.bf16.msra.mxu0 0
    %1783 = vmatprep.subr.bf16.mxu0 0
    %1784 = vmatpush1.bf16.msra.mxu0 0
    %1785 = vmatprep.subr.bf16.mxu0 0
    %1786 = vmatpush1.bf16.msra.mxu0 0
    %1787 = vmatprep.subr.bf16.mxu0 0
    %1788 = vmatpush1.bf16.msra.mxu0 0
    %1789 = vmatprep.subr.bf16.mxu0 0
    %1790 = vmatpush1.bf16.msra.mxu0 0
    %1791 = vmatprep.subr.bf16.mxu0 0
    %1792 = vmatpush1.bf16.msra.mxu0 0
    %1793 = vmatprep.subr.bf16.mxu0 0
    %1794 = vmatpush1.bf16.msra.mxu0 0
    %1795 = vmatprep.subr.bf16.mxu0 0
    %1796 = vmatpush1.bf16.msra.mxu0 0
    %1797 = vmatprep.subr.bf16.mxu0 0
    %1798 = vmatpush1.bf16.msra.mxu0 0
    %1799 = vmatprep.subr.bf16.mxu0 0
    %1800 = vmatpush1.bf16.msra.mxu0 0
    %1801 = vmatprep.subr.bf16.mxu0 0
    %1802 = vmatpush1.bf16.msra.mxu0 0
    %1803 = vmatprep.subr.bf16.mxu0 0
    %1804 = vmatpush1.bf16.msra.mxu0 0
    %1805 = vmatprep.mubr.bf16.mxu0 0
    %1806 = vmatmul.mubr.bf16.gmra.mrb[0].mxu0 %v1768
    %v1807 = vpop.f32.mrb[0].mxu0
    %v1808 = vadd.f32 0.0, %v1807
    %v1809 = vpop.f32.mrb[0].mxu0
    %v1810 = vpop.f32.mrb[0].mxu0
    %v1811 = vpop.f32.mrb[0].mxu0
    %1812 = vdwg.mxu0
    %v1813 = vpack.c.bf16 %v1808, %v1808
    %v1815 = vsel %vm558, %v1813, 0
    %1817 = vmatprep.subr.bf16.mxu0 0
    %1818 = vmatpush1.bf16.msra.mxu0 %v1184
    %1819 = vmatprep.subr.bf16.mxu0 0
    %1820 = vmatpush1.bf16.msra.mxu0 %v1185
    %1821 = vmatprep.subr.bf16.mxu0 0
    %1822 = vmatpush1.bf16.msra.mxu0 0
    %1823 = vmatprep.subr.bf16.mxu0 0
    %1824 = vmatpush1.bf16.msra.mxu0 0
    %1825 = vmatprep.subr.bf16.mxu0 0
    %1826 = vmatpush1.bf16.msra.mxu0 0
    %1827 = vmatprep.subr.bf16.mxu0 0
    %1828 = vmatpush1.bf16.msra.mxu0 0
    %1829 = vmatprep.subr.bf16.mxu0 0
    %1830 = vmatpush1.bf16.msra.mxu0 0
    %1831 = vmatprep.subr.bf16.mxu0 0
    %1832 = vmatpush1.bf16.msra.mxu0 0
    %1833 = vmatprep.subr.bf16.mxu0 0
    %1834 = vmatpush1.bf16.msra.mxu0 0
    %1835 = vmatprep.subr.bf16.mxu0 0
    %1836 = vmatpush1.bf16.msra.mxu0 0
    %1837 = vmatprep.subr.bf16.mxu0 0
    %1838 = vmatpush1.bf16.msra.mxu0 0
    %1839 = vmatprep.subr.bf16.mxu0 0
    %1840 = vmatpush1.bf16.msra.mxu0 0
    %1841 = vmatprep.subr.bf16.mxu0 0
    %1842 = vmatpush1.bf16.msra.mxu0 0
    %1843 = vmatprep.subr.bf16.mxu0 0
    %1844 = vmatpush1.bf16.msra.mxu0 0
    %1845 = vmatprep.subr.bf16.mxu0 0
    %1846 = vmatpush1.bf16.msra.mxu0 0
    %1847 = vmatprep.subr.bf16.mxu0 0
    %1848 = vmatpush1.bf16.msra.mxu0 0
    %1849 = vmatprep.mubr.bf16.mxu0 0
    %1850 = vmatmul.mubr.bf16.gmra.mrb[0].mxu0 %v1815
    %v1851 = vpop.f32.mrb[0].mxu0
    %v1852 = vadd.f32 0.0, %v1851
    %v1853 = vpop.f32.mrb[0].mxu0
    %v1854 = vpop.f32.mrb[0].mxu0
    %v1855 = vpop.f32.mrb[0].mxu0
    %1856 = vdwg.mxu0
    %v1857 = vadd.f32 %v1700, %v1852
    %v1858 = vadd.f32 %v228, %v1231
    %v1859 = vadd.f32 %v229, %v1857
    %v1860 = vld [vmem:[%s9] sm:$0x1]
    %v1862 = vlaneseq
    %v1863 = vshrl.u32 %v1862, 7
    %v1864 = vsub.s32 0, %v1863
    %v1865 = vrot.slane %v1860, %v1864
    %v1867 = vadd.f32 %v1858, %v1865
    %v1868 = vadd.f32 %v1859, %v1865
    %v1869 = vld [vmem:[%s10] sm:$0x1]
    %v1870 = vld [vmem:[%s11] sm:$0x1]
    %1871 = vadd.xlane.f32.xlu0 %v1867
    %v1872 = vpop.xlane.xlu0 %1871
    %1873 = vadd.xlane.f32.xlu0 %v1868
    %v1874 = vpop.xlane.xlu0 %1873
    %v1875 = vmul.f32 %v1872, %v240
    %v1876 = vmul.f32 %v1874, %v240
    %v1877 = vsub.f32 %v1867, %v1875
    %v1878 = vsub.f32 %v1868, %v1876
    %v1879 = vmul.f32 %v1877, %v1877
    %v1880 = vmul.f32 %v1878, %v1878
    %1881 = vadd.xlane.f32.xlu0 %v1879
    %v1882 = vpop.xlane.xlu0 %1881
    %1883 = vadd.xlane.f32.xlu0 %v1880
    %v1884 = vpop.xlane.xlu0 %1883
    %v1885 = vmul.f32 %v1882, %v240
    %v1886 = vmul.f32 %v1884, %v240
    %v1887 = vadd.f32 %v1885, 1e-05
    %v1888 = vadd.f32 %v1886, 1e-05
    %v1889 = vrsqrt.pop %v1887
    %v1890 = vrsqrt.pop %v1888
    %v1891 = vmul.f32 %v1877, %v1889
    %v1892 = vmul.f32 %v1878, %v1890
    %v1894 = vlaneseq
    %v1895 = vshrl.u32 %v1894, 7
    %v1896 = vsub.s32 0, %v1895
    %v1897 = vrot.slane %v1869, %v1896
    %v1899 = vmul.f32 %v1891, %v1897
    %v1900 = vmul.f32 %v1892, %v1897
    %v1902 = vlaneseq
    %v1903 = vshrl.u32 %v1902, 7
    %v1904 = vsub.s32 0, %v1903
    %v1905 = vrot.slane %v1870, %v1904
    %v1907 = vadd.f32 %v1899, %v1905
    %v1908 = vadd.f32 %v1900, %v1905
    %v1909 = vld [vmem:[#allocation13] sm:$0xf]
    %v1910 = vld [vmem:[#allocation13 + $0x4] sm:$0xf]
    %v1911 = vld [vmem:[#allocation13 + $0x8] sm:$0xf]
    %v1912 = vld [vmem:[#allocation13 + $0xc] sm:$0xf]
    %v1913 = vld [vmem:[#allocation13 + $0x10] sm:$0xf]
    %v1914 = vld [vmem:[#allocation13 + $0x14] sm:$0xf]
    %v1915 = vld [vmem:[#allocation13 + $0x18] sm:$0xf]
    %v1916 = vld [vmem:[#allocation13 + $0x1c] sm:$0xf]
    %v1917 = vld [vmem:[#allocation13 + $0x20] sm:$0xf]
    %v1918 = vld [vmem:[#allocation13 + $0x24] sm:$0xf]
    %v1919 = vld [vmem:[#allocation13 + $0x28] sm:$0xf]
    %v1920 = vld [vmem:[#allocation13 + $0x2c] sm:$0xf]
    %v1921 = vld [vmem:[#allocation13 + $0x30] sm:$0xf]
    %v1922 = vld [vmem:[#allocation13 + $0x34] sm:$0xf]
    %v1923 = vld [vmem:[#allocation13 + $0x38] sm:$0xf]
    %v1924 = vld [vmem:[#allocation13 + $0x3c] sm:$0xf]
    %v1925 = vpack.c.bf16 %v1908, %v1907
    %v1926 = vld [vmem:[%s13] sm:$0x1]
    %v1928 = vlaneseq
    %v1929 = vshrl.u32 %v1928, 7
    %v1930 = vsub.s32 0, %v1929
    %v1931 = vrot.slane %v1926, %v1930
    %v1949 = vunpack.c.l.b16 %v1909
    %v1950 = vunpack.c.l.b16 %v1910
    %v1951 = vunpack.c.l.b16 %v1911
    %v1952 = vunpack.c.l.b16 %v1912
    %v1953 = vunpack.c.l.b16 %v1913
    %v1954 = vunpack.c.l.b16 %v1914
    %v1955 = vunpack.c.l.b16 %v1915
    %v1956 = vunpack.c.l.b16 %v1916
    %v1957 = vunpack.c.l.b16 %v1917
    %v1958 = vunpack.c.l.b16 %v1918
    %v1959 = vunpack.c.l.b16 %v1919
    %v1960 = vunpack.c.l.b16 %v1920
    %v1961 = vunpack.c.l.b16 %v1921
    %v1962 = vunpack.c.l.b16 %v1922
    %v1963 = vunpack.c.l.b16 %v1923
    %v1964 = vunpack.c.l.b16 %v1924
    %v1965 = vpack.c.b16 %v1950, %v1949
    %v1966 = vpack.c.b16 %v1952, %v1951
    %v1967 = vpack.c.b16 %v1954, %v1953
    %v1968 = vpack.c.b16 %v1956, %v1955
    %v1969 = vpack.c.b16 %v1958, %v1957
    %v1970 = vpack.c.b16 %v1960, %v1959
    %v1971 = vpack.c.b16 %v1962, %v1961
    %v1972 = vpack.c.b16 %v1964, %v1963
    %1981 = vmatprep.subr.bf16.mxu0 0
    %1982 = vmatpush1.bf16.msra.mxu0 %v1965
    %1983 = vmatprep.subr.bf16.mxu0 0
    %1984 = vmatpush1.bf16.msra.mxu0 %v1966
    %1985 = vmatprep.subr.bf16.mxu0 0
    %1986 = vmatpush1.bf16.msra.mxu0 %v1967
    %1987 = vmatprep.subr.bf16.mxu0 0
    %1988 = vmatpush1.bf16.msra.mxu0 %v1968
    %1989 = vmatprep.subr.bf16.mxu0 0
    %1990 = vmatpush1.bf16.msra.mxu0 %v1969
    %1991 = vmatprep.subr.bf16.mxu0 0
    %1992 = vmatpush1.bf16.msra.mxu0 %v1970
    %1993 = vmatprep.subr.bf16.mxu0 0
    %1994 = vmatpush1.bf16.msra.mxu0 %v1971
    %1995 = vmatprep.subr.bf16.mxu0 0
    %1996 = vmatpush1.bf16.msra.mxu0 %v1972
    %1997 = vmatprep.subr.bf16.mxu0 0
    %1998 = vmatpush1.bf16.msra.mxu0 0
    %1999 = vmatprep.subr.bf16.mxu0 0
    %2000 = vmatpush1.bf16.msra.mxu0 0
    %2001 = vmatprep.subr.bf16.mxu0 0
    %2002 = vmatpush1.bf16.msra.mxu0 0
    %2003 = vmatprep.subr.bf16.mxu0 0
    %2004 = vmatpush1.bf16.msra.mxu0 0
    %2005 = vmatprep.subr.bf16.mxu0 0
    %2006 = vmatpush1.bf16.msra.mxu0 0
    %2007 = vmatprep.subr.bf16.mxu0 0
    %2008 = vmatpush1.bf16.msra.mxu0 0
    %2009 = vmatprep.subr.bf16.mxu0 0
    %2010 = vmatpush1.bf16.msra.mxu0 0
    %2011 = vmatprep.subr.bf16.mxu0 0
    %2012 = vmatpush1.bf16.msra.mxu0 0
    %2013 = vmatprep.mubr.bf16.mxu0 0
    %2014 = vmatmul.mubr.bf16.gmra.mrb[0].mxu0 %v1925
    %v2015 = vpop.f32.mrb[0].mxu0
    %v2016 = vadd.f32 %v1931, %v2015
    %v2017 = vpop.f32.mrb[0].mxu0
    %v2018 = vpop.f32.mrb[0].mxu0
    %v2019 = vadd.f32 %v1931, %v2018
    %v2020 = vpop.f32.mrb[0].mxu0
    %2021 = vdwg.mxu0
    %v2022 = vld [vmem:[#allocation14] sm:$0xff]
    %v2023 = vld [vmem:[#allocation14 + $0x8] sm:$0xff]
    %v2024 = vld [vmem:[#allocation14 + $0x10] sm:$0xff]
    %v2025 = vld [vmem:[#allocation14 + $0x18] sm:$0xff]
    %v2026 = vld [vmem:[#allocation14 + $0x20] sm:$0xff]
    %v2027 = vld [vmem:[#allocation14 + $0x28] sm:$0xff]
    %v2028 = vld [vmem:[#allocation14 + $0x30] sm:$0xff]
    %v2029 = vld [vmem:[#allocation14 + $0x38] sm:$0xff]
    %v2030 = vld [vmem:[#allocation14 + $0x40] sm:$0xff]
    %v2031 = vld [vmem:[#allocation14 + $0x48] sm:$0xff]
    %v2032 = vld [vmem:[#allocation14 + $0x50] sm:$0xff]
    %v2033 = vld [vmem:[#allocation14 + $0x58] sm:$0xff]
    %v2034 = vld [vmem:[#allocation14 + $0x60] sm:$0xff]
    %v2035 = vld [vmem:[#allocation14 + $0x68] sm:$0xff]
    %v2036 = vld [vmem:[#allocation14 + $0x70] sm:$0xff]
    %v2037 = vld [vmem:[#allocation14 + $0x78] sm:$0xff]
    %v2038 = vld [vmem:[%s15] sm:$0x3]
    %v2040 = vlaneseq
    %v2041 = vshrl.u32 %v2040, 7
    %v2042 = vsub.s32 0, %v2041
    %v2043 = vrot.slane %v2038, %v2042
    %v2044 = vlaneseq
    %v2045 = vshrl.u32 %v2044, 7
    %v2046 = vsub.s32 1, %v2045
    %v2047 = vrot.slane %v2038, %v2046
    %v2054 = vunpack.c.l.b16 %v230
    %v2055 = vunpack.c.l.b16 %v231
    %v2056 = vunpack.c.l.b16 %v232
    %v2057 = vunpack.c.l.b16 %v233
    %v2058 = vpack.c.b16 %v2055, %v2054
    %v2059 = vpack.c.b16 %v2057, %v2056
    %v2078 = vunpack.c.l.b16 %v2022
    %v2079 = vunpack.c.h.b16 %v2022
    %v2080 = vunpack.c.l.b16 %v2023
    %v2081 = vunpack.c.h.b16 %v2023
    %v2082 = vunpack.c.l.b16 %v2024
    %v2083 = vunpack.c.h.b16 %v2024
    %v2084 = vunpack.c.l.b16 %v2025
    %v2085 = vunpack.c.h.b16 %v2025
    %v2086 = vunpack.c.l.b16 %v2026
    %v2087 = vunpack.c.h.b16 %v2026
    %v2088 = vunpack.c.l.b16 %v2027
    %v2089 = vunpack.c.h.b16 %v2027
    %v2090 = vunpack.c.l.b16 %v2028
    %v2091 = vunpack.c.h.b16 %v2028
    %v2092 = vunpack.c.l.b16 %v2029
    %v2093 = vunpack.c.h.b16 %v2029
    %v2094 = vunpack.c.l.b16 %v2030
    %v2095 = vunpack.c.h.b16 %v2030
    %v2096 = vunpack.c.l.b16 %v2031
    %v2097 = vunpack.c.h.b16 %v2031
    %v2098 = vunpack.c.l.b16 %v2032
    %v2099 = vunpack.c.h.b16 %v2032
    %v2100 = vunpack.c.l.b16 %v2033
    %v2101 = vunpack.c.h.b16 %v2033
    %v2102 = vunpack.c.l.b16 %v2034
    %v2103 = vunpack.c.h.b16 %v2034
    %v2104 = vunpack.c.l.b16 %v2035
    %v2105 = vunpack.c.h.b16 %v2035
    %v2106 = vunpack.c.l.b16 %v2036
    %v2107 = vunpack.c.h.b16 %v2036
    %v2108 = vunpack.c.l.b16 %v2037
    %v2109 = vunpack.c.h.b16 %v2037
    %v2110 = vpack.c.b16 %v2080, %v2078
    %v2111 = vpack.c.b16 %v2081, %v2079
    %v2112 = vpack.c.b16 %v2084, %v2082
    %v2113 = vpack.c.b16 %v2085, %v2083
    %v2114 = vpack.c.b16 %v2088, %v2086
    %v2115 = vpack.c.b16 %v2089, %v2087
    %v2116 = vpack.c.b16 %v2092, %v2090
    %v2117 = vpack.c.b16 %v2093, %v2091
    %v2118 = vpack.c.b16 %v2096, %v2094
    %v2119 = vpack.c.b16 %v2097, %v2095
    %v2120 = vpack.c.b16 %v2100, %v2098
    %v2121 = vpack.c.b16 %v2101, %v2099
    %v2122 = vpack.c.b16 %v2104, %v2102
    %v2123 = vpack.c.b16 %v2105, %v2103
    %v2124 = vpack.c.b16 %v2108, %v2106
    %v2125 = vpack.c.b16 %v2109, %v2107
    %2142 = vmatprep.subr.bf16.mxu0 %v2111
    %2143 = vmatpush1.bf16.msra.mxu0 %v2110
    %2144 = vmatprep.subr.bf16.mxu0 %v2113
    %2145 = vmatpush1.bf16.msra.mxu0 %v2112
    %2146 = vmatprep.subr.bf16.mxu0 %v2115
    %2147 = vmatpush1.bf16.msra.mxu0 %v2114
    %2148 = vmatprep.subr.bf16.mxu0 %v2117
    %2149 = vmatpush1.bf16.msra.mxu0 %v2116
    %2150 = vmatprep.subr.bf16.mxu0 %v2119
    %2151 = vmatpush1.bf16.msra.mxu0 %v2118
    %2152 = vmatprep.subr.bf16.mxu0 %v2121
    %2153 = vmatpush1.bf16.msra.mxu0 %v2120
    %2154 = vmatprep.subr.bf16.mxu0 %v2123
    %2155 = vmatpush1.bf16.msra.mxu0 %v2122
    %2156 = vmatprep.subr.bf16.mxu0 %v2125
    %2157 = vmatpush1.bf16.msra.mxu0 %v2124
    %2158 = vmatprep.subr.bf16.mxu0 0
    %2159 = vmatpush1.bf16.msra.mxu0 0
    %2160 = vmatprep.subr.bf16.mxu0 0
    %2161 = vmatpush1.bf16.msra.mxu0 0
    %2162 = vmatprep.subr.bf16.mxu0 0
    %2163 = vmatpush1.bf16.msra.mxu0 0
    %2164 = vmatprep.subr.bf16.mxu0 0
    %2165 = vmatpush1.bf16.msra.mxu0 0
    %2166 = vmatprep.subr.bf16.mxu0 0
    %2167 = vmatpush1.bf16.msra.mxu0 0
    %2168 = vmatprep.subr.bf16.mxu0 0
    %2169 = vmatpush1.bf16.msra.mxu0 0
    %2170 = vmatprep.subr.bf16.mxu0 0
    %2171 = vmatpush1.bf16.msra.mxu0 0
    %2172 = vmatprep.subr.bf16.mxu0 0
    %2173 = vmatpush1.bf16.msra.mxu0 0
    %2174 = vmatprep.mubr.bf16.mxu0 0
    %2175 = vmatmul.mubr.bf16.gmra.mrb[0].mxu0 %v2058
    %v2176 = vpop.f32.mrb[0].mxu0
    %v2177 = vadd.f32 %v2043, %v2176
    %v2178 = vpop.f32.mrb[0].mxu0
    %v2179 = vadd.f32 %v2047, %v2178
    %v2180 = vpop.f32.mrb[0].mxu0
    %v2181 = vadd.f32 %v2043, %v2180
    %v2182 = vpop.f32.mrb[0].mxu0
    %v2183 = vadd.f32 %v2047, %v2182
    %2184 = vmatprep.mubr.bf16.mxu0 0
    %2185 = vmatmul.mubr.bf16.gmra.mrb[0].mxu0 %v2059
    %v2186 = vpop.f32.mrb[0].mxu0
    %v2187 = vadd.f32 %v2043, %v2186
    %v2188 = vpop.f32.mrb[0].mxu0
    %v2189 = vadd.f32 %v2047, %v2188
    %v2190 = vpop.f32.mrb[0].mxu0
    %v2191 = vadd.f32 %v2043, %v2190
    %v2192 = vpop.f32.mrb[0].mxu0
    %v2193 = vadd.f32 %v2047, %v2192
    %2194 = vdwg.mxu0
    %v2195 = vld [vmem:[#allocation8] sm:$0xff]
    %v2196 = vld [vmem:[#allocation8 + $0x8] sm:$0xff]
    %v2197 = vld [vmem:[#allocation16] sm:$0xf]
    %v2198 = vld [vmem:[#allocation16 + $0x4] sm:$0xf]
    %v2199 = vld [vmem:[#allocation16 + $0x8] sm:$0xf]
    %v2200 = vld [vmem:[#allocation16 + $0xc] sm:$0xf]
    %v2201 = vld [vmem:[#allocation16 + $0x10] sm:$0xf]
    %v2202 = vld [vmem:[#allocation16 + $0x14] sm:$0xf]
    %v2203 = vld [vmem:[#allocation16 + $0x18] sm:$0xf]
    %v2204 = vld [vmem:[#allocation16 + $0x1c] sm:$0xf]
    %v2205 = vld [vmem:[#allocation16 + $0x20] sm:$0xf]
    %v2206 = vld [vmem:[#allocation16 + $0x24] sm:$0xf]
    %v2207 = vld [vmem:[#allocation16 + $0x28] sm:$0xf]
    %v2208 = vld [vmem:[#allocation16 + $0x2c] sm:$0xf]
    %v2209 = vld [vmem:[#allocation16 + $0x30] sm:$0xf]
    %v2210 = vld [vmem:[#allocation16 + $0x34] sm:$0xf]
    %v2211 = vld [vmem:[#allocation16 + $0x38] sm:$0xf]
    %v2212 = vld [vmem:[#allocation16 + $0x3c] sm:$0xf]
    %v2213 = vpack.c.bf16 %v2016, %v2016
    %v2214 = vpack.c.bf16 %v2181, %v2177
    %v2215 = vpack.c.bf16 %v2183, %v2179
    %v2217 = vsel %vm558, %v2213, 0
    %v2220 = vsel %vm558, %v2214, 0
    %2222 = vmatprep.subr.bf16.mxu0 0
    %2223 = vmatpush1.bf16.xpose.msra.mxu0 %v2220
    %2224 = vmatprep.subr.bf16.mxu0 0
    %2225 = vmatpush1.bf16.xpose.msra.mxu0 0
    %2226 = vmatprep.subr.bf16.mxu0 0
    %2227 = vmatpush1.bf16.xpose.msra.mxu0 0
    %2228 = vmatprep.subr.bf16.mxu0 0
    %2229 = vmatpush1.bf16.xpose.msra.mxu0 0
    %2230 = vmatprep.subr.bf16.mxu0 0
    %2231 = vmatpush1.bf16.xpose.msra.mxu0 0
    %2232 = vmatprep.subr.bf16.mxu0 0
    %2233 = vmatpush1.bf16.xpose.msra.mxu0 0
    %2234 = vmatprep.subr.bf16.mxu0 0
    %2235 = vmatpush1.bf16.xpose.msra.mxu0 0
    %2236 = vmatprep.subr.bf16.mxu0 0
    %2237 = vmatpush1.bf16.xpose.msra.mxu0 0
    %2238 = vmatprep.subr.bf16.mxu0 0
    %2239 = vmatpush1.bf16.xpose.msra.mxu0 0
    %2240 = vmatprep.subr.bf16.mxu0 0
    %2241 = vmatpush1.bf16.xpose.msra.mxu0 0
    %2242 = vmatprep.subr.bf16.mxu0 0
    %2243 = vmatpush1.bf16.xpose.msra.mxu0 0
    %2244 = vmatprep.subr.bf16.mxu0 0
    %2245 = vmatpush1.bf16.xpose.msra.mxu0 0
    %2246 = vmatprep.subr.bf16.mxu0 0
    %2247 = vmatpush1.bf16.xpose.msra.mxu0 0
    %2248 = vmatprep.subr.bf16.mxu0 0
    %2249 = vmatpush1.bf16.xpose.msra.mxu0 0
    %2250 = vmatprep.subr.bf16.mxu0 0
    %2251 = vmatpush1.bf16.xpose.msra.mxu0 0
    %2252 = vmatprep.subr.bf16.mxu0 0
    %2253 = vmatpush1.bf16.xpose.msra.mxu0 0
    %2254 = vmatprep.mubr.bf16.mxu0 0
    %2255 = vmatmul.mubr.bf16.gmra.mrb[0].mxu0 %v2217
    %v2256 = vpop.f32.mrb[0].mxu0
    %v2257 = vadd.f32 0.0, %v2256
    %v2258 = vpop.f32.mrb[0].mxu0
    %v2259 = vpop.f32.mrb[0].mxu0
    %v2260 = vpop.f32.mrb[0].mxu0
    %2261 = vdwg.mxu0
    %v2262 = vmul.f32 %v2257, 0.17677669
    %v2263 = vadd.f32 %v2262, %v2195
    %vm2264 = vcmask 130048
    %v2265 = vsel %vm2264, %v2263, -inf
    %2266 = vmax.xlane.f32.xlu0 %v2265
    %v2267 = vpop.xlane.xlu0 %2266
    %v2268 = vsub.f32 %v2263, %v2267
    %v2269 = vmul.f32 %v2268, 1.442695
    %v2270 = vpow.pop %v2269
    %v2271 = vsel %vm2264, %v2270, 0.0
    %2272 = vadd.xlane.f32.xlu0 %v2271
    %v2273 = vpop.xlane.xlu0 %2272
    %v2274 = vrcp.pop %v2273
    %v2275 = vmul.f32 %v2270, %v2274
    %v2276 = vpack.c.bf16 %v2275, %v2275
    %v2278 = vsel %vm2264, %v2276, 0
    %2280 = vmatprep.subr.bf16.mxu0 0
    %2281 = vmatpush1.bf16.msra.mxu0 %v2215
    %2282 = vmatprep.subr.bf16.mxu0 0
    %2283 = vmatpush1.bf16.msra.mxu0 0
    %2284 = vmatprep.subr.bf16.mxu0 0
    %2285 = vmatpush1.bf16.msra.mxu0 0
    %2286 = vmatprep.subr.bf16.mxu0 0
    %2287 = vmatpush1.bf16.msra.mxu0 0
    %2288 = vmatprep.subr.bf16.mxu0 0
    %2289 = vmatpush1.bf16.msra.mxu0 0
    %2290 = vmatprep.subr.bf16.mxu0 0
    %2291 = vmatpush1.bf16.msra.mxu0 0
    %2292 = vmatprep.subr.bf16.mxu0 0
    %2293 = vmatpush1.bf16.msra.mxu0 0
    %2294 = vmatprep.subr.bf16.mxu0 0
    %2295 = vmatpush1.bf16.msra.mxu0 0
    %2296 = vmatprep.subr.bf16.mxu0 0
    %2297 = vmatpush1.bf16.msra.mxu0 0
    %2298 = vmatprep.subr.bf16.mxu0 0
    %2299 = vmatpush1.bf16.msra.mxu0 0
    %2300 = vmatprep.subr.bf16.mxu0 0
    %2301 = vmatpush1.bf16.msra.mxu0 0
    %2302 = vmatprep.subr.bf16.mxu0 0
    %2303 = vmatpush1.bf16.msra.mxu0 0
    %2304 = vmatprep.subr.bf16.mxu0 0
    %2305 = vmatpush1.bf16.msra.mxu0 0
    %2306 = vmatprep.subr.bf16.mxu0 0
    %2307 = vmatpush1.bf16.msra.mxu0 0
    %2308 = vmatprep.subr.bf16.mxu0 0
    %2309 = vmatpush1.bf16.msra.mxu0 0
    %2310 = vmatprep.subr.bf16.mxu0 0
    %2311 = vmatpush1.bf16.msra.mxu0 0
    %2312 = vmatprep.mubr.bf16.mxu0 0
    %2313 = vmatmul.mubr.bf16.gmra.mrb[0].mxu0 %v2278
    %v2314 = vpop.f32.mrb[0].mxu0
    %v2315 = vadd.f32 0.0, %v2314
    %v2316 = vpop.f32.mrb[0].mxu0
    %v2317 = vpop.f32.mrb[0].mxu0
    %v2318 = vpop.f32.mrb[0].mxu0
    %2319 = vdwg.mxu0
    %v2320 = vpack.c.bf16 %v2315, %v2315
    %2322 = vrot.lane.b32.xlu0 %v2213, 96
    %v2323 = vpop.permute.xlu0 %2322
    %2325 = vrot.lane.b32.xlu0 %v2214, 96
    %v2326 = vpop.permute.xlu0 %2325
    %v2328 = vsel %vm558, %v2323, 0
    %v2331 = vsel %vm558, %v2326, 0
    %2333 = vmatprep.subr.bf16.mxu0 0
    %2334 = vmatpush1.bf16.xpose.msra.mxu0 %v2331
    %2335 = vmatprep.subr.bf16.mxu0 0
    %2336 = vmatpush1.bf16.xpose.msra.mxu0 0
    %2337 = vmatprep.subr.bf16.mxu0 0
    %2338 = vmatpush1.bf16.xpose.msra.mxu0 0
    %2339 = vmatprep.subr.bf16.mxu0 0
    %2340 = vmatpush1.bf16.xpose.msra.mxu0 0
    %2341 = vmatprep.subr.bf16.mxu0 0
    %2342 = vmatpush1.bf16.xpose.msra.mxu0 0
    %2343 = vmatprep.subr.bf16.mxu0 0
    %2344 = vmatpush1.bf16.xpose.msra.mxu0 0
    %2345 = vmatprep.subr.bf16.mxu0 0
    %2346 = vmatpush1.bf16.xpose.msra.mxu0 0
    %2347 = vmatprep.subr.bf16.mxu0 0
    %2348 = vmatpush1.bf16.xpose.msra.mxu0 0
    %2349 = vmatprep.subr.bf16.mxu0 0
    %2350 = vmatpush1.bf16.xpose.msra.mxu0 0
    %2351 = vmatprep.subr.bf16.mxu0 0
    %2352 = vmatpush1.bf16.xpose.msra.mxu0 0
    %2353 = vmatprep.subr.bf16.mxu0 0
    %2354 = vmatpush1.bf16.xpose.msra.mxu0 0
    %2355 = vmatprep.subr.bf16.mxu0 0
    %2356 = vmatpush1.bf16.xpose.msra.mxu0 0
    %2357 = vmatprep.subr.bf16.mxu0 0
    %2358 = vmatpush1.bf16.xpose.msra.mxu0 0
    %2359 = vmatprep.subr.bf16.mxu0 0
    %2360 = vmatpush1.bf16.xpose.msra.mxu0 0
    %2361 = vmatprep.subr.bf16.mxu0 0
    %2362 = vmatpush1.bf16.xpose.msra.mxu0 0
    %2363 = vmatprep.subr.bf16.mxu0 0
    %2364 = vmatpush1.bf16.xpose.msra.mxu0 0
    %2365 = vmatprep.mubr.bf16.mxu0 0
    %2366 = vmatmul.mubr.bf16.gmra.mrb[0].mxu0 %v2328
    %v2367 = vpop.f32.mrb[0].mxu0
    %v2368 = vadd.f32 0.0, %v2367
    %v2369 = vpop.f32.mrb[0].mxu0
    %v2370 = vpop.f32.mrb[0].mxu0
    %v2371 = vpop.f32.mrb[0].mxu0
    %2372 = vdwg.mxu0
    %v2373 = vmul.f32 %v2368, 0.17677669
    %v2374 = vadd.f32 %v2373, %v2195
    %v2375 = vsel %vm2264, %v2374, -inf
    %2376 = vmax.xlane.f32.xlu0 %v2375
    %v2377 = vpop.xlane.xlu0 %2376
    %v2378 = vsub.f32 %v2374, %v2377
    %v2379 = vmul.f32 %v2378, 1.442695
    %v2380 = vpow.pop %v2379
    %v2381 = vsel %vm2264, %v2380, 0.0
    %2382 = vadd.xlane.f32.xlu0 %v2381
    %v2383 = vpop.xlane.xlu0 %2382
    %v2384 = vrcp.pop %v2383
    %v2385 = vmul.f32 %v2380, %v2384
    %v2386 = vpack.c.bf16 %v2385, %v2385
    %2388 = vrot.lane.b32.xlu0 %v2215, 96
    %v2389 = vpop.permute.xlu0 %2388
    %v2392 = vsel %vm2264, %v2386, 0
    %2394 = vmatprep.subr.bf16.mxu0 0
    %2395 = vmatpush1.bf16.msra.mxu0 %v2389
    %2396 = vmatprep.subr.bf16.mxu0 0
    %2397 = vmatpush1.bf16.msra.mxu0 0
    %2398 = vmatprep.subr.bf16.mxu0 0
    %2399 = vmatpush1.bf16.msra.mxu0 0
    %2400 = vmatprep.subr.bf16.mxu0 0
    %2401 = vmatpush1.bf16.msra.mxu0 0
    %2402 = vmatprep.subr.bf16.mxu0 0
    %2403 = vmatpush1.bf16.msra.mxu0 0
    %2404 = vmatprep.subr.bf16.mxu0 0
    %2405 = vmatpush1.bf16.msra.mxu0 0
    %2406 = vmatprep.subr.bf16.mxu0 0
    %2407 = vmatpush1.bf16.msra.mxu0 0
    %2408 = vmatprep.subr.bf16.mxu0 0
    %2409 = vmatpush1.bf16.msra.mxu0 0
    %2410 = vmatprep.subr.bf16.mxu0 0
    %2411 = vmatpush1.bf16.msra.mxu0 0
    %2412 = vmatprep.subr.bf16.mxu0 0
    %2413 = vmatpush1.bf16.msra.mxu0 0
    %2414 = vmatprep.subr.bf16.mxu0 0
    %2415 = vmatpush1.bf16.msra.mxu0 0
    %2416 = vmatprep.subr.bf16.mxu0 0
    %2417 = vmatpush1.bf16.msra.mxu0 0
    %2418 = vmatprep.subr.bf16.mxu0 0
    %2419 = vmatpush1.bf16.msra.mxu0 0
    %2420 = vmatprep.subr.bf16.mxu0 0
    %2421 = vmatpush1.bf16.msra.mxu0 0
    %2422 = vmatprep.subr.bf16.mxu0 0
    %2423 = vmatpush1.bf16.msra.mxu0 0
    %2424 = vmatprep.subr.bf16.mxu0 0
    %2425 = vmatpush1.bf16.msra.mxu0 0
    %2426 = vmatprep.mubr.bf16.mxu0 0
    %2427 = vmatmul.mubr.bf16.gmra.mrb[0].mxu0 %v2392
    %v2428 = vpop.f32.mrb[0].mxu0
    %v2429 = vadd.f32 0.0, %v2428
    %v2430 = vpop.f32.mrb[0].mxu0
    %v2431 = vpop.f32.mrb[0].mxu0
    %v2432 = vpop.f32.mrb[0].mxu0
    %2433 = vdwg.mxu0
    %v2434 = vpack.c.bf16 %v2429, %v2429
    %v2439 = vunpack.c.l.b16 %v2201
    %v2440 = vunpack.c.l.b16 %v2202
    %v2441 = vunpack.c.l.b16 %v2203
    %v2442 = vunpack.c.l.b16 %v2204
    %v2443 = vpack.c.b16 %v2440, %v2439
    %v2444 = vpack.c.b16 %v2442, %v2441
    %v2448 = vsel %vm558, %v2434, 0
    %2450 = vmatprep.subr.bf16.mxu0 0
    %2451 = vmatpush1.bf16.msra.mxu0 %v2443
    %2452 = vmatprep.subr.bf16.mxu0 0
    %2453 = vmatpush1.bf16.msra.mxu0 %v2444
    %2454 = vmatprep.subr.bf16.mxu0 0
    %2455 = vmatpush1.bf16.msra.mxu0 0
    %2456 = vmatprep.subr.bf16.mxu0 0
    %2457 = vmatpush1.bf16.msra.mxu0 0
    %2458 = vmatprep.subr.bf16.mxu0 0
    %2459 = vmatpush1.bf16.msra.mxu0 0
    %2460 = vmatprep.subr.bf16.mxu0 0
    %2461 = vmatpush1.bf16.msra.mxu0 0
    %2462 = vmatprep.subr.bf16.mxu0 0
    %2463 = vmatpush1.bf16.msra.mxu0 0
    %2464 = vmatprep.subr.bf16.mxu0 0
    %2465 = vmatpush1.bf16.msra.mxu0 0
    %2466 = vmatprep.subr.bf16.mxu0 0
    %2467 = vmatpush1.bf16.msra.mxu0 0
    %2468 = vmatprep.subr.bf16.mxu0 0
    %2469 = vmatpush1.bf16.msra.mxu0 0
    %2470 = vmatprep.subr.bf16.mxu0 0
    %2471 = vmatpush1.bf16.msra.mxu0 0
    %2472 = vmatprep.subr.bf16.mxu0 0
    %2473 = vmatpush1.bf16.msra.mxu0 0
    %2474 = vmatprep.subr.bf16.mxu0 0
    %2475 = vmatpush1.bf16.msra.mxu0 0
    %2476 = vmatprep.subr.bf16.mxu0 0
    %2477 = vmatpush1.bf16.msra.mxu0 0
    %2478 = vmatprep.subr.bf16.mxu0 0
    %2479 = vmatpush1.bf16.msra.mxu0 0
    %2480 = vmatprep.subr.bf16.mxu0 0
    %2481 = vmatpush1.bf16.msra.mxu0 0
    %2482 = vmatprep.mubr.bf16.mxu0 0
    %2483 = vmatmul.mubr.bf16.gmra.mrb[0].mxu0 %v2448
    %v2484 = vpop.f32.mrb[0].mxu0
    %v2485 = vadd.f32 0.0, %v2484
    %v2486 = vpop.f32.mrb[0].mxu0
    %v2487 = vpop.f32.mrb[0].mxu0
    %v2488 = vpop.f32.mrb[0].mxu0
    %2489 = vdwg.mxu0
    %v2494 = vunpack.c.l.b16 %v2197
    %v2495 = vunpack.c.l.b16 %v2198
    %v2496 = vunpack.c.l.b16 %v2199
    %v2497 = vunpack.c.l.b16 %v2200
    %v2498 = vpack.c.b16 %v2495, %v2494
    %v2499 = vpack.c.b16 %v2497, %v2496
    %v2503 = vsel %vm558, %v2320, 0
    %2505 = vmatprep.subr.bf16.mxu0 0
    %2506 = vmatpush1.bf16.msra.mxu0 %v2498
    %2507 = vmatprep.subr.bf16.mxu0 0
    %2508 = vmatpush1.bf16.msra.mxu0 %v2499
    %2509 = vmatprep.subr.bf16.mxu0 0
    %2510 = vmatpush1.bf16.msra.mxu0 0
    %2511 = vmatprep.subr.bf16.mxu0 0
    %2512 = vmatpush1.bf16.msra.mxu0 0
    %2513 = vmatprep.subr.bf16.mxu0 0
    %2514 = vmatpush1.bf16.msra.mxu0 0
    %2515 = vmatprep.subr.bf16.mxu0 0
    %2516 = vmatpush1.bf16.msra.mxu0 0
    %2517 = vmatprep.subr.bf16.mxu0 0
    %2518 = vmatpush1.bf16.msra.mxu0 0
    %2519 = vmatprep.subr.bf16.mxu0 0
    %2520 = vmatpush1.bf16.msra.mxu0 0
    %2521 = vmatprep.subr.bf16.mxu0 0
    %2522 = vmatpush1.bf16.msra.mxu0 0
    %2523 = vmatprep.subr.bf16.mxu0 0
    %2524 = vmatpush1.bf16.msra.mxu0 0
    %2525 = vmatprep.subr.bf16.mxu0 0
    %2526 = vmatpush1.bf16.msra.mxu0 0
    %2527 = vmatprep.subr.bf16.mxu0 0
    %2528 = vmatpush1.bf16.msra.mxu0 0
    %2529 = vmatprep.subr.bf16.mxu0 0
    %2530 = vmatpush1.bf16.msra.mxu0 0
    %2531 = vmatprep.subr.bf16.mxu0 0
    %2532 = vmatpush1.bf16.msra.mxu0 0
    %2533 = vmatprep.subr.bf16.mxu0 0
    %2534 = vmatpush1.bf16.msra.mxu0 0
    %2535 = vmatprep.subr.bf16.mxu0 0
    %2536 = vmatpush1.bf16.msra.mxu0 0
    %2537 = vmatprep.mubr.bf16.mxu0 0
    %2538 = vmatmul.mubr.bf16.gmra.mrb[0].mxu0 %v2503
    %v2539 = vpop.f32.mrb[0].mxu0
    %v2540 = vadd.f32 %v2485, %v2539
    %v2541 = vpop.f32.mrb[0].mxu0
    %v2542 = vpop.f32.mrb[0].mxu0
    %v2543 = vpop.f32.mrb[0].mxu0
    %2544 = vdwg.mxu0
    %2545 = vrot.lane.b32.xlu0 %v2213, 64
    %v2546 = vpop.permute.xlu0 %2545
    %2547 = vrot.lane.b32.xlu0 %v2214, 64
    %v2548 = vpop.permute.xlu0 %2547
    %v2550 = vsel %vm558, %v2546, 0
    %v2553 = vsel %vm558, %v2548, 0
    %2555 = vmatprep.subr.bf16.mxu0 0
    %2556 = vmatpush1.bf16.xpose.msra.mxu0 %v2553
    %2557 = vmatprep.subr.bf16.mxu0 0
    %2558 = vmatpush1.bf16.xpose.msra.mxu0 0
    %2559 = vmatprep.subr.bf16.mxu0 0
    %2560 = vmatpush1.bf16.xpose.msra.mxu0 0
    %2561 = vmatprep.subr.bf16.mxu0 0
    %2562 = vmatpush1.bf16.xpose.msra.mxu0 0
    %2563 = vmatprep.subr.bf16.mxu0 0
    %2564 = vmatpush1.bf16.xpose.msra.mxu0 0
    %2565 = vmatprep.subr.bf16.mxu0 0
    %2566 = vmatpush1.bf16.xpose.msra.mxu0 0
    %2567 = vmatprep.subr.bf16.mxu0 0
    %2568 = vmatpush1.bf16.xpose.msra.mxu0 0
    %2569 = vmatprep.subr.bf16.mxu0 0
    %2570 = vmatpush1.bf16.xpose.msra.mxu0 0
    %2571 = vmatprep.subr.bf16.mxu0 0
    %2572 = vmatpush1.bf16.xpose.msra.mxu0 0
    %2573 = vmatprep.subr.bf16.mxu0 0
    %2574 = vmatpush1.bf16.xpose.msra.mxu0 0
    %2575 = vmatprep.subr.bf16.mxu0 0
    %2576 = vmatpush1.bf16.xpose.msra.mxu0 0
    %2577 = vmatprep.subr.bf16.mxu0 0
    %2578 = vmatpush1.bf16.xpose.msra.mxu0 0
    %2579 = vmatprep.subr.bf16.mxu0 0
    %2580 = vmatpush1.bf16.xpose.msra.mxu0 0
    %2581 = vmatprep.subr.bf16.mxu0 0
    %2582 = vmatpush1.bf16.xpose.msra.mxu0 0
    %2583 = vmatprep.subr.bf16.mxu0 0
    %2584 = vmatpush1.bf16.xpose.msra.mxu0 0
    %2585 = vmatprep.subr.bf16.mxu0 0
    %2586 = vmatpush1.bf16.xpose.msra.mxu0 0
    %2587 = vmatprep.mubr.bf16.mxu0 0
    %2588 = vmatmul.mubr.bf16.gmra.mrb[0].mxu0 %v2550
    %v2589 = vpop.f32.mrb[0].mxu0
    %v2590 = vadd.f32 0.0, %v2589
    %v2591 = vpop.f32.mrb[0].mxu0
    %v2592 = vpop.f32.mrb[0].mxu0
    %v2593 = vpop.f32.mrb[0].mxu0
    %2594 = vdwg.mxu0
    %v2595 = vmul.f32 %v2590, 0.17677669
    %v2596 = vadd.f32 %v2595, %v2195
    %v2597 = vsel %vm2264, %v2596, -inf
    %2598 = vmax.xlane.f32.xlu0 %v2597
    %v2599 = vpop.xlane.xlu0 %2598
    %v2600 = vsub.f32 %v2596, %v2599
    %v2601 = vmul.f32 %v2600, 1.442695
    %v2602 = vpow.pop %v2601
    %v2603 = vsel %vm2264, %v2602, 0.0
    %2604 = vadd.xlane.f32.xlu0 %v2603
    %v2605 = vpop.xlane.xlu0 %2604
    %v2606 = vrcp.pop %v2605
    %v2607 = vmul.f32 %v2602, %v2606
    %v2608 = vpack.c.bf16 %v2607, %v2607
    %2609 = vrot.lane.b32.xlu0 %v2215, 64
    %v2610 = vpop.permute.xlu0 %2609
    %v2613 = vsel %vm2264, %v2608, 0
    %2615 = vmatprep.subr.bf16.mxu0 0
    %2616 = vmatpush1.bf16.msra.mxu0 %v2610
    %2617 = vmatprep.subr.bf16.mxu0 0
    %2618 = vmatpush1.bf16.msra.mxu0 0
    %2619 = vmatprep.subr.bf16.mxu0 0
    %2620 = vmatpush1.bf16.msra.mxu0 0
    %2621 = vmatprep.subr.bf16.mxu0 0
    %2622 = vmatpush1.bf16.msra.mxu0 0
    %2623 = vmatprep.subr.bf16.mxu0 0
    %2624 = vmatpush1.bf16.msra.mxu0 0
    %2625 = vmatprep.subr.bf16.mxu0 0
    %2626 = vmatpush1.bf16.msra.mxu0 0
    %2627 = vmatprep.subr.bf16.mxu0 0
    %2628 = vmatpush1.bf16.msra.mxu0 0
    %2629 = vmatprep.subr.bf16.mxu0 0
    %2630 = vmatpush1.bf16.msra.mxu0 0
    %2631 = vmatprep.subr.bf16.mxu0 0
    %2632 = vmatpush1.bf16.msra.mxu0 0
    %2633 = vmatprep.subr.bf16.mxu0 0
    %2634 = vmatpush1.bf16.msra.mxu0 0
    %2635 = vmatprep.subr.bf16.mxu0 0
    %2636 = vmatpush1.bf16.msra.mxu0 0
    %2637 = vmatprep.subr.bf16.mxu0 0
    %2638 = vmatpush1.bf16.msra.mxu0 0
    %2639 = vmatprep.subr.bf16.mxu0 0
    %2640 = vmatpush1.bf16.msra.mxu0 0
    %2641 = vmatprep.subr.bf16.mxu0 0
    %2642 = vmatpush1.bf16.msra.mxu0 0
    %2643 = vmatprep.subr.bf16.mxu0 0
    %2644 = vmatpush1.bf16.msra.mxu0 0
    %2645 = vmatprep.subr.bf16.mxu0 0
    %2646 = vmatpush1.bf16.msra.mxu0 0
    %2647 = vmatprep.mubr.bf16.mxu0 0
    %2648 = vmatmul.mubr.bf16.gmra.mrb[0].mxu0 %v2613
    %v2649 = vpop.f32.mrb[0].mxu0
    %v2650 = vadd.f32 0.0, %v2649
    %v2651 = vpop.f32.mrb[0].mxu0
    %v2652 = vpop.f32.mrb[0].mxu0
    %v2653 = vpop.f32.mrb[0].mxu0
    %2654 = vdwg.mxu0
    %v2655 = vpack.c.bf16 %v2650, %v2650
    %v2660 = vunpack.c.l.b16 %v2205
    %v2661 = vunpack.c.l.b16 %v2206
    %v2662 = vunpack.c.l.b16 %v2207
    %v2663 = vunpack.c.l.b16 %v2208
    %v2664 = vpack.c.b16 %v2661, %v2660
    %v2665 = vpack.c.b16 %v2663, %v2662
    %v2669 = vsel %vm558, %v2655, 0
    %2671 = vmatprep.subr.bf16.mxu0 0
    %2672 = vmatpush1.bf16.msra.mxu0 %v2664
    %2673 = vmatprep.subr.bf16.mxu0 0
    %2674 = vmatpush1.bf16.msra.mxu0 %v2665
    %2675 = vmatprep.subr.bf16.mxu0 0
    %2676 = vmatpush1.bf16.msra.mxu0 0
    %2677 = vmatprep.subr.bf16.mxu0 0
    %2678 = vmatpush1.bf16.msra.mxu0 0
    %2679 = vmatprep.subr.bf16.mxu0 0
    %2680 = vmatpush1.bf16.msra.mxu0 0
    %2681 = vmatprep.subr.bf16.mxu0 0
    %2682 = vmatpush1.bf16.msra.mxu0 0
    %2683 = vmatprep.subr.bf16.mxu0 0
    %2684 = vmatpush1.bf16.msra.mxu0 0
    %2685 = vmatprep.subr.bf16.mxu0 0
    %2686 = vmatpush1.bf16.msra.mxu0 0
    %2687 = vmatprep.subr.bf16.mxu0 0
    %2688 = vmatpush1.bf16.msra.mxu0 0
    %2689 = vmatprep.subr.bf16.mxu0 0
    %2690 = vmatpush1.bf16.msra.mxu0 0
    %2691 = vmatprep.subr.bf16.mxu0 0
    %2692 = vmatpush1.bf16.msra.mxu0 0
    %2693 = vmatprep.subr.bf16.mxu0 0
    %2694 = vmatpush1.bf16.msra.mxu0 0
    %2695 = vmatprep.subr.bf16.mxu0 0
    %2696 = vmatpush1.bf16.msra.mxu0 0
    %2697 = vmatprep.subr.bf16.mxu0 0
    %2698 = vmatpush1.bf16.msra.mxu0 0
    %2699 = vmatprep.subr.bf16.mxu0 0
    %2700 = vmatpush1.bf16.msra.mxu0 0
    %2701 = vmatprep.subr.bf16.mxu0 0
    %2702 = vmatpush1.bf16.msra.mxu0 0
    %2703 = vmatprep.mubr.bf16.mxu0 0
    %2704 = vmatmul.mubr.bf16.gmra.mrb[0].mxu0 %v2669
    %v2705 = vpop.f32.mrb[0].mxu0
    %v2706 = vadd.f32 0.0, %v2705
    %v2707 = vpop.f32.mrb[0].mxu0
    %v2708 = vpop.f32.mrb[0].mxu0
    %v2709 = vpop.f32.mrb[0].mxu0
    %2710 = vdwg.mxu0
    %v2711 = vadd.f32 %v2540, %v2706
    %2712 = vrot.lane.b32.xlu0 %v2213, 32
    %v2713 = vpop.permute.xlu0 %2712
    %2714 = vrot.lane.b32.xlu0 %v2214, 32
    %v2715 = vpop.permute.xlu0 %2714
    %v2717 = vsel %vm558, %v2713, 0
    %v2720 = vsel %vm558, %v2715, 0
    %2722 = vmatprep.subr.bf16.mxu0 0
    %2723 = vmatpush1.bf16.xpose.msra.mxu0 %v2720
    %2724 = vmatprep.subr.bf16.mxu0 0
    %2725 = vmatpush1.bf16.xpose.msra.mxu0 0
    %2726 = vmatprep.subr.bf16.mxu0 0
    %2727 = vmatpush1.bf16.xpose.msra.mxu0 0
    %2728 = vmatprep.subr.bf16.mxu0 0
    %2729 = vmatpush1.bf16.xpose.msra.mxu0 0
    %2730 = vmatprep.subr.bf16.mxu0 0
    %2731 = vmatpush1.bf16.xpose.msra.mxu0 0
    %2732 = vmatprep.subr.bf16.mxu0 0
    %2733 = vmatpush1.bf16.xpose.msra.mxu0 0
    %2734 = vmatprep.subr.bf16.mxu0 0
    %2735 = vmatpush1.bf16.xpose.msra.mxu0 0
    %2736 = vmatprep.subr.bf16.mxu0 0
    %2737 = vmatpush1.bf16.xpose.msra.mxu0 0
    %2738 = vmatprep.subr.bf16.mxu0 0
    %2739 = vmatpush1.bf16.xpose.msra.mxu0 0
    %2740 = vmatprep.subr.bf16.mxu0 0
    %2741 = vmatpush1.bf16.xpose.msra.mxu0 0
    %2742 = vmatprep.subr.bf16.mxu0 0
    %2743 = vmatpush1.bf16.xpose.msra.mxu0 0
    %2744 = vmatprep.subr.bf16.mxu0 0
    %2745 = vmatpush1.bf16.xpose.msra.mxu0 0
    %2746 = vmatprep.subr.bf16.mxu0 0
    %2747 = vmatpush1.bf16.xpose.msra.mxu0 0
    %2748 = vmatprep.subr.bf16.mxu0 0
    %2749 = vmatpush1.bf16.xpose.msra.mxu0 0
    %2750 = vmatprep.subr.bf16.mxu0 0
    %2751 = vmatpush1.bf16.xpose.msra.mxu0 0
    %2752 = vmatprep.subr.bf16.mxu0 0
    %2753 = vmatpush1.bf16.xpose.msra.mxu0 0
    %2754 = vmatprep.mubr.bf16.mxu0 0
    %2755 = vmatmul.mubr.bf16.gmra.mrb[0].mxu0 %v2717
    %v2756 = vpop.f32.mrb[0].mxu0
    %v2757 = vadd.f32 0.0, %v2756
    %v2758 = vpop.f32.mrb[0].mxu0
    %v2759 = vpop.f32.mrb[0].mxu0
    %v2760 = vpop.f32.mrb[0].mxu0
    %2761 = vdwg.mxu0
    %v2762 = vmul.f32 %v2757, 0.17677669
    %v2763 = vadd.f32 %v2762, %v2195
    %v2764 = vsel %vm2264, %v2763, -inf
    %2765 = vmax.xlane.f32.xlu0 %v2764
    %v2766 = vpop.xlane.xlu0 %2765
    %v2767 = vsub.f32 %v2763, %v2766
    %v2768 = vmul.f32 %v2767, 1.442695
    %v2769 = vpow.pop %v2768
    %v2770 = vsel %vm2264, %v2769, 0.0
    %2771 = vadd.xlane.f32.xlu0 %v2770
    %v2772 = vpop.xlane.xlu0 %2771
    %v2773 = vrcp.pop %v2772
    %v2774 = vmul.f32 %v2769, %v2773
    %v2775 = vpack.c.bf16 %v2774, %v2774
    %2776 = vrot.lane.b32.xlu0 %v2215, 32
    %v2777 = vpop.permute.xlu0 %2776
    %v2780 = vsel %vm2264, %v2775, 0
    %2782 = vmatprep.subr.bf16.mxu0 0
    %2783 = vmatpush1.bf16.msra.mxu0 %v2777
    %2784 = vmatprep.subr.bf16.mxu0 0
    %2785 = vmatpush1.bf16.msra.mxu0 0
    %2786 = vmatprep.subr.bf16.mxu0 0
    %2787 = vmatpush1.bf16.msra.mxu0 0
    %2788 = vmatprep.subr.bf16.mxu0 0
    %2789 = vmatpush1.bf16.msra.mxu0 0
    %2790 = vmatprep.subr.bf16.mxu0 0
    %2791 = vmatpush1.bf16.msra.mxu0 0
    %2792 = vmatprep.subr.bf16.mxu0 0
    %2793 = vmatpush1.bf16.msra.mxu0 0
    %2794 = vmatprep.subr.bf16.mxu0 0
    %2795 = vmatpush1.bf16.msra.mxu0 0
    %2796 = vmatprep.subr.bf16.mxu0 0
    %2797 = vmatpush1.bf16.msra.mxu0 0
    %2798 = vmatprep.subr.bf16.mxu0 0
    %2799 = vmatpush1.bf16.msra.mxu0 0
    %2800 = vmatprep.subr.bf16.mxu0 0
    %2801 = vmatpush1.bf16.msra.mxu0 0
    %2802 = vmatprep.subr.bf16.mxu0 0
    %2803 = vmatpush1.bf16.msra.mxu0 0
    %2804 = vmatprep.subr.bf16.mxu0 0
    %2805 = vmatpush1.bf16.msra.mxu0 0
    %2806 = vmatprep.subr.bf16.mxu0 0
    %2807 = vmatpush1.bf16.msra.mxu0 0
    %2808 = vmatprep.subr.bf16.mxu0 0
    %2809 = vmatpush1.bf16.msra.mxu0 0
    %2810 = vmatprep.subr.bf16.mxu0 0
    %2811 = vmatpush1.bf16.msra.mxu0 0
    %2812 = vmatprep.subr.bf16.mxu0 0
    %2813 = vmatpush1.bf16.msra.mxu0 0
    %2814 = vmatprep.mubr.bf16.mxu0 0
    %2815 = vmatmul.mubr.bf16.gmra.mrb[0].mxu0 %v2780
    %v2816 = vpop.f32.mrb[0].mxu0
    %v2817 = vadd.f32 0.0, %v2816
    %v2818 = vpop.f32.mrb[0].mxu0
    %v2819 = vpop.f32.mrb[0].mxu0
    %v2820 = vpop.f32.mrb[0].mxu0
    %2821 = vdwg.mxu0
    %v2822 = vpack.c.bf16 %v2817, %v2817
    %v2827 = vunpack.c.l.b16 %v2209
    %v2828 = vunpack.c.l.b16 %v2210
    %v2829 = vunpack.c.l.b16 %v2211
    %v2830 = vunpack.c.l.b16 %v2212
    %v2831 = vpack.c.b16 %v2828, %v2827
    %v2832 = vpack.c.b16 %v2830, %v2829
    %v2836 = vsel %vm558, %v2822, 0
    %2838 = vmatprep.subr.bf16.mxu0 0
    %2839 = vmatpush1.bf16.msra.mxu0 %v2831
    %2840 = vmatprep.subr.bf16.mxu0 0
    %2841 = vmatpush1.bf16.msra.mxu0 %v2832
    %2842 = vmatprep.subr.bf16.mxu0 0
    %2843 = vmatpush1.bf16.msra.mxu0 0
    %2844 = vmatprep.subr.bf16.mxu0 0
    %2845 = vmatpush1.bf16.msra.mxu0 0
    %2846 = vmatprep.subr.bf16.mxu0 0
    %2847 = vmatpush1.bf16.msra.mxu0 0
    %2848 = vmatprep.subr.bf16.mxu0 0
    %2849 = vmatpush1.bf16.msra.mxu0 0
    %2850 = vmatprep.subr.bf16.mxu0 0
    %2851 = vmatpush1.bf16.msra.mxu0 0
    %2852 = vmatprep.subr.bf16.mxu0 0
    %2853 = vmatpush1.bf16.msra.mxu0 0
    %2854 = vmatprep.subr.bf16.mxu0 0
    %2855 = vmatpush1.bf16.msra.mxu0 0
    %2856 = vmatprep.subr.bf16.mxu0 0
    %2857 = vmatpush1.bf16.msra.mxu0 0
    %2858 = vmatprep.subr.bf16.mxu0 0
    %2859 = vmatpush1.bf16.msra.mxu0 0
    %2860 = vmatprep.subr.bf16.mxu0 0
    %2861 = vmatpush1.bf16.msra.mxu0 0
    %2862 = vmatprep.subr.bf16.mxu0 0
    %2863 = vmatpush1.bf16.msra.mxu0 0
    %2864 = vmatprep.subr.bf16.mxu0 0
    %2865 = vmatpush1.bf16.msra.mxu0 0
    %2866 = vmatprep.subr.bf16.mxu0 0
    %2867 = vmatpush1.bf16.msra.mxu0 0
    %2868 = vmatprep.subr.bf16.mxu0 0
    %2869 = vmatpush1.bf16.msra.mxu0 0
    %2870 = vmatprep.mubr.bf16.mxu0 0
    %2871 = vmatmul.mubr.bf16.gmra.mrb[0].mxu0 %v2836
    %v2872 = vpop.f32.mrb[0].mxu0
    %v2873 = vadd.f32 0.0, %v2872
    %v2874 = vpop.f32.mrb[0].mxu0
    %v2875 = vpop.f32.mrb[0].mxu0
    %v2876 = vpop.f32.mrb[0].mxu0
    %2877 = vdwg.mxu0
    %v2878 = vadd.f32 %v2711, %v2873
    %v2879 = vpack.c.bf16 %v2019, %v2019
    %v2880 = vpack.c.bf16 %v2191, %v2187
    %v2881 = vpack.c.bf16 %v2193, %v2189
    %v2883 = vsel %vm558, %v2879, 0
    %v2886 = vsel %vm558, %v2880, 0
    %2888 = vmatprep.subr.bf16.mxu0 0
    %2889 = vmatpush1.bf16.xpose.msra.mxu0 %v2886
    %2890 = vmatprep.subr.bf16.mxu0 0
    %2891 = vmatpush1.bf16.xpose.msra.mxu0 0
    %2892 = vmatprep.subr.bf16.mxu0 0
    %2893 = vmatpush1.bf16.xpose.msra.mxu0 0
    %2894 = vmatprep.subr.bf16.mxu0 0
    %2895 = vmatpush1.bf16.xpose.msra.mxu0 0
    %2896 = vmatprep.subr.bf16.mxu0 0
    %2897 = vmatpush1.bf16.xpose.msra.mxu0 0
    %2898 = vmatprep.subr.bf16.mxu0 0
    %2899 = vmatpush1.bf16.xpose.msra.mxu0 0
    %2900 = vmatprep.subr.bf16.mxu0 0
    %2901 = vmatpush1.bf16.xpose.msra.mxu0 0
    %2902 = vmatprep.subr.bf16.mxu0 0
    %2903 = vmatpush1.bf16.xpose.msra.mxu0 0
    %2904 = vmatprep.subr.bf16.mxu0 0
    %2905 = vmatpush1.bf16.xpose.msra.mxu0 0
    %2906 = vmatprep.subr.bf16.mxu0 0
    %2907 = vmatpush1.bf16.xpose.msra.mxu0 0
    %2908 = vmatprep.subr.bf16.mxu0 0
    %2909 = vmatpush1.bf16.xpose.msra.mxu0 0
    %2910 = vmatprep.subr.bf16.mxu0 0
    %2911 = vmatpush1.bf16.xpose.msra.mxu0 0
    %2912 = vmatprep.subr.bf16.mxu0 0
    %2913 = vmatpush1.bf16.xpose.msra.mxu0 0
    %2914 = vmatprep.subr.bf16.mxu0 0
    %2915 = vmatpush1.bf16.xpose.msra.mxu0 0
    %2916 = vmatprep.subr.bf16.mxu0 0
    %2917 = vmatpush1.bf16.xpose.msra.mxu0 0
    %2918 = vmatprep.subr.bf16.mxu0 0
    %2919 = vmatpush1.bf16.xpose.msra.mxu0 0
    %2920 = vmatprep.mubr.bf16.mxu0 0
    %2921 = vmatmul.mubr.bf16.gmra.mrb[0].mxu0 %v2883
    %v2922 = vpop.f32.mrb[0].mxu0
    %v2923 = vadd.f32 0.0, %v2922
    %v2924 = vpop.f32.mrb[0].mxu0
    %v2925 = vpop.f32.mrb[0].mxu0
    %v2926 = vpop.f32.mrb[0].mxu0
    %2927 = vdwg.mxu0
    %v2928 = vmul.f32 %v2923, 0.17677669
    %v2929 = vadd.f32 %v2928, %v2196
    %v2930 = vsel %vm2264, %v2929, -inf
    %2931 = vmax.xlane.f32.xlu0 %v2930
    %v2932 = vpop.xlane.xlu0 %2931
    %v2933 = vsub.f32 %v2929, %v2932
    %v2934 = vmul.f32 %v2933, 1.442695
    %v2935 = vpow.pop %v2934
    %v2936 = vsel %vm2264, %v2935, 0.0
    %2937 = vadd.xlane.f32.xlu0 %v2936
    %v2938 = vpop.xlane.xlu0 %2937
    %v2939 = vrcp.pop %v2938
    %v2940 = vmul.f32 %v2935, %v2939
    %v2941 = vpack.c.bf16 %v2940, %v2940
    %v2943 = vsel %vm2264, %v2941, 0
    %2945 = vmatprep.subr.bf16.mxu0 0
    %2946 = vmatpush1.bf16.msra.mxu0 %v2881
    %2947 = vmatprep.subr.bf16.mxu0 0
    %2948 = vmatpush1.bf16.msra.mxu0 0
    %2949 = vmatprep.subr.bf16.mxu0 0
    %2950 = vmatpush1.bf16.msra.mxu0 0
    %2951 = vmatprep.subr.bf16.mxu0 0
    %2952 = vmatpush1.bf16.msra.mxu0 0
    %2953 = vmatprep.subr.bf16.mxu0 0
    %2954 = vmatpush1.bf16.msra.mxu0 0
    %2955 = vmatprep.subr.bf16.mxu0 0
    %2956 = vmatpush1.bf16.msra.mxu0 0
    %2957 = vmatprep.subr.bf16.mxu0 0
    %2958 = vmatpush1.bf16.msra.mxu0 0
    %2959 = vmatprep.subr.bf16.mxu0 0
    %2960 = vmatpush1.bf16.msra.mxu0 0
    %2961 = vmatprep.subr.bf16.mxu0 0
    %2962 = vmatpush1.bf16.msra.mxu0 0
    %2963 = vmatprep.subr.bf16.mxu0 0
    %2964 = vmatpush1.bf16.msra.mxu0 0
    %2965 = vmatprep.subr.bf16.mxu0 0
    %2966 = vmatpush1.bf16.msra.mxu0 0
    %2967 = vmatprep.subr.bf16.mxu0 0
    %2968 = vmatpush1.bf16.msra.mxu0 0
    %2969 = vmatprep.subr.bf16.mxu0 0
    %2970 = vmatpush1.bf16.msra.mxu0 0
    %2971 = vmatprep.subr.bf16.mxu0 0
    %2972 = vmatpush1.bf16.msra.mxu0 0
    %2973 = vmatprep.subr.bf16.mxu0 0
    %2974 = vmatpush1.bf16.msra.mxu0 0
    %2975 = vmatprep.subr.bf16.mxu0 0
    %2976 = vmatpush1.bf16.msra.mxu0 0
    %2977 = vmatprep.mubr.bf16.mxu0 0
    %2978 = vmatmul.mubr.bf16.gmra.mrb[0].mxu0 %v2943
    %v2979 = vpop.f32.mrb[0].mxu0
    %v2980 = vadd.f32 0.0, %v2979
    %v2981 = vpop.f32.mrb[0].mxu0
    %v2982 = vpop.f32.mrb[0].mxu0
    %v2983 = vpop.f32.mrb[0].mxu0
    %2984 = vdwg.mxu0
    %v2985 = vpack.c.bf16 %v2980, %v2980
    %2987 = vrot.lane.b32.xlu0 %v2879, 96
    %v2988 = vpop.permute.xlu0 %2987
    %2990 = vrot.lane.b32.xlu0 %v2880, 96
    %v2991 = vpop.permute.xlu0 %2990
    %v2993 = vsel %vm558, %v2988, 0
    %v2996 = vsel %vm558, %v2991, 0
    %2998 = vmatprep.subr.bf16.mxu0 0
    %2999 = vmatpush1.bf16.xpose.msra.mxu0 %v2996
    %3000 = vmatprep.subr.bf16.mxu0 0
    %3001 = vmatpush1.bf16.xpose.msra.mxu0 0
    %3002 = vmatprep.subr.bf16.mxu0 0
    %3003 = vmatpush1.bf16.xpose.msra.mxu0 0
    %3004 = vmatprep.subr.bf16.mxu0 0
    %3005 = vmatpush1.bf16.xpose.msra.mxu0 0
    %3006 = vmatprep.subr.bf16.mxu0 0
    %3007 = vmatpush1.bf16.xpose.msra.mxu0 0
    %3008 = vmatprep.subr.bf16.mxu0 0
    %3009 = vmatpush1.bf16.xpose.msra.mxu0 0
    %3010 = vmatprep.subr.bf16.mxu0 0
    %3011 = vmatpush1.bf16.xpose.msra.mxu0 0
    %3012 = vmatprep.subr.bf16.mxu0 0
    %3013 = vmatpush1.bf16.xpose.msra.mxu0 0
    %3014 = vmatprep.subr.bf16.mxu0 0
    %3015 = vmatpush1.bf16.xpose.msra.mxu0 0
    %3016 = vmatprep.subr.bf16.mxu0 0
    %3017 = vmatpush1.bf16.xpose.msra.mxu0 0
    %3018 = vmatprep.subr.bf16.mxu0 0
    %3019 = vmatpush1.bf16.xpose.msra.mxu0 0
    %3020 = vmatprep.subr.bf16.mxu0 0
    %3021 = vmatpush1.bf16.xpose.msra.mxu0 0
    %3022 = vmatprep.subr.bf16.mxu0 0
    %3023 = vmatpush1.bf16.xpose.msra.mxu0 0
    %3024 = vmatprep.subr.bf16.mxu0 0
    %3025 = vmatpush1.bf16.xpose.msra.mxu0 0
    %3026 = vmatprep.subr.bf16.mxu0 0
    %3027 = vmatpush1.bf16.xpose.msra.mxu0 0
    %3028 = vmatprep.subr.bf16.mxu0 0
    %3029 = vmatpush1.bf16.xpose.msra.mxu0 0
    %3030 = vmatprep.mubr.bf16.mxu0 0
    %3031 = vmatmul.mubr.bf16.gmra.mrb[0].mxu0 %v2993
    %v3032 = vpop.f32.mrb[0].mxu0
    %v3033 = vadd.f32 0.0, %v3032
    %v3034 = vpop.f32.mrb[0].mxu0
    %v3035 = vpop.f32.mrb[0].mxu0
    %v3036 = vpop.f32.mrb[0].mxu0
    %3037 = vdwg.mxu0
    %v3038 = vmul.f32 %v3033, 0.17677669
    %v3039 = vadd.f32 %v3038, %v2196
    %v3040 = vsel %vm2264, %v3039, -inf
    %3041 = vmax.xlane.f32.xlu0 %v3040
    %v3042 = vpop.xlane.xlu0 %3041
    %v3043 = vsub.f32 %v3039, %v3042
    %v3044 = vmul.f32 %v3043, 1.442695
    %v3045 = vpow.pop %v3044
    %v3046 = vsel %vm2264, %v3045, 0.0
    %3047 = vadd.xlane.f32.xlu0 %v3046
    %v3048 = vpop.xlane.xlu0 %3047
    %v3049 = vrcp.pop %v3048
    %v3050 = vmul.f32 %v3045, %v3049
    %v3051 = vpack.c.bf16 %v3050, %v3050
    %3053 = vrot.lane.b32.xlu0 %v2881, 96
    %v3054 = vpop.permute.xlu0 %3053
    %v3057 = vsel %vm2264, %v3051, 0
    %3059 = vmatprep.subr.bf16.mxu0 0
    %3060 = vmatpush1.bf16.msra.mxu0 %v3054
    %3061 = vmatprep.subr.bf16.mxu0 0
    %3062 = vmatpush1.bf16.msra.mxu0 0
    %3063 = vmatprep.subr.bf16.mxu0 0
    %3064 = vmatpush1.bf16.msra.mxu0 0
    %3065 = vmatprep.subr.bf16.mxu0 0
    %3066 = vmatpush1.bf16.msra.mxu0 0
    %3067 = vmatprep.subr.bf16.mxu0 0
    %3068 = vmatpush1.bf16.msra.mxu0 0
    %3069 = vmatprep.subr.bf16.mxu0 0
    %3070 = vmatpush1.bf16.msra.mxu0 0
    %3071 = vmatprep.subr.bf16.mxu0 0
    %3072 = vmatpush1.bf16.msra.mxu0 0
    %3073 = vmatprep.subr.bf16.mxu0 0
    %3074 = vmatpush1.bf16.msra.mxu0 0
    %3075 = vmatprep.subr.bf16.mxu0 0
    %3076 = vmatpush1.bf16.msra.mxu0 0
    %3077 = vmatprep.subr.bf16.mxu0 0
    %3078 = vmatpush1.bf16.msra.mxu0 0
    %3079 = vmatprep.subr.bf16.mxu0 0
    %3080 = vmatpush1.bf16.msra.mxu0 0
    %3081 = vmatprep.subr.bf16.mxu0 0
    %3082 = vmatpush1.bf16.msra.mxu0 0
    %3083 = vmatprep.subr.bf16.mxu0 0
    %3084 = vmatpush1.bf16.msra.mxu0 0
    %3085 = vmatprep.subr.bf16.mxu0 0
    %3086 = vmatpush1.bf16.msra.mxu0 0
    %3087 = vmatprep.subr.bf16.mxu0 0
    %3088 = vmatpush1.bf16.msra.mxu0 0
    %3089 = vmatprep.subr.bf16.mxu0 0
    %3090 = vmatpush1.bf16.msra.mxu0 0
    %3091 = vmatprep.mubr.bf16.mxu0 0
    %3092 = vmatmul.mubr.bf16.gmra.mrb[0].mxu0 %v3057
    %v3093 = vpop.f32.mrb[0].mxu0
    %v3094 = vadd.f32 0.0, %v3093
    %v3095 = vpop.f32.mrb[0].mxu0
    %v3096 = vpop.f32.mrb[0].mxu0
    %v3097 = vpop.f32.mrb[0].mxu0
    %3098 = vdwg.mxu0
    %v3099 = vpack.c.bf16 %v3094, %v3094
    %v3101 = vsel %vm558, %v3099, 0
    %3103 = vmatprep.subr.bf16.mxu0 0
    %3104 = vmatpush1.bf16.msra.mxu0 %v2443
    %3105 = vmatprep.subr.bf16.mxu0 0
    %3106 = vmatpush1.bf16.msra.mxu0 %v2444
    %3107 = vmatprep.subr.bf16.mxu0 0
    %3108 = vmatpush1.bf16.msra.mxu0 0
    %3109 = vmatprep.subr.bf16.mxu0 0
    %3110 = vmatpush1.bf16.msra.mxu0 0
    %3111 = vmatprep.subr.bf16.mxu0 0
    %3112 = vmatpush1.bf16.msra.mxu0 0
    %3113 = vmatprep.subr.bf16.mxu0 0
    %3114 = vmatpush1.bf16.msra.mxu0 0
    %3115 = vmatprep.subr.bf16.mxu0 0
    %3116 = vmatpush1.bf16.msra.mxu0 0
    %3117 = vmatprep.subr.bf16.mxu0 0
    %3118 = vmatpush1.bf16.msra.mxu0 0
    %3119 = vmatprep.subr.bf16.mxu0 0
    %3120 = vmatpush1.bf16.msra.mxu0 0
    %3121 = vmatprep.subr.bf16.mxu0 0
    %3122 = vmatpush1.bf16.msra.mxu0 0
    %3123 = vmatprep.subr.bf16.mxu0 0
    %3124 = vmatpush1.bf16.msra.mxu0 0
    %3125 = vmatprep.subr.bf16.mxu0 0
    %3126 = vmatpush1.bf16.msra.mxu0 0
    %3127 = vmatprep.subr.bf16.mxu0 0
    %3128 = vmatpush1.bf16.msra.mxu0 0
    %3129 = vmatprep.subr.bf16.mxu0 0
    %3130 = vmatpush1.bf16.msra.mxu0 0
    %3131 = vmatprep.subr.bf16.mxu0 0
    %3132 = vmatpush1.bf16.msra.mxu0 0
    %3133 = vmatprep.subr.bf16.mxu0 0
    %3134 = vmatpush1.bf16.msra.mxu0 0
    %3135 = vmatprep.mubr.bf16.mxu0 0
    %3136 = vmatmul.mubr.bf16.gmra.mrb[0].mxu0 %v3101
    %v3137 = vpop.f32.mrb[0].mxu0
    %v3138 = vadd.f32 0.0, %v3137
    %v3139 = vpop.f32.mrb[0].mxu0
    %v3140 = vpop.f32.mrb[0].mxu0
    %v3141 = vpop.f32.mrb[0].mxu0
    %3142 = vdwg.mxu0
    %v3144 = vsel %vm558, %v2985, 0
    %3146 = vmatprep.subr.bf16.mxu0 0
    %3147 = vmatpush1.bf16.msra.mxu0 %v2498
    %3148 = vmatprep.subr.bf16.mxu0 0
    %3149 = vmatpush1.bf16.msra.mxu0 %v2499
    %3150 = vmatprep.subr.bf16.mxu0 0
    %3151 = vmatpush1.bf16.msra.mxu0 0
    %3152 = vmatprep.subr.bf16.mxu0 0
    %3153 = vmatpush1.bf16.msra.mxu0 0
    %3154 = vmatprep.subr.bf16.mxu0 0
    %3155 = vmatpush1.bf16.msra.mxu0 0
    %3156 = vmatprep.subr.bf16.mxu0 0
    %3157 = vmatpush1.bf16.msra.mxu0 0
    %3158 = vmatprep.subr.bf16.mxu0 0
    %3159 = vmatpush1.bf16.msra.mxu0 0
    %3160 = vmatprep.subr.bf16.mxu0 0
    %3161 = vmatpush1.bf16.msra.mxu0 0
    %3162 = vmatprep.subr.bf16.mxu0 0
    %3163 = vmatpush1.bf16.msra.mxu0 0
    %3164 = vmatprep.subr.bf16.mxu0 0
    %3165 = vmatpush1.bf16.msra.mxu0 0
    %3166 = vmatprep.subr.bf16.mxu0 0
    %3167 = vmatpush1.bf16.msra.mxu0 0
    %3168 = vmatprep.subr.bf16.mxu0 0
    %3169 = vmatpush1.bf16.msra.mxu0 0
    %3170 = vmatprep.subr.bf16.mxu0 0
    %3171 = vmatpush1.bf16.msra.mxu0 0
    %3172 = vmatprep.subr.bf16.mxu0 0
    %3173 = vmatpush1.bf16.msra.mxu0 0
    %3174 = vmatprep.subr.bf16.mxu0 0
    %3175 = vmatpush1.bf16.msra.mxu0 0
    %3176 = vmatprep.subr.bf16.mxu0 0
    %3177 = vmatpush1.bf16.msra.mxu0 0
    %3178 = vmatprep.mubr.bf16.mxu0 0
    %3179 = vmatmul.mubr.bf16.gmra.mrb[0].mxu0 %v3144
    %v3180 = vpop.f32.mrb[0].mxu0
    %v3181 = vadd.f32 %v3138, %v3180
    %v3182 = vpop.f32.mrb[0].mxu0
    %v3183 = vpop.f32.mrb[0].mxu0
    %v3184 = vpop.f32.mrb[0].mxu0
    %3185 = vdwg.mxu0
    %3186 = vrot.lane.b32.xlu0 %v2879, 64
    %v3187 = vpop.permute.xlu0 %3186
    %3188 = vrot.lane.b32.xlu0 %v2880, 64
    %v3189 = vpop.permute.xlu0 %3188
    %v3191 = vsel %vm558, %v3187, 0
    %v3194 = vsel %vm558, %v3189, 0
    %3196 = vmatprep.subr.bf16.mxu0 0
    %3197 = vmatpush1.bf16.xpose.msra.mxu0 %v3194
    %3198 = vmatprep.subr.bf16.mxu0 0
    %3199 = vmatpush1.bf16.xpose.msra.mxu0 0
    %3200 = vmatprep.subr.bf16.mxu0 0
    %3201 = vmatpush1.bf16.xpose.msra.mxu0 0
    %3202 = vmatprep.subr.bf16.mxu0 0
    %3203 = vmatpush1.bf16.xpose.msra.mxu0 0
    %3204 = vmatprep.subr.bf16.mxu0 0
    %3205 = vmatpush1.bf16.xpose.msra.mxu0 0
    %3206 = vmatprep.subr.bf16.mxu0 0
    %3207 = vmatpush1.bf16.xpose.msra.mxu0 0
    %3208 = vmatprep.subr.bf16.mxu0 0
    %3209 = vmatpush1.bf16.xpose.msra.mxu0 0
    %3210 = vmatprep.subr.bf16.mxu0 0
    %3211 = vmatpush1.bf16.xpose.msra.mxu0 0
    %3212 = vmatprep.subr.bf16.mxu0 0
    %3213 = vmatpush1.bf16.xpose.msra.mxu0 0
    %3214 = vmatprep.subr.bf16.mxu0 0
    %3215 = vmatpush1.bf16.xpose.msra.mxu0 0
    %3216 = vmatprep.subr.bf16.mxu0 0
    %3217 = vmatpush1.bf16.xpose.msra.mxu0 0
    %3218 = vmatprep.subr.bf16.mxu0 0
    %3219 = vmatpush1.bf16.xpose.msra.mxu0 0
    %3220 = vmatprep.subr.bf16.mxu0 0
    %3221 = vmatpush1.bf16.xpose.msra.mxu0 0
    %3222 = vmatprep.subr.bf16.mxu0 0
    %3223 = vmatpush1.bf16.xpose.msra.mxu0 0
    %3224 = vmatprep.subr.bf16.mxu0 0
    %3225 = vmatpush1.bf16.xpose.msra.mxu0 0
    %3226 = vmatprep.subr.bf16.mxu0 0
    %3227 = vmatpush1.bf16.xpose.msra.mxu0 0
    %3228 = vmatprep.mubr.bf16.mxu0 0
    %3229 = vmatmul.mubr.bf16.gmra.mrb[0].mxu0 %v3191
    %v3230 = vpop.f32.mrb[0].mxu0
    %v3231 = vadd.f32 0.0, %v3230
    %v3232 = vpop.f32.mrb[0].mxu0
    %v3233 = vpop.f32.mrb[0].mxu0
    %v3234 = vpop.f32.mrb[0].mxu0
    %3235 = vdwg.mxu0
    %v3236 = vmul.f32 %v3231, 0.17677669
    %v3237 = vadd.f32 %v3236, %v2196
    %v3238 = vsel %vm2264, %v3237, -inf
    %3239 = vmax.xlane.f32.xlu0 %v3238
    %v3240 = vpop.xlane.xlu0 %3239
    %v3241 = vsub.f32 %v3237, %v3240
    %v3242 = vmul.f32 %v3241, 1.442695
    %v3243 = vpow.pop %v3242
    %v3244 = vsel %vm2264, %v3243, 0.0
    %3245 = vadd.xlane.f32.xlu0 %v3244
    %v3246 = vpop.xlane.xlu0 %3245
    %v3247 = vrcp.pop %v3246
    %v3248 = vmul.f32 %v3243, %v3247
    %v3249 = vpack.c.bf16 %v3248, %v3248
    %3250 = vrot.lane.b32.xlu0 %v2881, 64
    %v3251 = vpop.permute.xlu0 %3250
    %v3254 = vsel %vm2264, %v3249, 0
    %3256 = vmatprep.subr.bf16.mxu0 0
    %3257 = vmatpush1.bf16.msra.mxu0 %v3251
    %3258 = vmatprep.subr.bf16.mxu0 0
    %3259 = vmatpush1.bf16.msra.mxu0 0
    %3260 = vmatprep.subr.bf16.mxu0 0
    %3261 = vmatpush1.bf16.msra.mxu0 0
    %3262 = vmatprep.subr.bf16.mxu0 0
    %3263 = vmatpush1.bf16.msra.mxu0 0
    %3264 = vmatprep.subr.bf16.mxu0 0
    %3265 = vmatpush1.bf16.msra.mxu0 0
    %3266 = vmatprep.subr.bf16.mxu0 0
    %3267 = vmatpush1.bf16.msra.mxu0 0
    %3268 = vmatprep.subr.bf16.mxu0 0
    %3269 = vmatpush1.bf16.msra.mxu0 0
    %3270 = vmatprep.subr.bf16.mxu0 0
    %3271 = vmatpush1.bf16.msra.mxu0 0
    %3272 = vmatprep.subr.bf16.mxu0 0
    %3273 = vmatpush1.bf16.msra.mxu0 0
    %3274 = vmatprep.subr.bf16.mxu0 0
    %3275 = vmatpush1.bf16.msra.mxu0 0
    %3276 = vmatprep.subr.bf16.mxu0 0
    %3277 = vmatpush1.bf16.msra.mxu0 0
    %3278 = vmatprep.subr.bf16.mxu0 0
    %3279 = vmatpush1.bf16.msra.mxu0 0
    %3280 = vmatprep.subr.bf16.mxu0 0
    %3281 = vmatpush1.bf16.msra.mxu0 0
    %3282 = vmatprep.subr.bf16.mxu0 0
    %3283 = vmatpush1.bf16.msra.mxu0 0
    %3284 = vmatprep.subr.bf16.mxu0 0
    %3285 = vmatpush1.bf16.msra.mxu0 0
    %3286 = vmatprep.subr.bf16.mxu0 0
    %3287 = vmatpush1.bf16.msra.mxu0 0
    %3288 = vmatprep.mubr.bf16.mxu0 0
    %3289 = vmatmul.mubr.bf16.gmra.mrb[0].mxu0 %v3254
    %v3290 = vpop.f32.mrb[0].mxu0
    %v3291 = vadd.f32 0.0, %v3290
    %v3292 = vpop.f32.mrb[0].mxu0
    %v3293 = vpop.f32.mrb[0].mxu0
    %v3294 = vpop.f32.mrb[0].mxu0
    %3295 = vdwg.mxu0
    %v3296 = vpack.c.bf16 %v3291, %v3291
    %v3298 = vsel %vm558, %v3296, 0
    %3300 = vmatprep.subr.bf16.mxu0 0
    %3301 = vmatpush1.bf16.msra.mxu0 %v2664
    %3302 = vmatprep.subr.bf16.mxu0 0
    %3303 = vmatpush1.bf16.msra.mxu0 %v2665
    %3304 = vmatprep.subr.bf16.mxu0 0
    %3305 = vmatpush1.bf16.msra.mxu0 0
    %3306 = vmatprep.subr.bf16.mxu0 0
    %3307 = vmatpush1.bf16.msra.mxu0 0
    %3308 = vmatprep.subr.bf16.mxu0 0
    %3309 = vmatpush1.bf16.msra.mxu0 0
    %3310 = vmatprep.subr.bf16.mxu0 0
    %3311 = vmatpush1.bf16.msra.mxu0 0
    %3312 = vmatprep.subr.bf16.mxu0 0
    %3313 = vmatpush1.bf16.msra.mxu0 0
    %3314 = vmatprep.subr.bf16.mxu0 0
    %3315 = vmatpush1.bf16.msra.mxu0 0
    %3316 = vmatprep.subr.bf16.mxu0 0
    %3317 = vmatpush1.bf16.msra.mxu0 0
    %3318 = vmatprep.subr.bf16.mxu0 0
    %3319 = vmatpush1.bf16.msra.mxu0 0
    %3320 = vmatprep.subr.bf16.mxu0 0
    %3321 = vmatpush1.bf16.msra.mxu0 0
    %3322 = vmatprep.subr.bf16.mxu0 0
    %3323 = vmatpush1.bf16.msra.mxu0 0
    %3324 = vmatprep.subr.bf16.mxu0 0
    %3325 = vmatpush1.bf16.msra.mxu0 0
    %3326 = vmatprep.subr.bf16.mxu0 0
    %3327 = vmatpush1.bf16.msra.mxu0 0
    %3328 = vmatprep.subr.bf16.mxu0 0
    %3329 = vmatpush1.bf16.msra.mxu0 0
    %3330 = vmatprep.subr.bf16.mxu0 0
    %3331 = vmatpush1.bf16.msra.mxu0 0
    %3332 = vmatprep.mubr.bf16.mxu0 0
    %3333 = vmatmul.mubr.bf16.gmra.mrb[0].mxu0 %v3298
    %v3334 = vpop.f32.mrb[0].mxu0
    %v3335 = vadd.f32 0.0, %v3334
    %v3336 = vpop.f32.mrb[0].mxu0
    %v3337 = vpop.f32.mrb[0].mxu0
    %v3338 = vpop.f32.mrb[0].mxu0
    %3339 = vdwg.mxu0
    %v3340 = vadd.f32 %v3181, %v3335
    %3341 = vrot.lane.b32.xlu0 %v2879, 32
    %v3342 = vpop.permute.xlu0 %3341
    %3343 = vrot.lane.b32.xlu0 %v2880, 32
    %v3344 = vpop.permute.xlu0 %3343
    %v3346 = vsel %vm558, %v3342, 0
    %v3349 = vsel %vm558, %v3344, 0
    %3351 = vmatprep.subr.bf16.mxu0 0
    %3352 = vmatpush1.bf16.xpose.msra.mxu0 %v3349
    %3353 = vmatprep.subr.bf16.mxu0 0
    %3354 = vmatpush1.bf16.xpose.msra.mxu0 0
    %3355 = vmatprep.subr.bf16.mxu0 0
    %3356 = vmatpush1.bf16.xpose.msra.mxu0 0
    %3357 = vmatprep.subr.bf16.mxu0 0
    %3358 = vmatpush1.bf16.xpose.msra.mxu0 0
    %3359 = vmatprep.subr.bf16.mxu0 0
    %3360 = vmatpush1.bf16.xpose.msra.mxu0 0
    %3361 = vmatprep.subr.bf16.mxu0 0
    %3362 = vmatpush1.bf16.xpose.msra.mxu0 0
    %3363 = vmatprep.subr.bf16.mxu0 0
    %3364 = vmatpush1.bf16.xpose.msra.mxu0 0
    %3365 = vmatprep.subr.bf16.mxu0 0
    %3366 = vmatpush1.bf16.xpose.msra.mxu0 0
    %3367 = vmatprep.subr.bf16.mxu0 0
    %3368 = vmatpush1.bf16.xpose.msra.mxu0 0
    %3369 = vmatprep.subr.bf16.mxu0 0
    %3370 = vmatpush1.bf16.xpose.msra.mxu0 0
    %3371 = vmatprep.subr.bf16.mxu0 0
    %3372 = vmatpush1.bf16.xpose.msra.mxu0 0
    %3373 = vmatprep.subr.bf16.mxu0 0
    %3374 = vmatpush1.bf16.xpose.msra.mxu0 0
    %3375 = vmatprep.subr.bf16.mxu0 0
    %3376 = vmatpush1.bf16.xpose.msra.mxu0 0
    %3377 = vmatprep.subr.bf16.mxu0 0
    %3378 = vmatpush1.bf16.xpose.msra.mxu0 0
    %3379 = vmatprep.subr.bf16.mxu0 0
    %3380 = vmatpush1.bf16.xpose.msra.mxu0 0
    %3381 = vmatprep.subr.bf16.mxu0 0
    %3382 = vmatpush1.bf16.xpose.msra.mxu0 0
    %3383 = vmatprep.mubr.bf16.mxu0 0
    %3384 = vmatmul.mubr.bf16.gmra.mrb[0].mxu0 %v3346
    %v3385 = vpop.f32.mrb[0].mxu0
    %v3386 = vadd.f32 0.0, %v3385
    %v3387 = vpop.f32.mrb[0].mxu0
    %v3388 = vpop.f32.mrb[0].mxu0
    %v3389 = vpop.f32.mrb[0].mxu0
    %3390 = vdwg.mxu0
    %v3391 = vmul.f32 %v3386, 0.17677669
    %v3392 = vadd.f32 %v3391, %v2196
    %v3393 = vsel %vm2264, %v3392, -inf
    %3394 = vmax.xlane.f32.xlu0 %v3393
    %v3395 = vpop.xlane.xlu0 %3394
    %v3396 = vsub.f32 %v3392, %v3395
    %v3397 = vmul.f32 %v3396, 1.442695
    %v3398 = vpow.pop %v3397
    %v3399 = vsel %vm2264, %v3398, 0.0
    %3400 = vadd.xlane.f32.xlu0 %v3399
    %v3401 = vpop.xlane.xlu0 %3400
    %v3402 = vrcp.pop %v3401
    %v3403 = vmul.f32 %v3398, %v3402
    %v3404 = vpack.c.bf16 %v3403, %v3403
    %3405 = vrot.lane.b32.xlu0 %v2881, 32
    %v3406 = vpop.permute.xlu0 %3405
    %v3409 = vsel %vm2264, %v3404, 0
    %3411 = vmatprep.subr.bf16.mxu0 0
    %3412 = vmatpush1.bf16.msra.mxu0 %v3406
    %3413 = vmatprep.subr.bf16.mxu0 0
    %3414 = vmatpush1.bf16.msra.mxu0 0
    %3415 = vmatprep.subr.bf16.mxu0 0
    %3416 = vmatpush1.bf16.msra.mxu0 0
    %3417 = vmatprep.subr.bf16.mxu0 0
    %3418 = vmatpush1.bf16.msra.mxu0 0
    %3419 = vmatprep.subr.bf16.mxu0 0
    %3420 = vmatpush1.bf16.msra.mxu0 0
    %3421 = vmatprep.subr.bf16.mxu0 0
    %3422 = vmatpush1.bf16.msra.mxu0 0
    %3423 = vmatprep.subr.bf16.mxu0 0
    %3424 = vmatpush1.bf16.msra.mxu0 0
    %3425 = vmatprep.subr.bf16.mxu0 0
    %3426 = vmatpush1.bf16.msra.mxu0 0
    %3427 = vmatprep.subr.bf16.mxu0 0
    %3428 = vmatpush1.bf16.msra.mxu0 0
    %3429 = vmatprep.subr.bf16.mxu0 0
    %3430 = vmatpush1.bf16.msra.mxu0 0
    %3431 = vmatprep.subr.bf16.mxu0 0
    %3432 = vmatpush1.bf16.msra.mxu0 0
    %3433 = vmatprep.subr.bf16.mxu0 0
    %3434 = vmatpush1.bf16.msra.mxu0 0
    %3435 = vmatprep.subr.bf16.mxu0 0
    %3436 = vmatpush1.bf16.msra.mxu0 0
    %3437 = vmatprep.subr.bf16.mxu0 0
    %3438 = vmatpush1.bf16.msra.mxu0 0
    %3439 = vmatprep.subr.bf16.mxu0 0
    %3440 = vmatpush1.bf16.msra.mxu0 0
    %3441 = vmatprep.subr.bf16.mxu0 0
    %3442 = vmatpush1.bf16.msra.mxu0 0
    %3443 = vmatprep.mubr.bf16.mxu0 0
    %3444 = vmatmul.mubr.bf16.gmra.mrb[0].mxu0 %v3409
    %v3445 = vpop.f32.mrb[0].mxu0
    %v3446 = vadd.f32 0.0, %v3445
    %v3447 = vpop.f32.mrb[0].mxu0
    %v3448 = vpop.f32.mrb[0].mxu0
    %v3449 = vpop.f32.mrb[0].mxu0
    %3450 = vdwg.mxu0
    %v3451 = vpack.c.bf16 %v3446, %v3446
    %v3453 = vsel %vm558, %v3451, 0
    %3455 = vmatprep.subr.bf16.mxu0 0
    %3456 = vmatpush1.bf16.msra.mxu0 %v2831
    %3457 = vmatprep.subr.bf16.mxu0 0
    %3458 = vmatpush1.bf16.msra.mxu0 %v2832
    %3459 = vmatprep.subr.bf16.mxu0 0
    %3460 = vmatpush1.bf16.msra.mxu0 0
    %3461 = vmatprep.subr.bf16.mxu0 0
    %3462 = vmatpush1.bf16.msra.mxu0 0
    %3463 = vmatprep.subr.bf16.mxu0 0
    %3464 = vmatpush1.bf16.msra.mxu0 0
    %3465 = vmatprep.subr.bf16.mxu0 0
    %3466 = vmatpush1.bf16.msra.mxu0 0
    %3467 = vmatprep.subr.bf16.mxu0 0
    %3468 = vmatpush1.bf16.msra.mxu0 0
    %3469 = vmatprep.subr.bf16.mxu0 0
    %3470 = vmatpush1.bf16.msra.mxu0 0
    %3471 = vmatprep.subr.bf16.mxu0 0
    %3472 = vmatpush1.bf16.msra.mxu0 0
    %3473 = vmatprep.subr.bf16.mxu0 0
    %3474 = vmatpush1.bf16.msra.mxu0 0
    %3475 = vmatprep.subr.bf16.mxu0 0
    %3476 = vmatpush1.bf16.msra.mxu0 0
    %3477 = vmatprep.subr.bf16.mxu0 0
    %3478 = vmatpush1.bf16.msra.mxu0 0
    %3479 = vmatprep.subr.bf16.mxu0 0
    %3480 = vmatpush1.bf16.msra.mxu0 0
    %3481 = vmatprep.subr.bf16.mxu0 0
    %3482 = vmatpush1.bf16.msra.mxu0 0
    %3483 = vmatprep.subr.bf16.mxu0 0
    %3484 = vmatpush1.bf16.msra.mxu0 0
    %3485 = vmatprep.subr.bf16.mxu0 0
    %3486 = vmatpush1.bf16.msra.mxu0 0
    %3487 = vmatprep.mubr.bf16.mxu0 0
    %3488 = vmatmul.mubr.bf16.gmra.mrb[0].mxu0 %v3453
    %v3489 = vpop.f32.mrb[0].mxu0
    %v3490 = vadd.f32 0.0, %v3489
    %v3491 = vpop.f32.mrb[0].mxu0
    %v3492 = vpop.f32.mrb[0].mxu0
    %v3493 = vpop.f32.mrb[0].mxu0
    %3494 = vdwg.mxu0
    %v3495 = vadd.f32 %v3340, %v3490
    %v3496 = vadd.f32 %v1867, %v2878
    %v3497 = vadd.f32 %v1868, %v3495
    %v3498 = vld [vmem:[%s17] sm:$0x1]
    %v3500 = vlaneseq
    %v3501 = vshrl.u32 %v3500, 7
    %v3502 = vsub.s32 0, %v3501
    %v3503 = vrot.slane %v3498, %v3502
    %v3505 = vadd.f32 %v3496, %v3503
    %v3506 = vadd.f32 %v3497, %v3503
    %v3507 = vld [vmem:[%s18] sm:$0x1]
    %v3508 = vld [vmem:[%s19] sm:$0x1]
    %3509 = vadd.xlane.f32.xlu0 %v3505
    %v3510 = vpop.xlane.xlu0 %3509
    %3511 = vadd.xlane.f32.xlu0 %v3506
    %v3512 = vpop.xlane.xlu0 %3511
    %v3513 = vmul.f32 %v3510, %v240
    %v3514 = vmul.f32 %v3512, %v240
    %v3515 = vsub.f32 %v3505, %v3513
    %v3516 = vsub.f32 %v3506, %v3514
    %v3517 = vmul.f32 %v3515, %v3515
    %v3518 = vmul.f32 %v3516, %v3516
    %3519 = vadd.xlane.f32.xlu0 %v3517
    %v3520 = vpop.xlane.xlu0 %3519
    %3521 = vadd.xlane.f32.xlu0 %v3518
    %v3522 = vpop.xlane.xlu0 %3521
    %v3523 = vmul.f32 %v3520, %v240
    %v3524 = vmul.f32 %v3522, %v240
    %v3525 = vadd.f32 %v3523, 1e-05
    %v3526 = vadd.f32 %v3524, 1e-05
    %v3527 = vrsqrt.pop %v3525
    %v3528 = vrsqrt.pop %v3526
    %v3529 = vmul.f32 %v3515, %v3527
    %v3530 = vmul.f32 %v3516, %v3528
    %v3532 = vlaneseq
    %v3533 = vshrl.u32 %v3532, 7
    %v3534 = vsub.s32 0, %v3533
    %v3535 = vrot.slane %v3507, %v3534
    %v3537 = vmul.f32 %v3529, %v3535
    %v3538 = vmul.f32 %v3530, %v3535
    %v3540 = vlaneseq
    %v3541 = vshrl.u32 %v3540, 7
    %v3542 = vsub.s32 0, %v3541
    %v3543 = vrot.slane %v3508, %v3542
    %v3545 = vadd.f32 %v3537, %v3543
    %v3546 = vadd.f32 %v3538, %v3543
    %v3547 = vld [vmem:[#allocation17] sm:$0xff]
    %v3548 = vld [vmem:[#allocation17 + $0x8] sm:$0xff]
    %v3549 = vld [vmem:[#allocation17 + $0x10] sm:$0xff]
    %v3550 = vld [vmem:[#allocation17 + $0x18] sm:$0xff]
    %v3551 = vld [vmem:[#allocation17 + $0x20] sm:$0xff]
    %v3552 = vld [vmem:[#allocation17 + $0x28] sm:$0xff]
    %v3553 = vld [vmem:[#allocation17 + $0x30] sm:$0xff]
    %v3554 = vld [vmem:[#allocation17 + $0x38] sm:$0xff]
    %v3555 = vld [vmem:[#allocation17 + $0x40] sm:$0xff]
    %v3556 = vld [vmem:[#allocation17 + $0x48] sm:$0xff]
    %v3557 = vld [vmem:[#allocation17 + $0x50] sm:$0xff]
    %v3558 = vld [vmem:[#allocation17 + $0x58] sm:$0xff]
    %v3559 = vld [vmem:[#allocation17 + $0x60] sm:$0xff]
    %v3560 = vld [vmem:[#allocation17 + $0x68] sm:$0xff]
    %v3561 = vld [vmem:[#allocation17 + $0x70] sm:$0xff]
    %v3562 = vld [vmem:[#allocation17 + $0x78] sm:$0xff]
    %v3563 = vpack.c.bf16 %v3546, %v3545
    %v3564 = vld [vmem:[%s21] sm:$0x3]
    %v3566 = vlaneseq
    %v3567 = vshrl.u32 %v3566, 7
    %v3568 = vsub.s32 0, %v3567
    %v3569 = vrot.slane %v3564, %v3568
    %v3570 = vlaneseq
    %v3571 = vshrl.u32 %v3570, 7
    %v3572 = vsub.s32 1, %v3571
    %v3573 = vrot.slane %v3564, %v3572
    %v3592 = vunpack.c.l.b16 %v3547
    %v3593 = vunpack.c.h.b16 %v3547
    %v3594 = vunpack.c.l.b16 %v3548
    %v3595 = vunpack.c.h.b16 %v3548
    %v3596 = vunpack.c.l.b16 %v3549
    %v3597 = vunpack.c.h.b16 %v3549
    %v3598 = vunpack.c.l.b16 %v3550
    %v3599 = vunpack.c.h.b16 %v3550
    %v3600 = vunpack.c.l.b16 %v3551
    %v3601 = vunpack.c.h.b16 %v3551
    %v3602 = vunpack.c.l.b16 %v3552
    %v3603 = vunpack.c.h.b16 %v3552
    %v3604 = vunpack.c.l.b16 %v3553
    %v3605 = vunpack.c.h.b16 %v3553
    %v3606 = vunpack.c.l.b16 %v3554
    %v3607 = vunpack.c.h.b16 %v3554
    %v3608 = vunpack.c.l.b16 %v3555
    %v3609 = vunpack.c.h.b16 %v3555
    %v3610 = vunpack.c.l.b16 %v3556
    %v3611 = vunpack.c.h.b16 %v3556
    %v3612 = vunpack.c.l.b16 %v3557
    %v3613 = vunpack.c.h.b16 %v3557
    %v3614 = vunpack.c.l.b16 %v3558
    %v3615 = vunpack.c.h.b16 %v3558
    %v3616 = vunpack.c.l.b16 %v3559
    %v3617 = vunpack.c.h.b16 %v3559
    %v3618 = vunpack.c.l.b16 %v3560
    %v3619 = vunpack.c.h.b16 %v3560
    %v3620 = vunpack.c.l.b16 %v3561
    %v3621 = vunpack.c.h.b16 %v3561
    %v3622 = vunpack.c.l.b16 %v3562
    %v3623 = vunpack.c.h.b16 %v3562
    %v3624 = vpack.c.b16 %v3594, %v3592
    %v3625 = vpack.c.b16 %v3595, %v3593
    %v3626 = vpack.c.b16 %v3598, %v3596
    %v3627 = vpack.c.b16 %v3599, %v3597
    %v3628 = vpack.c.b16 %v3602, %v3600
    %v3629 = vpack.c.b16 %v3603, %v3601
    %v3630 = vpack.c.b16 %v3606, %v3604
    %v3631 = vpack.c.b16 %v3607, %v3605
    %v3632 = vpack.c.b16 %v3610, %v3608
    %v3633 = vpack.c.b16 %v3611, %v3609
    %v3634 = vpack.c.b16 %v3614, %v3612
    %v3635 = vpack.c.b16 %v3615, %v3613
    %v3636 = vpack.c.b16 %v3618, %v3616
    %v3637 = vpack.c.b16 %v3619, %v3617
    %v3638 = vpack.c.b16 %v3622, %v3620
    %v3639 = vpack.c.b16 %v3623, %v3621
    %3656 = vmatprep.subr.bf16.mxu0 %v3625
    %3657 = vmatpush1.bf16.msra.mxu0 %v3624
    %3658 = vmatprep.subr.bf16.mxu0 %v3627
    %3659 = vmatpush1.bf16.msra.mxu0 %v3626
    %3660 = vmatprep.subr.bf16.mxu0 %v3629
    %3661 = vmatpush1.bf16.msra.mxu0 %v3628
    %3662 = vmatprep.subr.bf16.mxu0 %v3631
    %3663 = vmatpush1.bf16.msra.mxu0 %v3630
    %3664 = vmatprep.subr.bf16.mxu0 %v3633
    %3665 = vmatpush1.bf16.msra.mxu0 %v3632
    %3666 = vmatprep.subr.bf16.mxu0 %v3635
    %3667 = vmatpush1.bf16.msra.mxu0 %v3634
    %3668 = vmatprep.subr.bf16.mxu0 %v3637
    %3669 = vmatpush1.bf16.msra.mxu0 %v3636
    %3670 = vmatprep.subr.bf16.mxu0 %v3639
    %3671 = vmatpush1.bf16.msra.mxu0 %v3638
    %3672 = vmatprep.subr.bf16.mxu0 0
    %3673 = vmatpush1.bf16.msra.mxu0 0
    %3674 = vmatprep.subr.bf16.mxu0 0
    %3675 = vmatpush1.bf16.msra.mxu0 0
    %3676 = vmatprep.subr.bf16.mxu0 0
    %3677 = vmatpush1.bf16.msra.mxu0 0
    %3678 = vmatprep.subr.bf16.mxu0 0
    %3679 = vmatpush1.bf16.msra.mxu0 0
    %3680 = vmatprep.subr.bf16.mxu0 0
    %3681 = vmatpush1.bf16.msra.mxu0 0
    %3682 = vmatprep.subr.bf16.mxu0 0
    %3683 = vmatpush1.bf16.msra.mxu0 0
    %3684 = vmatprep.subr.bf16.mxu0 0
    %3685 = vmatpush1.bf16.msra.mxu0 0
    %3686 = vmatprep.subr.bf16.mxu0 0
    %3687 = vmatpush1.bf16.msra.mxu0 0
    %3688 = vmatprep.mubr.bf16.mxu0 0
    %3689 = vmatmul.mubr.bf16.gmra.mrb[0].mxu0 %v3563
    %v3690 = vpop.f32.mrb[0].mxu0
    %v3691 = vadd.f32 %v3569, %v3690
    %v3692 = vpop.f32.mrb[0].mxu0
    %v3693 = vadd.f32 %v3573, %v3692
    %v3694 = vpop.f32.mrb[0].mxu0
    %v3695 = vadd.f32 %v3569, %v3694
    %v3696 = vpop.f32.mrb[0].mxu0
    %v3697 = vadd.f32 %v3573, %v3696
    %3698 = vdwg.mxu0
    %v3699 = vmax.f32 %v3691, 0.0
    %v3700 = vmax.f32 %v3693, 0.0
    %v3701 = vmax.f32 %v3695, 0.0
    %v3702 = vmax.f32 %v3697, 0.0
    %v3703 = vld [vmem:[#allocation19] sm:$0xf]
    %v3704 = vld [vmem:[#allocation19 + $0x4] sm:$0xf]
    %v3705 = vld [vmem:[#allocation19 + $0x8] sm:$0xf]
    %v3706 = vld [vmem:[#allocation19 + $0xc] sm:$0xf]
    %v3707 = vld [vmem:[#allocation19 + $0x10] sm:$0xf]
    %v3708 = vld [vmem:[#allocation19 + $0x14] sm:$0xf]
    %v3709 = vld [vmem:[#allocation19 + $0x18] sm:$0xf]
    %v3710 = vld [vmem:[#allocation19 + $0x1c] sm:$0xf]
    %v3711 = vld [vmem:[#allocation19 + $0x20] sm:$0xf]
    %v3712 = vld [vmem:[#allocation19 + $0x24] sm:$0xf]
    %v3713 = vld [vmem:[#allocation19 + $0x28] sm:$0xf]
    %v3714 = vld [vmem:[#allocation19 + $0x2c] sm:$0xf]
    %v3715 = vld [vmem:[#allocation19 + $0x30] sm:$0xf]
    %v3716 = vld [vmem:[#allocation19 + $0x34] sm:$0xf]
    %v3717 = vld [vmem:[#allocation19 + $0x38] sm:$0xf]
    %v3718 = vld [vmem:[#allocation19 + $0x3c] sm:$0xf]
    %v3719 = vld [vmem:[#allocation19 + $0x40] sm:$0xf]
    %v3720 = vld [vmem:[#allocation19 + $0x44] sm:$0xf]
    %v3721 = vld [vmem:[#allocation19 + $0x48] sm:$0xf]
    %v3722 = vld [vmem:[#allocation19 + $0x4c] sm:$0xf]
    %v3723 = vld [vmem:[#allocation19 + $0x50] sm:$0xf]
    %v3724 = vld [vmem:[#allocation19 + $0x54] sm:$0xf]
    %v3725 = vld [vmem:[#allocation19 + $0x58] sm:$0xf]
    %v3726 = vld [vmem:[#allocation19 + $0x5c] sm:$0xf]
    %v3727 = vld [vmem:[#allocation19 + $0x60] sm:$0xf]
    %v3728 = vld [vmem:[#allocation19 + $0x64] sm:$0xf]
    %v3729 = vld [vmem:[#allocation19 + $0x68] sm:$0xf]
    %v3730 = vld [vmem:[#allocation19 + $0x6c] sm:$0xf]
    %v3731 = vld [vmem:[#allocation19 + $0x70] sm:$0xf]
    %v3732 = vld [vmem:[#allocation19 + $0x74] sm:$0xf]
    %v3733 = vld [vmem:[#allocation19 + $0x78] sm:$0xf]
    %v3734 = vld [vmem:[#allocation19 + $0x7c] sm:$0xf]
    %v3735 = vpack.c.bf16 %v3701, %v3699
    %v3736 = vpack.c.bf16 %v3702, %v3700
    %v3769 = vunpack.c.l.b16 %v3703
    %v3770 = vunpack.c.l.b16 %v3704
    %v3771 = vunpack.c.l.b16 %v3705
    %v3772 = vunpack.c.l.b16 %v3706
    %v3773 = vunpack.c.l.b16 %v3707
    %v3774 = vunpack.c.l.b16 %v3708
    %v3775 = vunpack.c.l.b16 %v3709
    %v3776 = vunpack.c.l.b16 %v3710
    %v3777 = vunpack.c.l.b16 %v3711
    %v3778 = vunpack.c.l.b16 %v3712
    %v3779 = vunpack.c.l.b16 %v3713
    %v3780 = vunpack.c.l.b16 %v3714
    %v3781 = vunpack.c.l.b16 %v3715
    %v3782 = vunpack.c.l.b16 %v3716
    %v3783 = vunpack.c.l.b16 %v3717
    %v3784 = vunpack.c.l.b16 %v3718
    %v3785 = vunpack.c.l.b16 %v3719
    %v3786 = vunpack.c.l.b16 %v3720
    %v3787 = vunpack.c.l.b16 %v3721
    %v3788 = vunpack.c.l.b16 %v3722
    %v3789 = vunpack.c.l.b16 %v3723
    %v3790 = vunpack.c.l.b16 %v3724
    %v3791 = vunpack.c.l.b16 %v3725
    %v3792 = vunpack.c.l.b16 %v3726
    %v3793 = vunpack.c.l.b16 %v3727
    %v3794 = vunpack.c.l.b16 %v3728
    %v3795 = vunpack.c.l.b16 %v3729
    %v3796 = vunpack.c.l.b16 %v3730
    %v3797 = vunpack.c.l.b16 %v3731
    %v3798 = vunpack.c.l.b16 %v3732
    %v3799 = vunpack.c.l.b16 %v3733
    %v3800 = vunpack.c.l.b16 %v3734
    %v3801 = vpack.c.b16 %v3770, %v3769
    %v3802 = vpack.c.b16 %v3772, %v3771
    %v3803 = vpack.c.b16 %v3774, %v3773
    %v3804 = vpack.c.b16 %v3776, %v3775
    %v3805 = vpack.c.b16 %v3778, %v3777
    %v3806 = vpack.c.b16 %v3780, %v3779
    %v3807 = vpack.c.b16 %v3782, %v3781
    %v3808 = vpack.c.b16 %v3784, %v3783
    %v3809 = vpack.c.b16 %v3786, %v3785
    %v3810 = vpack.c.b16 %v3788, %v3787
    %v3811 = vpack.c.b16 %v3790, %v3789
    %v3812 = vpack.c.b16 %v3792, %v3791
    %v3813 = vpack.c.b16 %v3794, %v3793
    %v3814 = vpack.c.b16 %v3796, %v3795
    %v3815 = vpack.c.b16 %v3798, %v3797
    %v3816 = vpack.c.b16 %v3800, %v3799
    %3833 = vmatprep.subr.bf16.mxu0 0
    %3834 = vmatpush1.bf16.msra.mxu0 %v3801
    %3835 = vmatprep.subr.bf16.mxu0 0
    %3836 = vmatpush1.bf16.msra.mxu0 %v3802
    %3837 = vmatprep.subr.bf16.mxu0 0
    %3838 = vmatpush1.bf16.msra.mxu0 %v3803
    %3839 = vmatprep.subr.bf16.mxu0 0
    %3840 = vmatpush1.bf16.msra.mxu0 %v3804
    %3841 = vmatprep.subr.bf16.mxu0 0
    %3842 = vmatpush1.bf16.msra.mxu0 %v3805
    %3843 = vmatprep.subr.bf16.mxu0 0
    %3844 = vmatpush1.bf16.msra.mxu0 %v3806
    %3845 = vmatprep.subr.bf16.mxu0 0
    %3846 = vmatpush1.bf16.msra.mxu0 %v3807
    %3847 = vmatprep.subr.bf16.mxu0 0
    %3848 = vmatpush1.bf16.msra.mxu0 %v3808
    %3849 = vmatprep.subr.bf16.mxu0 0
    %3850 = vmatpush1.bf16.msra.mxu0 %v3809
    %3851 = vmatprep.subr.bf16.mxu0 0
    %3852 = vmatpush1.bf16.msra.mxu0 %v3810
    %3853 = vmatprep.subr.bf16.mxu0 0
    %3854 = vmatpush1.bf16.msra.mxu0 %v3811
    %3855 = vmatprep.subr.bf16.mxu0 0
    %3856 = vmatpush1.bf16.msra.mxu0 %v3812
    %3857 = vmatprep.subr.bf16.mxu0 0
    %3858 = vmatpush1.bf16.msra.mxu0 %v3813
    %3859 = vmatprep.subr.bf16.mxu0 0
    %3860 = vmatpush1.bf16.msra.mxu0 %v3814
    %3861 = vmatprep.subr.bf16.mxu0 0
    %3862 = vmatpush1.bf16.msra.mxu0 %v3815
    %3863 = vmatprep.subr.bf16.mxu0 0
    %3864 = vmatpush1.bf16.msra.mxu0 %v3816
    %3865 = vmatprep.mubr.bf16.mxu0 %v3736
    %3866 = vmatmul.mubr.bf16.gmra.mrb[0].mxu0 %v3735
    %v3867 = vpop.f32.mrb[0].mxu0
    %v3868 = vadd.f32 0.0, %v3867
    %v3869 = vpop.f32.mrb[0].mxu0
    %v3870 = vpop.f32.mrb[0].mxu0
    %v3871 = vadd.f32 0.0, %v3870
    %v3872 = vpop.f32.mrb[0].mxu0
    %3873 = vdwg.mxu0
    %v3874 = vadd.f32 %v3505, %v3868
    %v3875 = vadd.f32 %v3506, %v3871
    %v3876 = vld [vmem:[%s23] sm:$0x1]
    %v3878 = vlaneseq
    %v3879 = vshrl.u32 %v3878, 7
    %v3880 = vsub.s32 0, %v3879
    %v3881 = vrot.slane %v3876, %v3880
    %v3883 = vadd.f32 %v3874, %v3881
    %v3884 = vadd.f32 %v3875, %v3881
    %3885 = vst [vmem:[#allocation20] sm:$0xff] %v3883
    %3886 = vst [vmem:[#allocation20 + $0x8] sm:$0xff] %v3884
    // Predicated region
    $region142: #{tpu_custom_call.1} parent=1 // pred_check
      _
    $region143: #{tpu_custom_call.1} parent=1 // pred_check_branch
      %3888 = sbr.rel (0) target = $region145
    $region144: #{tpu_custom_call.1} parent=1 // pred_region
      %s3890 = ssub.s32 256, 256
      %3891 = vsyncadd [#allocation4], %s3890
      %s3892 = sshll.u32 [#allocation20], 4
      %s3893 = int_to_ptr.vmem [resolvable:$true] %s3892
      %3898 = dma.vmem_to_hbm [thread:$0]  %s3893, 256, %s24, [#allocation4], 128, 128, 8
    $region145: #{tpu_custom_call.1} parent=1 // pred_fallthru
      _
    // Predicated region
    $region146: #{tpu_custom_call.1} parent=1 // pred_check
      _
    $region147: #{tpu_custom_call.1} parent=1 // pred_check_branch
      %3900 = sbr.rel (0) target = $region149
    $region148: #{tpu_custom_call.1} parent=1 // pred_region
      %3901 = dma.done [#allocation4], 256
    $region149: #{tpu_custom_call.1} parent=1 // pred_fallthru
      _
    %3902 = vsyncpa [#allocation3], 1
    %3903 = vsyncpa [#allocation6], 1
    %3904 = vsyncpa [#allocation9], 1
    %3905 = vsyncpa [#allocation12], 1
    %3906 = vsyncpa [#allocation15], 1
    %3907 = vsyncpa [#allocation18], 1
    %3908 = vsyncpa [#allocation4], 1

</llo_original>
